<compile_context>
chip_gen: v6e
topology: v6e:2x2x1
jax: 0.10.0
libtpu: 0.0.40
codegen_flags: <defaults>
</compile_context>

<pallas_src>
import numpy as np
import jax
import jax.numpy as jnp
from jax import lax
from jax.experimental import pallas as pl
from jax.experimental.pallas import tpu as pltpu


# ----------------------------- fused Pallas kernel ---------------------------

def _lenet_kernel(x_ref, w1t_ref, b1_ref, w2t_ref, b2_ref,
                  s1e_ref, s1o_ref, s2e_ref, s2o_ref,
                  wf1_ref, bf1_ref, wf2_ref, bf2_ref, wf3_ref, bf3_ref,
                  o_ref, p1_scr):
    f32 = jnp.float32
    bf16 = jnp.bfloat16
    B = o_ref.shape[0]           # images per grid step
    M1 = B * 32 - 4              # stacked conv1 GEMM M
    M2 = B * 14 - 4              # stacked conv2 GEMM M

    # ---- conv1 (5x5, 3->6): 5 shifted Toeplitz matmuls over the whole block --
    # x_ref: (B*32, 128) rows=(img,h), lanes=(w*3+ci, zero-pad); bias-init acc.
    y1 = jnp.broadcast_to(b1_ref[...], (M1, 256))
    for i in range(5):
        y1 = y1 + jnp.dot(x_ref[i:i + M1, :].astype(bf16), w1t_ref[i],
                          preferred_element_type=f32)
    y1 = jnp.maximum(y1, 0.0).astype(bf16)                 # (M1, 256)

    # ---- 2x2 max-pool #1 -----------------------------------------------------
    # height: host-precomputed 0/1 selection matmuls (rows ordered (img, ph));
    # width: the Toeplitz columns are (parity, pw, co) -> max of the two halves.
    r1 = jnp.maximum(
        jnp.dot(s1e_ref[...], y1, preferred_element_type=f32),
        jnp.dot(s1o_ref[...], y1, preferred_element_type=f32))   # (B*14, 256)
    p1_scr[...] = jnp.maximum(r1[:, :128], r1[:, 128:])          # (B*14, 128)

    # ---- conv2 (5x5, 6->16) ---------------------------------------------------
    y2 = jnp.broadcast_to(b2_ref[...], (M2, 256))
    for i in range(5):
        y2 = y2 + jnp.dot(p1_scr[i:i + M2, :].astype(bf16), w2t_ref[i],
                          preferred_element_type=f32)
    y2 = jnp.maximum(y2, 0.0).astype(bf16)                 # (M2, 256)

    # ---- 2x2 max-pool #2 (output rows ordered (conv-row, img)) ----------------
    r2 = jnp.maximum(
        jnp.dot(s2e_ref[...], y2, preferred_element_type=f32),
        jnp.dot(s2o_ref[...], y2, preferred_element_type=f32))   # (5*B, 256)
    p2 = jnp.maximum(r2[:, :128], r2[:, 128:])                   # (5*B, 128)

    # ---- fc1 -> relu -> fc2 -> relu -> fc3, all with M = B ---------------------
    # fc1 weights are pre-permuted on the host so PyTorch's NCHW flatten order
    # contracts directly against the (pw*16+co) lane layout, one conv-row slab
    # at a time; p2 slices are contiguous 8-row (vreg-aligned) blocks.
    h = jnp.broadcast_to(bf1_ref[...], (B, 128))
    for r in range(5):
        h = h + jnp.dot(p2[r * B:(r + 1) * B, :].astype(bf16), wf1_ref[r],
                        preferred_element_type=f32)
    h = jnp.maximum(h, 0.0).astype(bf16)
    h = jnp.maximum(jnp.dot(h, wf2_ref[...], preferred_element_type=f32)
                    + bf2_ref[...], 0.0).astype(bf16)
    o_ref[...] = (jnp.dot(h, wf3_ref[...], preferred_element_type=f32)
                  + bf3_ref[...])                          # (B, 128) lane-dense


# ----------------------------- host-side weight prep -------------------------

def _toeplitz_conv_weight(k_hwio, in_w, k_pad, half_pad):
    """Unroll a (KH, KW, Cin, Cout) kernel over the output width.

    Returns (KH, k_pad, 2*half_pad) bf16 where, within each 128-lane parity
    half, column (pw*Cout + co) is the conv output at ow = 2*pw + parity and
    the K rows are ordered (w*Cin + ci); zero padding elsewhere.
    """
    kh, kw, cin, cout = [int(s) for s in k_hwio.shape]
    out_w = in_w - kw + 1
    pw = out_w // 2
    k_np = np.asarray(k_hwio, np.float32)
    w = np.zeros((kh, in_w, cin, 2, pw, cout), np.float32)
    for s in range(2):
        for p in range(pw):
            ow = 2 * p + s
            for j in range(kw):
                w[:, ow + j, :, s, p, :] = k_np[:, j, :, :]
    w = w.reshape(kh, in_w * cin, 2, pw * cout)
    w = np.pad(w, ((0, 0), (0, k_pad - in_w * cin),
                   (0, 0), (0, half_pad - pw * cout)))
    return jnp.asarray(w.reshape(kh, k_pad, 2 * half_pad), jnp.bfloat16)


def _conv_bias(b, pw, half_pad):
    b_np = np.asarray(b, np.float32)
    cout = b_np.shape[0]
    v = np.zeros((2, half_pad), np.float32)
    v[:, :pw * cout] = np.tile(b_np, pw)[None, :]
    return jnp.asarray(v.reshape(1, 2 * half_pad))


def _pool_select_mats(b_tile):
    """0/1 height-pool selection matrices, precomputed once on the host."""
    m1 = b_tile * 32 - 4
    s1e = np.zeros((b_tile * 14, m1), np.float32)
    s1o = np.zeros((b_tile * 14, m1), np.float32)
    for b in range(b_tile):
        for ph in range(14):
            s1e[b * 14 + ph, b * 32 + 2 * ph] = 1.0
            s1o[b * 14 + ph, b * 32 + 2 * ph + 1] = 1.0
    m2 = b_tile * 14 - 4
    s2e = np.zeros((5 * b_tile, m2), np.float32)
    s2o = np.zeros((5 * b_tile, m2), np.float32)
    for b in range(b_tile):
        for rp in range(5):
            s2e[rp * b_tile + b, b * 14 + 2 * rp] = 1.0
            s2o[rp * b_tile + b, b * 14 + 2 * rp + 1] = 1.0
    return (jnp.asarray(s1e, jnp.bfloat16), jnp.asarray(s1o, jnp.bfloat16),
            jnp.asarray(s2e, jnp.bfloat16), jnp.asarray(s2o, jnp.bfloat16))


def prepare_params(p, b_tile=8):
    """One-time conversion of PyTorch-layout params to the fused-kernel layout."""
    assert b_tile % 8 == 0, "b_tile must be a multiple of 8 (sublane alignment)"
    k1 = np.transpose(np.asarray(p["conv1_w"], np.float32), (2, 3, 1, 0))  # (5,5,3,6)
    k2 = np.transpose(np.asarray(p["conv2_w"], np.float32), (2, 3, 1, 0))  # (5,5,6,16)
    # Fold PyTorch's NCHW flatten (c*25 + h*5 + w) into the fc1 weight layout
    # expected by the kernel's (pw*16 + co) lane layout, per conv-row slab.
    f1 = np.asarray(p["f1_w"], np.float32)
    h_i = np.arange(5).reshape(5, 1, 1)
    w_i = np.arange(5).reshape(1, 5, 1)
    c_i = np.arange(16).reshape(1, 1, 16)
    flat_idx = c_i * 25 + h_i * 5 + w_i                        # (5,5,16)
    wf1 = np.transpose(f1[:, flat_idx], (1, 2, 3, 0)).reshape(5, 80, 120)
    wf1 = np.pad(wf1, ((0, 0), (0, 48), (0, 8)))               # (5,128,128)
    wf2 = np.pad(np.asarray(p["f2_w"], np.float32).T, ((0, 8), (0, 44)))    # (128,128)
    wf3 = np.pad(np.asarray(p["f3_w"], np.float32).T, ((0, 44), (0, 118)))  # (128,128)
    bf1 = np.pad(np.asarray(p["f1_b"], np.float32), (0, 8)).reshape(1, 128)
    bf2 = np.pad(np.asarray(p["f2_b"], np.float32), (0, 44)).reshape(1, 128)
    bf3 = np.pad(np.asarray(p["f3_b"], np.float32), (0, 118)).reshape(1, 128)
    s1e, s1o, s2e, s2o = _pool_select_mats(b_tile)
    return {
        "w1t": _toeplitz_conv_weight(k1, in_w=32, k_pad=128, half_pad=128),
        "b1": _conv_bias(p["conv1_b"], pw=14, half_pad=128),
        "w2t": _toeplitz_conv_weight(k2, in_w=14, k_pad=128, half_pad=128),
        "b2": _conv_bias(p["conv2_b"], pw=5, half_pad=128),
        "s1e": s1e, "s1o": s1o, "s2e": s2e, "s2o": s2o,
        "wf1": jnp.asarray(wf1, jnp.bfloat16), "bf1": jnp.asarray(bf1),
        "wf2": jnp.asarray(wf2, jnp.bfloat16), "bf2": jnp.asarray(bf2),
        "wf3": jnp.asarray(wf3, jnp.bfloat16), "bf3": jnp.asarray(bf3),
    }


# ----------------------------- forward pass ----------------------------------

@jax.jit
def network_forward(x_nchw, kp):
    n = x_nchw.shape[0]
    b_tile = kp["s2e"].shape[0] // 5
    n_pad = ((n + b_tile - 1) // b_tile) * b_tile
    m1 = b_tile * 32 - 4
    m2 = b_tile * 14 - 4
    # NCHW -> (N*32, 128): rows = (n, h), lanes = (w, c) zero-padded 96 -> 128.
    x = jnp.transpose(x_nchw, (0, 2, 3, 1))                    # (n,32,32,3)
    if n_pad != n:
        x = jnp.concatenate(
            [x, jnp.zeros((n_pad - n,) + x.shape[1:], x.dtype)], axis=0)
    x2 = jnp.pad(x.reshape(n_pad * 32, 96), ((0, 0), (0, 32)))

    logits = pl.pallas_call(
        _lenet_kernel,
        out_shape=jax.ShapeDtypeStruct((n_pad, 128), jnp.float32),
        grid=(n_pad // b_tile,),
        in_specs=[
            pl.BlockSpec((b_tile * 32, 128), lambda g: (g, 0)),    # images
            pl.BlockSpec((5, 128, 256), lambda g: (0, 0, 0)),      # conv1 Toeplitz
            pl.BlockSpec((1, 256), lambda g: (0, 0)),
            pl.BlockSpec((5, 128, 256), lambda g: (0, 0, 0)),      # conv2 Toeplitz
            pl.BlockSpec((1, 256), lambda g: (0, 0)),
            pl.BlockSpec((b_tile * 14, m1), lambda g: (0, 0)),     # pool1 select
            pl.BlockSpec((b_tile * 14, m1), lambda g: (0, 0)),
            pl.BlockSpec((5 * b_tile, m2), lambda g: (0, 0)),      # pool2 select
            pl.BlockSpec((5 * b_tile, m2), lambda g: (0, 0)),
            pl.BlockSpec((5, 128, 128), lambda g: (0, 0, 0)),      # fc1
            pl.BlockSpec((1, 128), lambda g: (0, 0)),
            pl.BlockSpec((128, 128), lambda g: (0, 0)),            # fc2
            pl.BlockSpec((1, 128), lambda g: (0, 0)),
            pl.BlockSpec((128, 128), lambda g: (0, 0)),            # fc3
            pl.BlockSpec((1, 128), lambda g: (0, 0)),
        ],
        out_specs=pl.BlockSpec((b_tile, 128), lambda g: (g, 0)),
        scratch_shapes=[pltpu.VMEM((b_tile * 14, 128), jnp.float32)],
        compiler_params=pltpu.CompilerParams(
            dimension_semantics=("parallel",)),
    )(x2, kp["w1t"], kp["b1"], kp["w2t"], kp["b2"],
      kp["s1e"], kp["s1o"], kp["s2e"], kp["s2o"],
      kp["wf1"], kp["bf1"], kp["wf2"], kp["bf2"], kp["wf3"], kp["bf3"])
    return logits[:n, :10]


# ----------------------------- params & reference ----------------------------

def init_params(key):
    ks = jax.random.split(key, 10)
    p = {}
    p["conv1_w"] = 0.10 * jax.random.normal(ks[0], (6, 3, 5, 5), jnp.float32)   # OIHW
    p["conv1_b"] = 0.10 * jax.random.normal(ks[1], (6,), jnp.float32)
    p["conv2_w"] = 0.10 * jax.random.normal(ks[2], (16, 6, 5, 5), jnp.float32)  # OIHW
    p["conv2_b"] = 0.10 * jax.random.normal(ks[3], (16,), jnp.float32)
    p["f1_w"] = 0.05 * jax.random.normal(ks[4], (120, 400), jnp.float32)        # (out, in)
    p["f1_b"] = 0.05 * jax.random.normal(ks[5], (120,), jnp.float32)
    p["f2_w"] = 0.05 * jax.random.normal(ks[6], (84, 120), jnp.float32)
    p["f2_b"] = 0.05 * jax.random.normal(ks[7], (84,), jnp.float32)
    p["f3_w"] = 0.05 * jax.random.normal(ks[8], (10, 84), jnp.float32)
    p["f3_b"] = 0.05 * jax.random.normal(ks[9], (10,), jnp.float32)
    return p


def reference_forward(x_nchw, p):
    hp = lax.Precision.HIGHEST

    def conv(x, w, b):
        y = lax.conv_general_dilated(x, w, (1, 1), "VALID",
                                     dimension_numbers=("NCHW", "OIHW", "NCHW"),
                                     precision=hp)
        return y + b[None, :, None, None]

    def pool(x):
        return lax.reduce_window(x, jnp.array(-jnp.inf, x.dtype), lax.max,
                                 (1, 1, 2, 2), (1, 1, 2, 2), "VALID")

    h = pool(jax.nn.relu(conv(x_nchw, p["conv1_w"], p["conv1_b"])))
    h = pool(jax.nn.relu(conv(h, p["conv2_w"], p["conv2_b"])))
    h = h.reshape(h.shape[0], -1)
    h = jax.nn.relu(jnp.dot(h, p["f1_w"].T, precision=hp) + p["f1_b"])
    h = jax.nn.relu(jnp.dot(h, p["f2_w"].T, precision=hp) + p["f2_b"])
    return jnp.dot(h, p["f3_w"].T, precision=hp) + p["f3_b"]


if __name__ == "__main__":
    key = jax.random.PRNGKey(0)
    k_x, k_p = jax.random.split(key)
    # Forward pass implies 3x32x32 inputs (16*5*5 flatten). Small batch of 16
    # -> two grid steps of 8 images each (exercises the batched path).
    x = jax.random.normal(k_x, (16, 3, 32, 32), jnp.float32)
    params = init_params(k_p)
    kparams = prepare_params(params, b_tile=8)

    out = network_forward(x, kparams)
    out = jax.block_until_ready(out)
    assert out.shape == (16, 10)

    ref = reference_forward(x, params)
    # bf16 matmul operands (f32 accumulation) vs. a Precision.HIGHEST f32
    # reference -> relaxed tolerance.
    np.testing.assert_allclose(np.asarray(out), np.asarray(ref),
                               rtol=3e-2, atol=1e-2)

    print("KERNEL_OK")
</pallas_src>

<mosaic_0001>
module attributes {stable_mosaic.version = 11 : i64} {
  func.func @_lenet_kernel(%arg0: i32, %arg1: memref<256x128xf32, #tpu.memory_space<vmem>>, %arg2: memref<5x128x256xbf16, #tpu.memory_space<vmem>>, %arg3: memref<1x256xf32, #tpu.memory_space<vmem>>, %arg4: memref<5x128x256xbf16, #tpu.memory_space<vmem>>, %arg5: memref<1x256xf32, #tpu.memory_space<vmem>>, %arg6: memref<112x252xbf16, #tpu.memory_space<vmem>>, %arg7: memref<112x252xbf16, #tpu.memory_space<vmem>>, %arg8: memref<40x108xbf16, #tpu.memory_space<vmem>>, %arg9: memref<40x108xbf16, #tpu.memory_space<vmem>>, %arg10: memref<5x128x128xbf16, #tpu.memory_space<vmem>>, %arg11: memref<1x128xf32, #tpu.memory_space<vmem>>, %arg12: memref<128x128xbf16, #tpu.memory_space<vmem>>, %arg13: memref<1x128xf32, #tpu.memory_space<vmem>>, %arg14: memref<128x128xbf16, #tpu.memory_space<vmem>>, %arg15: memref<1x128xf32, #tpu.memory_space<vmem>>, %arg16: memref<8x128xf32, #tpu.memory_space<vmem>>, %arg17: memref<112x128xf32, #tpu.memory_space<vmem>>) attributes {dimension_semantics = [#tpu.dimension_semantics<parallel>], iteration_bounds = array<i64: 2>, scalar_prefetch = 0 : i64, scratch_operands = 1 : i64, tpu.core_type = #tpu.core_type<tc>, window_params = [{transform_indices = @transform_0, window_bounds = array<i64: 256, 128>}, {pipeline_mode = #tpu.pipeline_mode<synchronous>, transform_indices = @transform_1, window_bounds = array<i64: 5, 128, 256>}, {pipeline_mode = #tpu.pipeline_mode<synchronous>, transform_indices = @transform_2, window_bounds = array<i64: 1, 256>}, {pipeline_mode = #tpu.pipeline_mode<synchronous>, transform_indices = @transform_3, window_bounds = array<i64: 5, 128, 256>}, {pipeline_mode = #tpu.pipeline_mode<synchronous>, transform_indices = @transform_4, window_bounds = array<i64: 1, 256>}, {pipeline_mode = #tpu.pipeline_mode<synchronous>, transform_indices = @transform_5, window_bounds = array<i64: 112, 252>}, {pipeline_mode = #tpu.pipeline_mode<synchronous>, transform_indices = @transform_6, window_bounds = array<i64: 112, 252>}, {pipeline_mode = #tpu.pipeline_mode<synchronous>, transform_indices = @transform_7, window_bounds = array<i64: 40, 108>}, {pipeline_mode = #tpu.pipeline_mode<synchronous>, transform_indices = @transform_8, window_bounds = array<i64: 40, 108>}, {pipeline_mode = #tpu.pipeline_mode<synchronous>, transform_indices = @transform_9, window_bounds = array<i64: 5, 128, 128>}, {pipeline_mode = #tpu.pipeline_mode<synchronous>, transform_indices = @transform_10, window_bounds = array<i64: 1, 128>}, {pipeline_mode = #tpu.pipeline_mode<synchronous>, transform_indices = @transform_11, window_bounds = array<i64: 128, 128>}, {pipeline_mode = #tpu.pipeline_mode<synchronous>, transform_indices = @transform_12, window_bounds = array<i64: 1, 128>}, {pipeline_mode = #tpu.pipeline_mode<synchronous>, transform_indices = @transform_13, window_bounds = array<i64: 128, 128>}, {pipeline_mode = #tpu.pipeline_mode<synchronous>, transform_indices = @transform_14, window_bounds = array<i64: 1, 128>}, {transform_indices = @transform_15, window_bounds = array<i64: 8, 128>}]} {
    %c0 = arith.constant 0 : index
    %c0_0 = arith.constant 0 : index
    %0 = vector.load %arg3[%c0, %c0_0] : memref<1x256xf32, #tpu.memory_space<vmem>>, vector<1x256xf32>
    %1 = vector.shape_cast %0 : vector<1x256xf32> to vector<1x256xf32>
    %2 = vector.broadcast %1 : vector<1x256xf32> to vector<252x256xf32>
    %c0_1 = arith.constant 0 : index
    %c0_2 = arith.constant 0 : index
    %3 = vector.load %arg1[%c0_1, %c0_2] : memref<256x128xf32, #tpu.memory_space<vmem>>, vector<252x128xf32>
    %4 = arith.truncf %3 : vector<252x128xf32> to vector<252x128xbf16>
    %c0_3 = arith.constant 0 : index
    %c0_4 = arith.constant 0 : index
    %c0_5 = arith.constant 0 : index
    %5 = vector.load %arg2[%c0_3, %c0_4, %c0_5] : memref<5x128x256xbf16, #tpu.memory_space<vmem>>, vector<1x128x256xbf16>
    %6 = vector.shape_cast %5 : vector<1x128x256xbf16> to vector<128x256xbf16>
    %cst = arith.constant dense<0.000000e+00> : vector<252x256xf32>
    %7 = tpu.matmul %4, %6, %cst {dimension_numbers = #tpu.dot_dimension_numbers<[1], [0], [0], [1], [0, 0, 1, 1], [], []>} : vector<252x128xbf16>, vector<128x256xbf16>, vector<252x256xf32> -> vector<252x256xf32>
    %8 = arith.addf %2, %7 : vector<252x256xf32>
    %c1 = arith.constant 1 : index
    %c0_6 = arith.constant 0 : index
    %9 = vector.load %arg1[%c1, %c0_6] : memref<256x128xf32, #tpu.memory_space<vmem>>, vector<252x128xf32>
    %10 = arith.truncf %9 : vector<252x128xf32> to vector<252x128xbf16>
    %c1_7 = arith.constant 1 : index
    %c0_8 = arith.constant 0 : index
    %c0_9 = arith.constant 0 : index
    %11 = vector.load %arg2[%c1_7, %c0_8, %c0_9] : memref<5x128x256xbf16, #tpu.memory_space<vmem>>, vector<1x128x256xbf16>
    %12 = vector.shape_cast %11 : vector<1x128x256xbf16> to vector<128x256xbf16>
    %cst_10 = arith.constant dense<0.000000e+00> : vector<252x256xf32>
    %13 = tpu.matmul %10, %12, %cst_10 {dimension_numbers = #tpu.dot_dimension_numbers<[1], [0], [0], [1], [0, 0, 1, 1], [], []>} : vector<252x128xbf16>, vector<128x256xbf16>, vector<252x256xf32> -> vector<252x256xf32>
    %14 = arith.addf %8, %13 : vector<252x256xf32>
    %c2 = arith.constant 2 : index
    %c0_11 = arith.constant 0 : index
    %15 = vector.load %arg1[%c2, %c0_11] : memref<256x128xf32, #tpu.memory_space<vmem>>, vector<252x128xf32>
    %16 = arith.truncf %15 : vector<252x128xf32> to vector<252x128xbf16>
    %c2_12 = arith.constant 2 : index
    %c0_13 = arith.constant 0 : index
    %c0_14 = arith.constant 0 : index
    %17 = vector.load %arg2[%c2_12, %c0_13, %c0_14] : memref<5x128x256xbf16, #tpu.memory_space<vmem>>, vector<1x128x256xbf16>
    %18 = vector.shape_cast %17 : vector<1x128x256xbf16> to vector<128x256xbf16>
    %cst_15 = arith.constant dense<0.000000e+00> : vector<252x256xf32>
    %19 = tpu.matmul %16, %18, %cst_15 {dimension_numbers = #tpu.dot_dimension_numbers<[1], [0], [0], [1], [0, 0, 1, 1], [], []>} : vector<252x128xbf16>, vector<128x256xbf16>, vector<252x256xf32> -> vector<252x256xf32>
    %20 = arith.addf %14, %19 : vector<252x256xf32>
    %c3 = arith.constant 3 : index
    %c0_16 = arith.constant 0 : index
    %21 = vector.load %arg1[%c3, %c0_16] : memref<256x128xf32, #tpu.memory_space<vmem>>, vector<252x128xf32>
    %22 = arith.truncf %21 : vector<252x128xf32> to vector<252x128xbf16>
    %c3_17 = arith.constant 3 : index
    %c0_18 = arith.constant 0 : index
    %c0_19 = arith.constant 0 : index
    %23 = vector.load %arg2[%c3_17, %c0_18, %c0_19] : memref<5x128x256xbf16, #tpu.memory_space<vmem>>, vector<1x128x256xbf16>
    %24 = vector.shape_cast %23 : vector<1x128x256xbf16> to vector<128x256xbf16>
    %cst_20 = arith.constant dense<0.000000e+00> : vector<252x256xf32>
    %25 = tpu.matmul %22, %24, %cst_20 {dimension_numbers = #tpu.dot_dimension_numbers<[1], [0], [0], [1], [0, 0, 1, 1], [], []>} : vector<252x128xbf16>, vector<128x256xbf16>, vector<252x256xf32> -> vector<252x256xf32>
    %26 = arith.addf %20, %25 : vector<252x256xf32>
    %c4 = arith.constant 4 : index
    %c0_21 = arith.constant 0 : index
    %27 = vector.load %arg1[%c4, %c0_21] : memref<256x128xf32, #tpu.memory_space<vmem>>, vector<252x128xf32>
    %28 = arith.truncf %27 : vector<252x128xf32> to vector<252x128xbf16>
    %c4_22 = arith.constant 4 : index
    %c0_23 = arith.constant 0 : index
    %c0_24 = arith.constant 0 : index
    %29 = vector.load %arg2[%c4_22, %c0_23, %c0_24] : memref<5x128x256xbf16, #tpu.memory_space<vmem>>, vector<1x128x256xbf16>
    %30 = vector.shape_cast %29 : vector<1x128x256xbf16> to vector<128x256xbf16>
    %cst_25 = arith.constant dense<0.000000e+00> : vector<252x256xf32>
    %31 = tpu.matmul %28, %30, %cst_25 {dimension_numbers = #tpu.dot_dimension_numbers<[1], [0], [0], [1], [0, 0, 1, 1], [], []>} : vector<252x128xbf16>, vector<128x256xbf16>, vector<252x256xf32> -> vector<252x256xf32>
    %32 = arith.addf %26, %31 : vector<252x256xf32>
    %cst_26 = arith.constant 0.000000e+00 : f32
    %33 = vector.broadcast %cst_26 : f32 to vector<252x256xf32>
    %34 = arith.maximumf %32, %33 : vector<252x256xf32>
    %35 = arith.truncf %34 : vector<252x256xf32> to vector<252x256xbf16>
    %c0_27 = arith.constant 0 : index
    %c0_28 = arith.constant 0 : index
    %36 = vector.load %arg6[%c0_27, %c0_28] : memref<112x252xbf16, #tpu.memory_space<vmem>>, vector<112x252xbf16>
    %cst_29 = arith.constant dense<0.000000e+00> : vector<112x256xf32>
    %37 = tpu.matmul %36, %35, %cst_29 {dimension_numbers = #tpu.dot_dimension_numbers<[1], [0], [0], [1], [0, 0, 1, 1], [], []>} : vector<112x252xbf16>, vector<252x256xbf16>, vector<112x256xf32> -> vector<112x256xf32>
    %c0_30 = arith.constant 0 : index
    %c0_31 = arith.constant 0 : index
    %38 = vector.load %arg7[%c0_30, %c0_31] : memref<112x252xbf16, #tpu.memory_space<vmem>>, vector<112x252xbf16>
    %cst_32 = arith.constant dense<0.000000e+00> : vector<112x256xf32>
    %39 = tpu.matmul %38, %35, %cst_32 {dimension_numbers = #tpu.dot_dimension_numbers<[1], [0], [0], [1], [0, 0, 1, 1], [], []>} : vector<112x252xbf16>, vector<252x256xbf16>, vector<112x256xf32> -> vector<112x256xf32>
    %40 = arith.maximumf %37, %39 : vector<112x256xf32>
    %41 = vector.extract_strided_slice %40 {offsets = [0, 0], sizes = [112, 128], strides = [1, 1]} : vector<112x256xf32> to vector<112x128xf32>
    %42 = vector.extract_strided_slice %40 {offsets = [0, 128], sizes = [112, 128], strides = [1, 1]} : vector<112x256xf32> to vector<112x128xf32>
    %43 = arith.maximumf %41, %42 : vector<112x128xf32>
    %c0_33 = arith.constant 0 : index
    %c0_34 = arith.constant 0 : index
    %44 = vector.load %arg17[%c0_33, %c0_34] : memref<112x128xf32, #tpu.memory_space<vmem>>, vector<112x128xf32>
    tpu.vector_store %arg17[%c0_33, %c0_34], %43 {strides = array<i32>} : memref<112x128xf32, #tpu.memory_space<vmem>>, vector<112x128xf32>,
    %c0_35 = arith.constant 0 : index
    %c0_36 = arith.constant 0 : index
    %45 = vector.load %arg5[%c0_35, %c0_36] : memref<1x256xf32, #tpu.memory_space<vmem>>, vector<1x256xf32>
    %46 = vector.shape_cast %45 : vector<1x256xf32> to vector<1x256xf32>
    %47 = vector.broadcast %46 : vector<1x256xf32> to vector<108x256xf32>
    %c0_37 = arith.constant 0 : index
    %c0_38 = arith.constant 0 : index
    %48 = vector.load %arg17[%c0_37, %c0_38] : memref<112x128xf32, #tpu.memory_space<vmem>>, vector<108x128xf32>
    %49 = arith.truncf %48 : vector<108x128xf32> to vector<108x128xbf16>
    %c0_39 = arith.constant 0 : index
    %c0_40 = arith.constant 0 : index
    %c0_41 = arith.constant 0 : index
    %50 = vector.load %arg4[%c0_39, %c0_40, %c0_41] : memref<5x128x256xbf16, #tpu.memory_space<vmem>>, vector<1x128x256xbf16>
    %51 = vector.shape_cast %50 : vector<1x128x256xbf16> to vector<128x256xbf16>
    %cst_42 = arith.constant dense<0.000000e+00> : vector<108x256xf32>
    %52 = tpu.matmul %49, %51, %cst_42 {dimension_numbers = #tpu.dot_dimension_numbers<[1], [0], [0], [1], [0, 0, 1, 1], [], []>} : vector<108x128xbf16>, vector<128x256xbf16>, vector<108x256xf32> -> vector<108x256xf32>
    %53 = arith.addf %47, %52 : vector<108x256xf32>
    %c1_43 = arith.constant 1 : index
    %c0_44 = arith.constant 0 : index
    %54 = vector.load %arg17[%c1_43, %c0_44] : memref<112x128xf32, #tpu.memory_space<vmem>>, vector<108x128xf32>
    %55 = arith.truncf %54 : vector<108x128xf32> to vector<108x128xbf16>
    %c1_45 = arith.constant 1 : index
    %c0_46 = arith.constant 0 : index
    %c0_47 = arith.constant 0 : index
    %56 = vector.load %arg4[%c1_45, %c0_46, %c0_47] : memref<5x128x256xbf16, #tpu.memory_space<vmem>>, vector<1x128x256xbf16>
    %57 = vector.shape_cast %56 : vector<1x128x256xbf16> to vector<128x256xbf16>
    %cst_48 = arith.constant dense<0.000000e+00> : vector<108x256xf32>
    %58 = tpu.matmul %55, %57, %cst_48 {dimension_numbers = #tpu.dot_dimension_numbers<[1], [0], [0], [1], [0, 0, 1, 1], [], []>} : vector<108x128xbf16>, vector<128x256xbf16>, vector<108x256xf32> -> vector<108x256xf32>
    %59 = arith.addf %53, %58 : vector<108x256xf32>
    %c2_49 = arith.constant 2 : index
    %c0_50 = arith.constant 0 : index
    %60 = vector.load %arg17[%c2_49, %c0_50] : memref<112x128xf32, #tpu.memory_space<vmem>>, vector<108x128xf32>
    %61 = arith.truncf %60 : vector<108x128xf32> to vector<108x128xbf16>
    %c2_51 = arith.constant 2 : index
    %c0_52 = arith.constant 0 : index
    %c0_53 = arith.constant 0 : index
    %62 = vector.load %arg4[%c2_51, %c0_52, %c0_53] : memref<5x128x256xbf16, #tpu.memory_space<vmem>>, vector<1x128x256xbf16>
    %63 = vector.shape_cast %62 : vector<1x128x256xbf16> to vector<128x256xbf16>
    %cst_54 = arith.constant dense<0.000000e+00> : vector<108x256xf32>
    %64 = tpu.matmul %61, %63, %cst_54 {dimension_numbers = #tpu.dot_dimension_numbers<[1], [0], [0], [1], [0, 0, 1, 1], [], []>} : vector<108x128xbf16>, vector<128x256xbf16>, vector<108x256xf32> -> vector<108x256xf32>
    %65 = arith.addf %59, %64 : vector<108x256xf32>
    %c3_55 = arith.constant 3 : index
    %c0_56 = arith.constant 0 : index
    %66 = vector.load %arg17[%c3_55, %c0_56] : memref<112x128xf32, #tpu.memory_space<vmem>>, vector<108x128xf32>
    %67 = arith.truncf %66 : vector<108x128xf32> to vector<108x128xbf16>
    %c3_57 = arith.constant 3 : index
    %c0_58 = arith.constant 0 : index
    %c0_59 = arith.constant 0 : index
    %68 = vector.load %arg4[%c3_57, %c0_58, %c0_59] : memref<5x128x256xbf16, #tpu.memory_space<vmem>>, vector<1x128x256xbf16>
    %69 = vector.shape_cast %68 : vector<1x128x256xbf16> to vector<128x256xbf16>
    %cst_60 = arith.constant dense<0.000000e+00> : vector<108x256xf32>
    %70 = tpu.matmul %67, %69, %cst_60 {dimension_numbers = #tpu.dot_dimension_numbers<[1], [0], [0], [1], [0, 0, 1, 1], [], []>} : vector<108x128xbf16>, vector<128x256xbf16>, vector<108x256xf32> -> vector<108x256xf32>
    %71 = arith.addf %65, %70 : vector<108x256xf32>
    %c4_61 = arith.constant 4 : index
    %c0_62 = arith.constant 0 : index
    %72 = vector.load %arg17[%c4_61, %c0_62] : memref<112x128xf32, #tpu.memory_space<vmem>>, vector<108x128xf32>
    %73 = arith.truncf %72 : vector<108x128xf32> to vector<108x128xbf16>
    %c4_63 = arith.constant 4 : index
    %c0_64 = arith.constant 0 : index
    %c0_65 = arith.constant 0 : index
    %74 = vector.load %arg4[%c4_63, %c0_64, %c0_65] : memref<5x128x256xbf16, #tpu.memory_space<vmem>>, vector<1x128x256xbf16>
    %75 = vector.shape_cast %74 : vector<1x128x256xbf16> to vector<128x256xbf16>
    %cst_66 = arith.constant dense<0.000000e+00> : vector<108x256xf32>
    %76 = tpu.matmul %73, %75, %cst_66 {dimension_numbers = #tpu.dot_dimension_numbers<[1], [0], [0], [1], [0, 0, 1, 1], [], []>} : vector<108x128xbf16>, vector<128x256xbf16>, vector<108x256xf32> -> vector<108x256xf32>
    %77 = arith.addf %71, %76 : vector<108x256xf32>
    %cst_67 = arith.constant 0.000000e+00 : f32
    %78 = vector.broadcast %cst_67 : f32 to vector<108x256xf32>
    %79 = arith.maximumf %77, %78 : vector<108x256xf32>
    %80 = arith.truncf %79 : vector<108x256xf32> to vector<108x256xbf16>
    %c0_68 = arith.constant 0 : index
    %c0_69 = arith.constant 0 : index
    %81 = vector.load %arg8[%c0_68, %c0_69] : memref<40x108xbf16, #tpu.memory_space<vmem>>, vector<40x108xbf16>
    %cst_70 = arith.constant dense<0.000000e+00> : vector<40x256xf32>
    %82 = tpu.matmul %81, %80, %cst_70 {dimension_numbers = #tpu.dot_dimension_numbers<[1], [0], [0], [1], [0, 0, 1, 1], [], []>} : vector<40x108xbf16>, vector<108x256xbf16>, vector<40x256xf32> -> vector<40x256xf32>
    %c0_71 = arith.constant 0 : index
    %c0_72 = arith.constant 0 : index
    %83 = vector.load %arg9[%c0_71, %c0_72] : memref<40x108xbf16, #tpu.memory_space<vmem>>, vector<40x108xbf16>
    %cst_73 = arith.constant dense<0.000000e+00> : vector<40x256xf32>
    %84 = tpu.matmul %83, %80, %cst_73 {dimension_numbers = #tpu.dot_dimension_numbers<[1], [0], [0], [1], [0, 0, 1, 1], [], []>} : vector<40x108xbf16>, vector<108x256xbf16>, vector<40x256xf32> -> vector<40x256xf32>
    %85 = arith.maximumf %82, %84 : vector<40x256xf32>
    %86 = vector.extract_strided_slice %85 {offsets = [0, 0], sizes = [40, 128], strides = [1, 1]} : vector<40x256xf32> to vector<40x128xf32>
    %87 = vector.extract_strided_slice %85 {offsets = [0, 128], sizes = [40, 128], strides = [1, 1]} : vector<40x256xf32> to vector<40x128xf32>
    %88 = arith.maximumf %86, %87 : vector<40x128xf32>
    %c0_74 = arith.constant 0 : index
    %c0_75 = arith.constant 0 : index
    %89 = vector.load %arg11[%c0_74, %c0_75] : memref<1x128xf32, #tpu.memory_space<vmem>>, vector<1x128xf32>
    %90 = vector.shape_cast %89 : vector<1x128xf32> to vector<1x128xf32>
    %91 = vector.broadcast %90 : vector<1x128xf32> to vector<8x128xf32>
    %92 = vector.extract_strided_slice %88 {offsets = [0, 0], sizes = [8, 128], strides = [1, 1]} : vector<40x128xf32> to vector<8x128xf32>
    %93 = arith.truncf %92 : vector<8x128xf32> to vector<8x128xbf16>
    %c0_76 = arith.constant 0 : index
    %c0_77 = arith.constant 0 : index
    %c0_78 = arith.constant 0 : index
    %94 = vector.load %arg10[%c0_76, %c0_77, %c0_78] : memref<5x128x128xbf16, #tpu.memory_space<vmem>>, vector<1x128x128xbf16>
    %95 = vector.shape_cast %94 : vector<1x128x128xbf16> to vector<128x128xbf16>
    %cst_79 = arith.constant dense<0.000000e+00> : vector<8x128xf32>
    %96 = tpu.matmul %93, %95, %cst_79 {dimension_numbers = #tpu.dot_dimension_numbers<[1], [0], [0], [1], [0, 0, 1, 1], [], []>} : vector<8x128xbf16>, vector<128x128xbf16>, vector<8x128xf32> -> vector<8x128xf32>
    %97 = arith.addf %91, %96 : vector<8x128xf32>
    %98 = vector.extract_strided_slice %88 {offsets = [8, 0], sizes = [8, 128], strides = [1, 1]} : vector<40x128xf32> to vector<8x128xf32>
    %99 = arith.truncf %98 : vector<8x128xf32> to vector<8x128xbf16>
    %c1_80 = arith.constant 1 : index
    %c0_81 = arith.constant 0 : index
    %c0_82 = arith.constant 0 : index
    %100 = vector.load %arg10[%c1_80, %c0_81, %c0_82] : memref<5x128x128xbf16, #tpu.memory_space<vmem>>, vector<1x128x128xbf16>
    %101 = vector.shape_cast %100 : vector<1x128x128xbf16> to vector<128x128xbf16>
    %cst_83 = arith.constant dense<0.000000e+00> : vector<8x128xf32>
    %102 = tpu.matmul %99, %101, %cst_83 {dimension_numbers = #tpu.dot_dimension_numbers<[1], [0], [0], [1], [0, 0, 1, 1], [], []>} : vector<8x128xbf16>, vector<128x128xbf16>, vector<8x128xf32> -> vector<8x128xf32>
    %103 = arith.addf %97, %102 : vector<8x128xf32>
    %104 = vector.extract_strided_slice %88 {offsets = [16, 0], sizes = [8, 128], strides = [1, 1]} : vector<40x128xf32> to vector<8x128xf32>
    %105 = arith.truncf %104 : vector<8x128xf32> to vector<8x128xbf16>
    %c2_84 = arith.constant 2 : index
    %c0_85 = arith.constant 0 : index
    %c0_86 = arith.constant 0 : index
    %106 = vector.load %arg10[%c2_84, %c0_85, %c0_86] : memref<5x128x128xbf16, #tpu.memory_space<vmem>>, vector<1x128x128xbf16>
    %107 = vector.shape_cast %106 : vector<1x128x128xbf16> to vector<128x128xbf16>
    %cst_87 = arith.constant dense<0.000000e+00> : vector<8x128xf32>
    %108 = tpu.matmul %105, %107, %cst_87 {dimension_numbers = #tpu.dot_dimension_numbers<[1], [0], [0], [1], [0, 0, 1, 1], [], []>} : vector<8x128xbf16>, vector<128x128xbf16>, vector<8x128xf32> -> vector<8x128xf32>
    %109 = arith.addf %103, %108 : vector<8x128xf32>
    %110 = vector.extract_strided_slice %88 {offsets = [24, 0], sizes = [8, 128], strides = [1, 1]} : vector<40x128xf32> to vector<8x128xf32>
    %111 = arith.truncf %110 : vector<8x128xf32> to vector<8x128xbf16>
    %c3_88 = arith.constant 3 : index
    %c0_89 = arith.constant 0 : index
    %c0_90 = arith.constant 0 : index
    %112 = vector.load %arg10[%c3_88, %c0_89, %c0_90] : memref<5x128x128xbf16, #tpu.memory_space<vmem>>, vector<1x128x128xbf16>
    %113 = vector.shape_cast %112 : vector<1x128x128xbf16> to vector<128x128xbf16>
    %cst_91 = arith.constant dense<0.000000e+00> : vector<8x128xf32>
    %114 = tpu.matmul %111, %113, %cst_91 {dimension_numbers = #tpu.dot_dimension_numbers<[1], [0], [0], [1], [0, 0, 1, 1], [], []>} : vector<8x128xbf16>, vector<128x128xbf16>, vector<8x128xf32> -> vector<8x128xf32>
    %115 = arith.addf %109, %114 : vector<8x128xf32>
    %116 = vector.extract_strided_slice %88 {offsets = [32, 0], sizes = [8, 128], strides = [1, 1]} : vector<40x128xf32> to vector<8x128xf32>
    %117 = arith.truncf %116 : vector<8x128xf32> to vector<8x128xbf16>
    %c4_92 = arith.constant 4 : index
    %c0_93 = arith.constant 0 : index
    %c0_94 = arith.constant 0 : index
    %118 = vector.load %arg10[%c4_92, %c0_93, %c0_94] : memref<5x128x128xbf16, #tpu.memory_space<vmem>>, vector<1x128x128xbf16>
    %119 = vector.shape_cast %118 : vector<1x128x128xbf16> to vector<128x128xbf16>
    %cst_95 = arith.constant dense<0.000000e+00> : vector<8x128xf32>
    %120 = tpu.matmul %117, %119, %cst_95 {dimension_numbers = #tpu.dot_dimension_numbers<[1], [0], [0], [1], [0, 0, 1, 1], [], []>} : vector<8x128xbf16>, vector<128x128xbf16>, vector<8x128xf32> -> vector<8x128xf32>
    %121 = arith.addf %115, %120 : vector<8x128xf32>
    %cst_96 = arith.constant 0.000000e+00 : f32
    %122 = vector.broadcast %cst_96 : f32 to vector<8x128xf32>
    %123 = arith.maximumf %121, %122 : vector<8x128xf32>
    %124 = arith.truncf %123 : vector<8x128xf32> to vector<8x128xbf16>
    %c0_97 = arith.constant 0 : index
    %c0_98 = arith.constant 0 : index
    %125 = vector.load %arg12[%c0_97, %c0_98] : memref<128x128xbf16, #tpu.memory_space<vmem>>, vector<128x128xbf16>
    %cst_99 = arith.constant dense<0.000000e+00> : vector<8x128xf32>
    %126 = tpu.matmul %124, %125, %cst_99 {dimension_numbers = #tpu.dot_dimension_numbers<[1], [0], [0], [1], [0, 0, 1, 1], [], []>} : vector<8x128xbf16>, vector<128x128xbf16>, vector<8x128xf32> -> vector<8x128xf32>
    %c0_100 = arith.constant 0 : index
    %c0_101 = arith.constant 0 : index
    %127 = vector.load %arg13[%c0_100, %c0_101] : memref<1x128xf32, #tpu.memory_space<vmem>>, vector<1x128xf32>
    %128 = vector.broadcast %127 : vector<1x128xf32> to vector<8x128xf32>
    %129 = arith.addf %126, %128 : vector<8x128xf32>
    %cst_102 = arith.constant 0.000000e+00 : f32
    %130 = vector.broadcast %cst_102 : f32 to vector<8x128xf32>
    %131 = arith.maximumf %129, %130 : vector<8x128xf32>
    %132 = arith.truncf %131 : vector<8x128xf32> to vector<8x128xbf16>
    %c0_103 = arith.constant 0 : index
    %c0_104 = arith.constant 0 : index
    %133 = vector.load %arg14[%c0_103, %c0_104] : memref<128x128xbf16, #tpu.memory_space<vmem>>, vector<128x128xbf16>
    %cst_105 = arith.constant dense<0.000000e+00> : vector<8x128xf32>
    %134 = tpu.matmul %132, %133, %cst_105 {dimension_numbers = #tpu.dot_dimension_numbers<[1], [0], [0], [1], [0, 0, 1, 1], [], []>} : vector<8x128xbf16>, vector<128x128xbf16>, vector<8x128xf32> -> vector<8x128xf32>
    %c0_106 = arith.constant 0 : index
    %c0_107 = arith.constant 0 : index
    %135 = vector.load %arg15[%c0_106, %c0_107] : memref<1x128xf32, #tpu.memory_space<vmem>>, vector<1x128xf32>
    %136 = vector.broadcast %135 : vector<1x128xf32> to vector<8x128xf32>
    %137 = arith.addf %134, %136 : vector<8x128xf32>
    %c0_108 = arith.constant 0 : index
    %c0_109 = arith.constant 0 : index
    %138 = vector.load %arg16[%c0_108, %c0_109] : memref<8x128xf32, #tpu.memory_space<vmem>>, vector<8x128xf32>
    tpu.vector_store %arg16[%c0_108, %c0_109], %137 {strides = array<i32>} : memref<8x128xf32, #tpu.memory_space<vmem>>, vector<8x128xf32>,
    return
  }
  func.func @transform_0(%arg0: i32) -> (i32, i32) {
    %c0_i32 = arith.constant 0 : i32
    %c0_i32_0 = arith.constant 0 : i32
    return %arg0, %c0_i32 : i32, i32
  }
  func.func @transform_1(%arg0: i32) -> (i32, i32, i32) {
    %c0_i32 = arith.constant 0 : i32
    %c0_i32_0 = arith.constant 0 : i32
    %c0_i32_1 = arith.constant 0 : i32
    %c0_i32_2 = arith.constant 0 : i32
    return %c0_i32, %c0_i32_0, %c0_i32_1 : i32, i32, i32
  }
  func.func @transform_2(%arg0: i32) -> (i32, i32) {
    %c0_i32 = arith.constant 0 : i32
    %c0_i32_0 = arith.constant 0 : i32
    %c0_i32_1 = arith.constant 0 : i32
    return %c0_i32, %c0_i32_0 : i32, i32
  }
  func.func @transform_3(%arg0: i32) -> (i32, i32, i32) {
    %c0_i32 = arith.constant 0 : i32
    %c0_i32_0 = arith.constant 0 : i32
    %c0_i32_1 = arith.constant 0 : i32
    %c0_i32_2 = arith.constant 0 : i32
    return %c0_i32, %c0_i32_0, %c0_i32_1 : i32, i32, i32
  }
  func.func @transform_4(%arg0: i32) -> (i32, i32) {
    %c0_i32 = arith.constant 0 : i32
    %c0_i32_0 = arith.constant 0 : i32
    %c0_i32_1 = arith.constant 0 : i32
    return %c0_i32, %c0_i32_0 : i32, i32
  }
  func.func @transform_5(%arg0: i32) -> (i32, i32) {
    %c0_i32 = arith.constant 0 : i32
    %c0_i32_0 = arith.constant 0 : i32
    %c0_i32_1 = arith.constant 0 : i32
    return %c0_i32, %c0_i32_0 : i32, i32
  }
  func.func @transform_6(%arg0: i32) -> (i32, i32) {
    %c0_i32 = arith.constant 0 : i32
    %c0_i32_0 = arith.constant 0 : i32
    %c0_i32_1 = arith.constant 0 : i32
    return %c0_i32, %c0_i32_0 : i32, i32
  }
  func.func @transform_7(%arg0: i32) -> (i32, i32) {
    %c0_i32 = arith.constant 0 : i32
    %c0_i32_0 = arith.constant 0 : i32
    %c0_i32_1 = arith.constant 0 : i32
    return %c0_i32, %c0_i32_0 : i32, i32
  }
  func.func @transform_8(%arg0: i32) -> (i32, i32) {
    %c0_i32 = arith.constant 0 : i32
    %c0_i32_0 = arith.constant 0 : i32
    %c0_i32_1 = arith.constant 0 : i32
    return %c0_i32, %c0_i32_0 : i32, i32
  }
  func.func @transform_9(%arg0: i32) -> (i32, i32, i32) {
    %c0_i32 = arith.constant 0 : i32
    %c0_i32_0 = arith.constant 0 : i32
    %c0_i32_1 = arith.constant 0 : i32
    %c0_i32_2 = arith.constant 0 : i32
    return %c0_i32, %c0_i32_0, %c0_i32_1 : i32, i32, i32
  }
  func.func @transform_10(%arg0: i32) -> (i32, i32) {
    %c0_i32 = arith.constant 0 : i32
    %c0_i32_0 = arith.constant 0 : i32
    %c0_i32_1 = arith.constant 0 : i32
    return %c0_i32, %c0_i32_0 : i32, i32
  }
  func.func @transform_11(%arg0: i32) -> (i32, i32) {
    %c0_i32 = arith.constant 0 : i32
    %c0_i32_0 = arith.constant 0 : i32
    %c0_i32_1 = arith.constant 0 : i32
    return %c0_i32, %c0_i32_0 : i32, i32
  }
  func.func @transform_12(%arg0: i32) -> (i32, i32) {
    %c0_i32 = arith.constant 0 : i32
    %c0_i32_0 = arith.constant 0 : i32
    %c0_i32_1 = arith.constant 0 : i32
    return %c0_i32, %c0_i32_0 : i32, i32
  }
  func.func @transform_13(%arg0: i32) -> (i32, i32) {
    %c0_i32 = arith.constant 0 : i32
    %c0_i32_0 = arith.constant 0 : i32
    %c0_i32_1 = arith.constant 0 : i32
    return %c0_i32, %c0_i32_0 : i32, i32
  }
  func.func @transform_14(%arg0: i32) -> (i32, i32) {
    %c0_i32 = arith.constant 0 : i32
    %c0_i32_0 = arith.constant 0 : i32
    %c0_i32_1 = arith.constant 0 : i32
    return %c0_i32, %c0_i32_0 : i32, i32
  }
  func.func @transform_15(%arg0: i32) -> (i32, i32) {
    %c0_i32 = arith.constant 0 : i32
    %c0_i32_0 = arith.constant 0 : i32
    return %arg0, %c0_i32 : i32, i32
  }
}

</mosaic_0001>

<llo_original>
// kernel: network_forward.1
$region0: #{network_forward.1}
  #allocation0 [shape = 'u32[]', space=smem, size = 0x4, offset = 0x4, fixed_abs, tag = 'smem constant byte address 0x4 - core index']
  #allocation1 [shape = 'u32[144,128]{1,0:T(1,128)}', space=vmem, size = 0x12000, scoped, tag = 'internal scratch']
  #allocation2 [shape = 'f32[112,128]{1,0:T(8,128)}', space=vmem, size = 0xe000, scoped, tag = 'scratch operand']
  %s0 = inlined_call_operand.vmem [shape: f32[512,128], index: 0, kind: input, shape index: {}]
  %s1 = inlined_call_operand.vmem [shape: bf16[5,128,256], index: 1, kind: input, shape index: {}]
  %s2 = inlined_call_operand.vmem [shape: f32[1,256], index: 2, kind: input, shape index: {}]
  %s3 = inlined_call_operand.vmem [shape: bf16[5,128,256], index: 3, kind: input, shape index: {}]
  %s4 = inlined_call_operand.vmem [shape: f32[1,256], index: 4, kind: input, shape index: {}]
  %s5 = inlined_call_operand.vmem [shape: bf16[112,252], index: 5, kind: input, shape index: {}]
  %s6 = inlined_call_operand.vmem [shape: bf16[112,252], index: 6, kind: input, shape index: {}]
  %s7 = inlined_call_operand.vmem [shape: bf16[40,108], index: 7, kind: input, shape index: {}]
  %s8 = inlined_call_operand.vmem [shape: bf16[40,108], index: 8, kind: input, shape index: {}]
  %s9 = inlined_call_operand.vmem [shape: bf16[5,128,128], index: 9, kind: input, shape index: {}]
  %s10 = inlined_call_operand.vmem [shape: f32[1,128], index: 10, kind: input, shape index: {}]
  %s11 = inlined_call_operand.vmem [shape: bf16[128,128], index: 11, kind: input, shape index: {}]
  %s12 = inlined_call_operand.vmem [shape: f32[1,128], index: 12, kind: input, shape index: {}]
  %s13 = inlined_call_operand.vmem [shape: bf16[128,128], index: 13, kind: input, shape index: {}]
  %s14 = inlined_call_operand.vmem [shape: f32[1,128], index: 14, kind: input, shape index: {}]
  %s15 = inlined_call_operand.hbm [shape: f32[16,128], index: 15, kind: output, shape index: {}]
  %s16 = sld [smem:[#allocation0]]
  $region93: #{network_forward.1} parent=0
    _
  %s18 = ssub.s32 1, %s16
  %s19 = scalar_select 0, %s18, %s16
  $region1: #{network_forward.1} parent=0
    #allocation3 [shape = 'u8[8192]{0}', space=vmem, size = 0x2000, scoped, tag = 'output window, operand 0']
    #allocation4 [shape = 's32[2]{0}', space=sflag, size = 0x8, scoped, tag = 'scoped memory for network_forward.1']
    %20 = vsyncpa [#allocation4], 0
    %s21 = scalar_lea.sflag [#allocation4], 1
    %22 = vsyncpa %s21, 0
    loop: start=0, step=1, limit=4
    $region2: #{network_forward.1} parent=1 // loop_pre_header
      _
    $region3: #{network_forward.1} parent=1 // loop_header
      %s24 = sphi 0, %s28
      %p25 = scmp.ge.s32.totalorder %s24, 4
      %s34 = sphi 0, %s36
      %s37 = sphi 0, %s34
      %s38 = sphi 0, %s37
      %s54 = sphi 0, %s38
      %s58 = sphi 0, %s58
      %s60 = sphi 0, %s58
      %s61 = sphi 0, %s60
      %s75 = sphi 0, %s61
      %s79 = sphi 0, %s79
      %s81 = sphi 0, %s79
      %s82 = sphi 0, %s81
      %s96 = sphi 0, %s82
      %s100 = sphi 0, %s100
      %s102 = sphi 0, %s100
      %s103 = sphi 0, %s102
      %s117 = sphi 0, %s103
      %s121 = sphi 0, %s121
      %s123 = sphi 0, %s121
      %s124 = sphi 0, %s123
      %s138 = sphi 0, %s124
      %s142 = sphi 0, %s142
      %s144 = sphi 0, %s142
      %s145 = sphi 0, %s144
      %s159 = sphi 0, %s145
      %s163 = sphi 0, %s163
      %s165 = sphi 0, %s163
      %s166 = sphi 0, %s165
      %s180 = sphi 0, %s166
      %s184 = sphi 0, %s184
      %s186 = sphi 0, %s184
      %s187 = sphi 0, %s186
      %s201 = sphi 0, %s187
      %s205 = sphi 0, %s205
      %s207 = sphi 0, %s205
      %s208 = sphi 0, %s207
      %s222 = sphi 0, %s208
      %s226 = sphi 0, %s226
      %s228 = sphi 0, %s226
      %s229 = sphi 0, %s228
      %s243 = sphi 0, %s229
      %s247 = sphi 0, %s247
      %s249 = sphi 0, %s247
      %s250 = sphi 0, %s249
      %s264 = sphi 0, %s250
      %s268 = sphi 0, %s268
      %s270 = sphi 0, %s268
      %s271 = sphi 0, %s270
      %s285 = sphi 0, %s271
      %s289 = sphi 0, %s289
      %s291 = sphi 0, %s289
      %s292 = sphi 0, %s291
      %s306 = sphi 0, %s292
      %s310 = sphi 0, %s310
      %s312 = sphi 0, %s310
      %s313 = sphi 0, %s312
      %s327 = sphi 0, %s313
      %s331 = sphi 0, %s331
      %s333 = sphi 0, %s331
      %s334 = sphi 0, %s333
      %s348 = sphi 0, %s334
      %s354 = sphi 0, %s356
      %s357 = sphi 0, %s354
      %s358 = sphi 0, %s357
      %s374 = sphi 0, %s358
    $region4: #{network_forward.1} parent=1 // loop_header_branch
      %27 = sbr.rel (%p25) target = $region8
    $region5: #{network_forward.1} parent=1 // loop_body
      %s29 = ssub.s32 %s24, 1
      %s30 = ssub.s32 %s24, 2
      %s31 = sadd.s32 %s24, 1
      %s32 = ssub.s32 %s24, %s31
      %p33 = scmp.eq.s32.totalorder %s32, 0
      %s35 = sadd.s32 %s34, 1
      %s36 = scalar_select %p33, %s34, %s35
      %p39 = pneg %p33
      %p40 = scmp.eq.s32.totalorder %s24, 1
      %p41 = por %p39, %p40
      %p42 = scmp.ne.s32.totalorder %s34, %s37
      %p43 = scmp.eq.s32.totalorder %s24, 0
      %p44 = por %p42, %p43
      %p45 = scmp.ne.s32.totalorder %s34, %s37
      %p46 = scmp.eq.s32.totalorder %s29, 1
      %p47 = por %p45, %p46
      %p48 = scmp.ne.s32.totalorder %s37, %s38
      %p49 = scmp.eq.s32.totalorder %s29, 0
      %p50 = por %p48, %p49
      %p51 = scmp.ne.s32.totalorder %s37, %s38
      %p52 = scmp.eq.s32.totalorder %s30, 1
      %p53 = por %p51, %p52
      %p55 = scmp.ne.s32.totalorder %s38, %s54
      %p56 = scmp.eq.s32.totalorder %s30, 0
      %p57 = por %p55, %p56
      %s59 = sadd.s32 %s58, 1
      %p62 = scmp.eq.s32.totalorder %s24, 1
      %p63 = scmp.ne.s32.totalorder %s58, %s60
      %p64 = scmp.eq.s32.totalorder %s24, 0
      %p65 = por %p63, %p64
      %p66 = scmp.ne.s32.totalorder %s58, %s60
      %p67 = scmp.eq.s32.totalorder %s29, 1
      %p68 = por %p66, %p67
      %p69 = scmp.ne.s32.totalorder %s60, %s61
      %p70 = scmp.eq.s32.totalorder %s29, 0
      %p71 = por %p69, %p70
      %p72 = scmp.ne.s32.totalorder %s60, %s61
      %p73 = scmp.eq.s32.totalorder %s30, 1
      %p74 = por %p72, %p73
      %p76 = scmp.ne.s32.totalorder %s61, %s75
      %p77 = scmp.eq.s32.totalorder %s30, 0
      %p78 = por %p76, %p77
      %s80 = sadd.s32 %s79, 1
      %p83 = scmp.eq.s32.totalorder %s24, 1
      %p84 = scmp.ne.s32.totalorder %s79, %s81
      %p85 = scmp.eq.s32.totalorder %s24, 0
      %p86 = por %p84, %p85
      %p87 = scmp.ne.s32.totalorder %s79, %s81
      %p88 = scmp.eq.s32.totalorder %s29, 1
      %p89 = por %p87, %p88
      %p90 = scmp.ne.s32.totalorder %s81, %s82
      %p91 = scmp.eq.s32.totalorder %s29, 0
      %p92 = por %p90, %p91
      %p93 = scmp.ne.s32.totalorder %s81, %s82
      %p94 = scmp.eq.s32.totalorder %s30, 1
      %p95 = por %p93, %p94
      %p97 = scmp.ne.s32.totalorder %s82, %s96
      %p98 = scmp.eq.s32.totalorder %s30, 0
      %p99 = por %p97, %p98
      %s101 = sadd.s32 %s100, 1
      %p104 = scmp.eq.s32.totalorder %s24, 1
      %p105 = scmp.ne.s32.totalorder %s100, %s102
      %p106 = scmp.eq.s32.totalorder %s24, 0
      %p107 = por %p105, %p106
      %p108 = scmp.ne.s32.totalorder %s100, %s102
      %p109 = scmp.eq.s32.totalorder %s29, 1
      %p110 = por %p108, %p109
      %p111 = scmp.ne.s32.totalorder %s102, %s103
      %p112 = scmp.eq.s32.totalorder %s29, 0
      %p113 = por %p111, %p112
      %p114 = scmp.ne.s32.totalorder %s102, %s103
      %p115 = scmp.eq.s32.totalorder %s30, 1
      %p116 = por %p114, %p115
      %p118 = scmp.ne.s32.totalorder %s103, %s117
      %p119 = scmp.eq.s32.totalorder %s30, 0
      %p120 = por %p118, %p119
      %s122 = sadd.s32 %s121, 1
      %p125 = scmp.eq.s32.totalorder %s24, 1
      %p126 = scmp.ne.s32.totalorder %s121, %s123
      %p127 = scmp.eq.s32.totalorder %s24, 0
      %p128 = por %p126, %p127
      %p129 = scmp.ne.s32.totalorder %s121, %s123
      %p130 = scmp.eq.s32.totalorder %s29, 1
      %p131 = por %p129, %p130
      %p132 = scmp.ne.s32.totalorder %s123, %s124
      %p133 = scmp.eq.s32.totalorder %s29, 0
      %p134 = por %p132, %p133
      %p135 = scmp.ne.s32.totalorder %s123, %s124
      %p136 = scmp.eq.s32.totalorder %s30, 1
      %p137 = por %p135, %p136
      %p139 = scmp.ne.s32.totalorder %s124, %s138
      %p140 = scmp.eq.s32.totalorder %s30, 0
      %p141 = por %p139, %p140
      %s143 = sadd.s32 %s142, 1
      %p146 = scmp.eq.s32.totalorder %s24, 1
      %p147 = scmp.ne.s32.totalorder %s142, %s144
      %p148 = scmp.eq.s32.totalorder %s24, 0
      %p149 = por %p147, %p148
      %p150 = scmp.ne.s32.totalorder %s142, %s144
      %p151 = scmp.eq.s32.totalorder %s29, 1
      %p152 = por %p150, %p151
      %p153 = scmp.ne.s32.totalorder %s144, %s145
      %p154 = scmp.eq.s32.totalorder %s29, 0
      %p155 = por %p153, %p154
      %p156 = scmp.ne.s32.totalorder %s144, %s145
      %p157 = scmp.eq.s32.totalorder %s30, 1
      %p158 = por %p156, %p157
      %p160 = scmp.ne.s32.totalorder %s145, %s159
      %p161 = scmp.eq.s32.totalorder %s30, 0
      %p162 = por %p160, %p161
      %s164 = sadd.s32 %s163, 1
      %p167 = scmp.eq.s32.totalorder %s24, 1
      %p168 = scmp.ne.s32.totalorder %s163, %s165
      %p169 = scmp.eq.s32.totalorder %s24, 0
      %p170 = por %p168, %p169
      %p171 = scmp.ne.s32.totalorder %s163, %s165
      %p172 = scmp.eq.s32.totalorder %s29, 1
      %p173 = por %p171, %p172
      %p174 = scmp.ne.s32.totalorder %s165, %s166
      %p175 = scmp.eq.s32.totalorder %s29, 0
      %p176 = por %p174, %p175
      %p177 = scmp.ne.s32.totalorder %s165, %s166
      %p178 = scmp.eq.s32.totalorder %s30, 1
      %p179 = por %p177, %p178
      %p181 = scmp.ne.s32.totalorder %s166, %s180
      %p182 = scmp.eq.s32.totalorder %s30, 0
      %p183 = por %p181, %p182
      %s185 = sadd.s32 %s184, 1
      %p188 = scmp.eq.s32.totalorder %s24, 1
      %p189 = scmp.ne.s32.totalorder %s184, %s186
      %p190 = scmp.eq.s32.totalorder %s24, 0
      %p191 = por %p189, %p190
      %p192 = scmp.ne.s32.totalorder %s184, %s186
      %p193 = scmp.eq.s32.totalorder %s29, 1
      %p194 = por %p192, %p193
      %p195 = scmp.ne.s32.totalorder %s186, %s187
      %p196 = scmp.eq.s32.totalorder %s29, 0
      %p197 = por %p195, %p196
      %p198 = scmp.ne.s32.totalorder %s186, %s187
      %p199 = scmp.eq.s32.totalorder %s30, 1
      %p200 = por %p198, %p199
      %p202 = scmp.ne.s32.totalorder %s187, %s201
      %p203 = scmp.eq.s32.totalorder %s30, 0
      %p204 = por %p202, %p203
      %s206 = sadd.s32 %s205, 1
      %p209 = scmp.eq.s32.totalorder %s24, 1
      %p210 = scmp.ne.s32.totalorder %s205, %s207
      %p211 = scmp.eq.s32.totalorder %s24, 0
      %p212 = por %p210, %p211
      %p213 = scmp.ne.s32.totalorder %s205, %s207
      %p214 = scmp.eq.s32.totalorder %s29, 1
      %p215 = por %p213, %p214
      %p216 = scmp.ne.s32.totalorder %s207, %s208
      %p217 = scmp.eq.s32.totalorder %s29, 0
      %p218 = por %p216, %p217
      %p219 = scmp.ne.s32.totalorder %s207, %s208
      %p220 = scmp.eq.s32.totalorder %s30, 1
      %p221 = por %p219, %p220
      %p223 = scmp.ne.s32.totalorder %s208, %s222
      %p224 = scmp.eq.s32.totalorder %s30, 0
      %p225 = por %p223, %p224
      %s227 = sadd.s32 %s226, 1
      %p230 = scmp.eq.s32.totalorder %s24, 1
      %p231 = scmp.ne.s32.totalorder %s226, %s228
      %p232 = scmp.eq.s32.totalorder %s24, 0
      %p233 = por %p231, %p232
      %p234 = scmp.ne.s32.totalorder %s226, %s228
      %p235 = scmp.eq.s32.totalorder %s29, 1
      %p236 = por %p234, %p235
      %p237 = scmp.ne.s32.totalorder %s228, %s229
      %p238 = scmp.eq.s32.totalorder %s29, 0
      %p239 = por %p237, %p238
      %p240 = scmp.ne.s32.totalorder %s228, %s229
      %p241 = scmp.eq.s32.totalorder %s30, 1
      %p242 = por %p240, %p241
      %p244 = scmp.ne.s32.totalorder %s229, %s243
      %p245 = scmp.eq.s32.totalorder %s30, 0
      %p246 = por %p244, %p245
      %s248 = sadd.s32 %s247, 1
      %p251 = scmp.eq.s32.totalorder %s24, 1
      %p252 = scmp.ne.s32.totalorder %s247, %s249
      %p253 = scmp.eq.s32.totalorder %s24, 0
      %p254 = por %p252, %p253
      %p255 = scmp.ne.s32.totalorder %s247, %s249
      %p256 = scmp.eq.s32.totalorder %s29, 1
      %p257 = por %p255, %p256
      %p258 = scmp.ne.s32.totalorder %s249, %s250
      %p259 = scmp.eq.s32.totalorder %s29, 0
      %p260 = por %p258, %p259
      %p261 = scmp.ne.s32.totalorder %s249, %s250
      %p262 = scmp.eq.s32.totalorder %s30, 1
      %p263 = por %p261, %p262
      %p265 = scmp.ne.s32.totalorder %s250, %s264
      %p266 = scmp.eq.s32.totalorder %s30, 0
      %p267 = por %p265, %p266
      %s269 = sadd.s32 %s268, 1
      %p272 = scmp.eq.s32.totalorder %s24, 1
      %p273 = scmp.ne.s32.totalorder %s268, %s270
      %p274 = scmp.eq.s32.totalorder %s24, 0
      %p275 = por %p273, %p274
      %p276 = scmp.ne.s32.totalorder %s268, %s270
      %p277 = scmp.eq.s32.totalorder %s29, 1
      %p278 = por %p276, %p277
      %p279 = scmp.ne.s32.totalorder %s270, %s271
      %p280 = scmp.eq.s32.totalorder %s29, 0
      %p281 = por %p279, %p280
      %p282 = scmp.ne.s32.totalorder %s270, %s271
      %p283 = scmp.eq.s32.totalorder %s30, 1
      %p284 = por %p282, %p283
      %p286 = scmp.ne.s32.totalorder %s271, %s285
      %p287 = scmp.eq.s32.totalorder %s30, 0
      %p288 = por %p286, %p287
      %s290 = sadd.s32 %s289, 1
      %p293 = scmp.eq.s32.totalorder %s24, 1
      %p294 = scmp.ne.s32.totalorder %s289, %s291
      %p295 = scmp.eq.s32.totalorder %s24, 0
      %p296 = por %p294, %p295
      %p297 = scmp.ne.s32.totalorder %s289, %s291
      %p298 = scmp.eq.s32.totalorder %s29, 1
      %p299 = por %p297, %p298
      %p300 = scmp.ne.s32.totalorder %s291, %s292
      %p301 = scmp.eq.s32.totalorder %s29, 0
      %p302 = por %p300, %p301
      %p303 = scmp.ne.s32.totalorder %s291, %s292
      %p304 = scmp.eq.s32.totalorder %s30, 1
      %p305 = por %p303, %p304
      %p307 = scmp.ne.s32.totalorder %s292, %s306
      %p308 = scmp.eq.s32.totalorder %s30, 0
      %p309 = por %p307, %p308
      %s311 = sadd.s32 %s310, 1
      %p314 = scmp.eq.s32.totalorder %s24, 1
      %p315 = scmp.ne.s32.totalorder %s310, %s312
      %p316 = scmp.eq.s32.totalorder %s24, 0
      %p317 = por %p315, %p316
      %p318 = scmp.ne.s32.totalorder %s310, %s312
      %p319 = scmp.eq.s32.totalorder %s29, 1
      %p320 = por %p318, %p319
      %p321 = scmp.ne.s32.totalorder %s312, %s313
      %p322 = scmp.eq.s32.totalorder %s29, 0
      %p323 = por %p321, %p322
      %p324 = scmp.ne.s32.totalorder %s312, %s313
      %p325 = scmp.eq.s32.totalorder %s30, 1
      %p326 = por %p324, %p325
      %p328 = scmp.ne.s32.totalorder %s313, %s327
      %p329 = scmp.eq.s32.totalorder %s30, 0
      %p330 = por %p328, %p329
      %s332 = sadd.s32 %s331, 1
      %p335 = scmp.eq.s32.totalorder %s24, 1
      %p336 = scmp.ne.s32.totalorder %s331, %s333
      %p337 = scmp.eq.s32.totalorder %s24, 0
      %p338 = por %p336, %p337
      %p339 = scmp.ne.s32.totalorder %s331, %s333
      %p340 = scmp.eq.s32.totalorder %s29, 1
      %p341 = por %p339, %p340
      %p342 = scmp.ne.s32.totalorder %s333, %s334
      %p343 = scmp.eq.s32.totalorder %s29, 0
      %p344 = por %p342, %p343
      %p345 = scmp.ne.s32.totalorder %s333, %s334
      %p346 = scmp.eq.s32.totalorder %s30, 1
      %p347 = por %p345, %p346
      %p349 = scmp.ne.s32.totalorder %s334, %s348
      %p350 = scmp.eq.s32.totalorder %s30, 0
      %p351 = por %p349, %p350
      %s352 = ssub.s32 %s24, %s31
      %p353 = scmp.eq.s32.totalorder %s352, 0
      %s355 = sadd.s32 %s354, 1
      %s356 = scalar_select %p353, %s354, %s355
      %p359 = pneg %p353
      %p360 = scmp.eq.s32.totalorder %s24, 1
      %p361 = por %p359, %p360
      %p362 = scmp.ne.s32.totalorder %s354, %s357
      %p363 = scmp.eq.s32.totalorder %s24, 0
      %p364 = por %p362, %p363
      %p365 = scmp.ne.s32.totalorder %s354, %s357
      %p366 = scmp.eq.s32.totalorder %s29, 1
      %p367 = por %p365, %p366
      %p368 = scmp.ne.s32.totalorder %s357, %s358
      %p369 = scmp.eq.s32.totalorder %s29, 0
      %p370 = por %p368, %p369
      %p371 = scmp.ne.s32.totalorder %s357, %s358
      %p372 = scmp.eq.s32.totalorder %s30, 1
      %p373 = por %p371, %p372
      %p375 = scmp.ne.s32.totalorder %s358, %s374
      %p376 = scmp.eq.s32.totalorder %s30, 0
      %p377 = por %p375, %p376
      %p378 = scmp.le.s32.totalorder 1, %s24
      %p379 = scmp.lt.s32.totalorder %s24, 3
      %p380 = pnand %p378, %p379
      %p381 = pneg %p380
      // Predicated region
      $region9: #{network_forward.1} parent=5 // pred_check
        _
      $region10: #{network_forward.1} parent=5 // pred_check_branch
        %383 = sbr.rel (%p380) target = $region12
      $region11: #{network_forward.1} parent=5 // pred_region
        %s384 = ssub.s32 %s24, 1
        // Predicated region
        $region13: #{network_forward.1} parent=11 // pred_check
          %p385 = pneg %p71
        $region14: #{network_forward.1} parent=11 // pred_check_branch
          %387 = sbr.rel (%p385) target = $region16
        $region15: #{network_forward.1} parent=11 // pred_region
          _
        $region16: #{network_forward.1} parent=11 // pred_fallthru
          _
        // Predicated region
        $region17: #{network_forward.1} parent=11 // pred_check
          %p388 = pneg %p92
        $region18: #{network_forward.1} parent=11 // pred_check_branch
          %390 = sbr.rel (%p388) target = $region20
        $region19: #{network_forward.1} parent=11 // pred_region
          _
        $region20: #{network_forward.1} parent=11 // pred_fallthru
          _
        // Predicated region
        $region21: #{network_forward.1} parent=11 // pred_check
          %p391 = pneg %p113
        $region22: #{network_forward.1} parent=11 // pred_check_branch
          %393 = sbr.rel (%p391) target = $region24
        $region23: #{network_forward.1} parent=11 // pred_region
          _
        $region24: #{network_forward.1} parent=11 // pred_fallthru
          _
        // Predicated region
        $region25: #{network_forward.1} parent=11 // pred_check
          %p394 = pneg %p134
        $region26: #{network_forward.1} parent=11 // pred_check_branch
          %396 = sbr.rel (%p394) target = $region28
        $region27: #{network_forward.1} parent=11 // pred_region
          _
        $region28: #{network_forward.1} parent=11 // pred_fallthru
          _
        // Predicated region
        $region29: #{network_forward.1} parent=11 // pred_check
          %p397 = pneg %p155
        $region30: #{network_forward.1} parent=11 // pred_check_branch
          %399 = sbr.rel (%p397) target = $region32
        $region31: #{network_forward.1} parent=11 // pred_region
          _
        $region32: #{network_forward.1} parent=11 // pred_fallthru
          _
        // Predicated region
        $region33: #{network_forward.1} parent=11 // pred_check
          %p400 = pneg %p176
        $region34: #{network_forward.1} parent=11 // pred_check_branch
          %402 = sbr.rel (%p400) target = $region36
        $region35: #{network_forward.1} parent=11 // pred_region
          _
        $region36: #{network_forward.1} parent=11 // pred_fallthru
          _
        // Predicated region
        $region37: #{network_forward.1} parent=11 // pred_check
          %p403 = pneg %p197
        $region38: #{network_forward.1} parent=11 // pred_check_branch
          %405 = sbr.rel (%p403) target = $region40
        $region39: #{network_forward.1} parent=11 // pred_region
          _
        $region40: #{network_forward.1} parent=11 // pred_fallthru
          _
        // Predicated region
        $region41: #{network_forward.1} parent=11 // pred_check
          %p406 = pneg %p218
        $region42: #{network_forward.1} parent=11 // pred_check_branch
          %408 = sbr.rel (%p406) target = $region44
        $region43: #{network_forward.1} parent=11 // pred_region
          _
        $region44: #{network_forward.1} parent=11 // pred_fallthru
          _
        // Predicated region
        $region45: #{network_forward.1} parent=11 // pred_check
          %p409 = pneg %p239
        $region46: #{network_forward.1} parent=11 // pred_check_branch
          %411 = sbr.rel (%p409) target = $region48
        $region47: #{network_forward.1} parent=11 // pred_region
          _
        $region48: #{network_forward.1} parent=11 // pred_fallthru
          _
        // Predicated region
        $region49: #{network_forward.1} parent=11 // pred_check
          %p412 = pneg %p260
        $region50: #{network_forward.1} parent=11 // pred_check_branch
          %414 = sbr.rel (%p412) target = $region52
        $region51: #{network_forward.1} parent=11 // pred_region
          _
        $region52: #{network_forward.1} parent=11 // pred_fallthru
          _
        // Predicated region
        $region53: #{network_forward.1} parent=11 // pred_check
          %p415 = pneg %p281
        $region54: #{network_forward.1} parent=11 // pred_check_branch
          %417 = sbr.rel (%p415) target = $region56
        $region55: #{network_forward.1} parent=11 // pred_region
          _
        $region56: #{network_forward.1} parent=11 // pred_fallthru
          _
        // Predicated region
        $region57: #{network_forward.1} parent=11 // pred_check
          %p418 = pneg %p302
        $region58: #{network_forward.1} parent=11 // pred_check_branch
          %420 = sbr.rel (%p418) target = $region60
        $region59: #{network_forward.1} parent=11 // pred_region
          _
        $region60: #{network_forward.1} parent=11 // pred_fallthru
          _
        // Predicated region
        $region61: #{network_forward.1} parent=11 // pred_check
          %p421 = pneg %p323
        $region62: #{network_forward.1} parent=11 // pred_check_branch
          %423 = sbr.rel (%p421) target = $region64
        $region63: #{network_forward.1} parent=11 // pred_region
          _
        $region64: #{network_forward.1} parent=11 // pred_fallthru
          _
        // Predicated region
        $region65: #{network_forward.1} parent=11 // pred_check
          %p424 = pneg %p344
        $region66: #{network_forward.1} parent=11 // pred_check_branch
          %426 = sbr.rel (%p424) target = $region68
        $region67: #{network_forward.1} parent=11 // pred_region
          _
        $region68: #{network_forward.1} parent=11 // pred_fallthru
          _
      $region12: #{network_forward.1} parent=5 // pred_fallthru
        _
      %p427 = scmp.lt.s32.totalorder %s24, 2
      // Predicated region
      $region69: #{network_forward.1} parent=5 // pred_check
        %p428 = pneg %p427
      $region70: #{network_forward.1} parent=5 // pred_check_branch
        %430 = sbr.rel (%p428) target = $region72
      $region71: #{network_forward.1} parent=5 // pred_region
        // Predicated region
        $region73: #{network_forward.1} parent=71 // pred_check
          %p431 = pneg %p44
        $region74: #{network_forward.1} parent=71 // pred_check_branch
          %433 = sbr.rel (%p431) target = $region76
        $region75: #{network_forward.1} parent=71 // pred_region
          %s434 = smul.u32 32, %s24
          %p435 = scmp.lt.s32.totalorder %s434, 63
          %s436 = scalar_select %p435, %s434, 63
          %s437 = smul.addr %s436, 8
          %s438 = scalar_lea.vmem %s0, %s437
          %s439 = smul.u32 32, %s24
        $region76: #{network_forward.1} parent=71 // pred_fallthru
          _
      $region72: #{network_forward.1} parent=5 // pred_fallthru
        _
      %p440 = scmp.le.s32.totalorder 1, %s24
      %p441 = scmp.lt.s32.totalorder %s24, 3
      %p442 = pnand %p440, %p441
      %p443 = pneg %p442
      // Predicated region
      $region77: #{network_forward.1} parent=5 // pred_check
        _
      $region78: #{network_forward.1} parent=5 // pred_check_branch
        %445 = sbr.rel (%p442) target = $region80
      $region79: #{network_forward.1} parent=5 // pred_region
        %s446 = ssub.s32 %s24, 1
        %s447 = smul.u32 32, %s29
        %p448 = scmp.lt.s32.totalorder %s447, 63
        %s449 = scalar_select %p448, %s447, 63
        %s450 = smul.addr %s449, 8
        %s451 = scalar_lea.vmem %s0, %s450
        %p452 = pneg %p50
        %p453 = pneg %p47
        %p454 = pneg %p71
        %p455 = pneg %p68
        %p456 = pneg %p92
        %p457 = pneg %p89
        %p458 = pneg %p113
        %p459 = pneg %p110
        %p460 = pneg %p134
        %p461 = pneg %p131
        %p462 = pneg %p155
        %p463 = pneg %p152
        %p464 = pneg %p176
        %p465 = pneg %p173
        %p466 = pneg %p197
        %p467 = pneg %p194
        %p468 = pneg %p218
        %p469 = pneg %p215
        %p470 = pneg %p239
        %p471 = pneg %p236
        %p472 = pneg %p260
        %p473 = pneg %p257
        %p474 = pneg %p281
        %p475 = pneg %p278
        %p476 = pneg %p302
        %p477 = pneg %p299
        %p478 = pneg %p323
        %p479 = pneg %p320
        %p480 = pneg %p344
        %p481 = pneg %p341
        %p482 = pneg %p370
        %p483 = pneg %p367
        %s484 = sand.u32 %s357, 1
        %s485 = scalar_lea.sflag [#allocation4], %s484
        %s486 = sand.u32 %s357, 1
        %s487 = smul.addr %s486, 8
        %s488 = scalar_lea.vmem [#allocation3], %s487
        %s489 = smul.u32 32, %s29
        %p490 = scmp.lt.s32.totalorder %s489, 63
        %s491 = scalar_select %p490, %s489, 63
        %s492 = smul.addr %s491, 8
        %s493 = scalar_lea.vmem %s0, %s492
        %s494 = smul.u32 32, %s29
        %v496 = vld [vmem:[%s2] sm:$0x3]
        %v498 = vlaneseq
        %v499 = vshrl.u32 %v498, 7
        %v500 = vsub.s32 0, %v499
        %v501 = vrot.slane %v496, %v500
        %v502 = vlaneseq
        %v503 = vshrl.u32 %v502, 7
        %v504 = vsub.s32 1, %v503
        %v505 = vrot.slane %v496, %v504
        %v508 = vld [vmem:[%s493] sm:$0xff]
        %v509 = vld [vmem:[%s493 + $0x8] sm:$0xff]
        %v510 = vld [vmem:[%s493 + $0x10] sm:$0xff]
        %v511 = vld [vmem:[%s493 + $0x18] sm:$0xff]
        %v512 = vld [vmem:[%s493 + $0x20] sm:$0xff]
        %v513 = vld [vmem:[%s493 + $0x28] sm:$0xff]
        %v514 = vld [vmem:[%s493 + $0x30] sm:$0xff]
        %v515 = vld [vmem:[%s493 + $0x38] sm:$0xff]
        %v516 = vld [vmem:[%s493 + $0x40] sm:$0xff]
        %v517 = vld [vmem:[%s493 + $0x48] sm:$0xff]
        %v518 = vld [vmem:[%s493 + $0x50] sm:$0xff]
        %v519 = vld [vmem:[%s493 + $0x58] sm:$0xff]
        %v520 = vld [vmem:[%s493 + $0x60] sm:$0xff]
        %v521 = vld [vmem:[%s493 + $0x68] sm:$0xff]
        %v522 = vld [vmem:[%s493 + $0x70] sm:$0xff]
        %v523 = vld [vmem:[%s493 + $0x78] sm:$0xff]
        %v524 = vld [vmem:[%s493 + $0x80] sm:$0xff]
        %v525 = vld [vmem:[%s493 + $0x88] sm:$0xff]
        %v526 = vld [vmem:[%s493 + $0x90] sm:$0xff]
        %v527 = vld [vmem:[%s493 + $0x98] sm:$0xff]
        %v528 = vld [vmem:[%s493 + $0xa0] sm:$0xff]
        %v529 = vld [vmem:[%s493 + $0xa8] sm:$0xff]
        %v530 = vld [vmem:[%s493 + $0xb0] sm:$0xff]
        %v531 = vld [vmem:[%s493 + $0xb8] sm:$0xff]
        %v532 = vld [vmem:[%s493 + $0xc0] sm:$0xff]
        %v533 = vld [vmem:[%s493 + $0xc8] sm:$0xff]
        %v534 = vld [vmem:[%s493 + $0xd0] sm:$0xff]
        %v535 = vld [vmem:[%s493 + $0xd8] sm:$0xff]
        %v536 = vld [vmem:[%s493 + $0xe0] sm:$0xff]
        %v537 = vld [vmem:[%s493 + $0xe8] sm:$0xff]
        %v538 = vld [vmem:[%s493 + $0xf0] sm:$0xff]
        %v539 = vld [vmem:[%s493 + $0xf8] sm:$0xf]
        %v540 = vpack.c.bf16 %v509, %v508
        %v541 = vpack.c.bf16 %v511, %v510
        %v542 = vpack.c.bf16 %v513, %v512
        %v543 = vpack.c.bf16 %v515, %v514
        %v544 = vpack.c.bf16 %v517, %v516
        %v545 = vpack.c.bf16 %v519, %v518
        %v546 = vpack.c.bf16 %v521, %v520
        %v547 = vpack.c.bf16 %v523, %v522
        %v548 = vpack.c.bf16 %v525, %v524
        %v549 = vpack.c.bf16 %v527, %v526
        %v550 = vpack.c.bf16 %v529, %v528
        %v551 = vpack.c.bf16 %v531, %v530
        %v552 = vpack.c.bf16 %v533, %v532
        %v553 = vpack.c.bf16 %v535, %v534
        %v554 = vpack.c.bf16 %v537, %v536
        %v555 = vpack.c.bf16 %v539, %v538
        %v556 = vld [vmem:[%s1] sm:$0xff]
        %v557 = vld [vmem:[%s1 + $0x8] sm:$0xff]
        %v558 = vld [vmem:[%s1 + $0x10] sm:$0xff]
        %v559 = vld [vmem:[%s1 + $0x18] sm:$0xff]
        %v560 = vld [vmem:[%s1 + $0x20] sm:$0xff]
        %v561 = vld [vmem:[%s1 + $0x28] sm:$0xff]
        %v562 = vld [vmem:[%s1 + $0x30] sm:$0xff]
        %v563 = vld [vmem:[%s1 + $0x38] sm:$0xff]
        %v564 = vld [vmem:[%s1 + $0x40] sm:$0xff]
        %v565 = vld [vmem:[%s1 + $0x48] sm:$0xff]
        %v566 = vld [vmem:[%s1 + $0x50] sm:$0xff]
        %v567 = vld [vmem:[%s1 + $0x58] sm:$0xff]
        %v568 = vld [vmem:[%s1 + $0x60] sm:$0xff]
        %v569 = vld [vmem:[%s1 + $0x68] sm:$0xff]
        %v570 = vld [vmem:[%s1 + $0x70] sm:$0xff]
        %v571 = vld [vmem:[%s1 + $0x78] sm:$0xff]
        %v588 = vunpack.c.l.b16 %v556
        %v589 = vunpack.c.h.b16 %v556
        %v590 = vunpack.c.l.b16 %v557
        %v591 = vunpack.c.h.b16 %v557
        %v592 = vunpack.c.l.b16 %v558
        %v593 = vunpack.c.h.b16 %v558
        %v594 = vunpack.c.l.b16 %v559
        %v595 = vunpack.c.h.b16 %v559
        %v596 = vunpack.c.l.b16 %v560
        %v597 = vunpack.c.h.b16 %v560
        %v598 = vunpack.c.l.b16 %v561
        %v599 = vunpack.c.h.b16 %v561
        %v600 = vunpack.c.l.b16 %v562
        %v601 = vunpack.c.h.b16 %v562
        %v602 = vunpack.c.l.b16 %v563
        %v603 = vunpack.c.h.b16 %v563
        %v604 = vunpack.c.l.b16 %v564
        %v605 = vunpack.c.h.b16 %v564
        %v606 = vunpack.c.l.b16 %v565
        %v607 = vunpack.c.h.b16 %v565
        %v608 = vunpack.c.l.b16 %v566
        %v609 = vunpack.c.h.b16 %v566
        %v610 = vunpack.c.l.b16 %v567
        %v611 = vunpack.c.h.b16 %v567
        %v612 = vunpack.c.l.b16 %v568
        %v613 = vunpack.c.h.b16 %v568
        %v614 = vunpack.c.l.b16 %v569
        %v615 = vunpack.c.h.b16 %v569
        %v616 = vunpack.c.l.b16 %v570
        %v617 = vunpack.c.h.b16 %v570
        %v618 = vunpack.c.l.b16 %v571
        %v619 = vunpack.c.h.b16 %v571
        %v620 = vpack.c.b16 %v590, %v588
        %v621 = vpack.c.b16 %v591, %v589
        %v622 = vpack.c.b16 %v594, %v592
        %v623 = vpack.c.b16 %v595, %v593
        %v624 = vpack.c.b16 %v598, %v596
        %v625 = vpack.c.b16 %v599, %v597
        %v626 = vpack.c.b16 %v602, %v600
        %v627 = vpack.c.b16 %v603, %v601
        %v628 = vpack.c.b16 %v606, %v604
        %v629 = vpack.c.b16 %v607, %v605
        %v630 = vpack.c.b16 %v610, %v608
        %v631 = vpack.c.b16 %v611, %v609
        %v632 = vpack.c.b16 %v614, %v612
        %v633 = vpack.c.b16 %v615, %v613
        %v634 = vpack.c.b16 %v618, %v616
        %v635 = vpack.c.b16 %v619, %v617
        %652 = vmatprep.subr.bf16.mxu0 %v635
        %653 = vmatpush1.bf16.msra.mxu0 %v634
        %654 = vmatprep.subr.bf16.mxu0 %v633
        %655 = vmatpush1.bf16.msra.mxu0 %v632
        %656 = vmatprep.subr.bf16.mxu0 %v631
        %657 = vmatpush1.bf16.msra.mxu0 %v630
        %658 = vmatprep.subr.bf16.mxu0 %v629
        %659 = vmatpush1.bf16.msra.mxu0 %v628
        %660 = vmatprep.subr.bf16.mxu0 %v627
        %661 = vmatpush1.bf16.msra.mxu0 %v626
        %662 = vmatprep.subr.bf16.mxu0 %v625
        %663 = vmatpush1.bf16.msra.mxu0 %v624
        %664 = vmatprep.subr.bf16.mxu0 %v623
        %665 = vmatpush1.bf16.msra.mxu0 %v622
        %666 = vmatprep.subr.bf16.mxu0 %v621
        %667 = vmatpush1.bf16.msra.mxu0 %v620
        %668 = vmatprep.subr.bf16.mxu0 0
        %669 = vmatpush2.bf16.msra.mxu0 0
        %670 = vmatprep.subr.bf16.mxu0 0
        %671 = vmatpush2.bf16.msra.mxu0 0
        %672 = vmatprep.subr.bf16.mxu0 0
        %673 = vmatpush2.bf16.msra.mxu0 0
        %674 = vmatprep.subr.bf16.mxu0 0
        %675 = vmatpush2.bf16.msra.mxu0 0
        %676 = vmatprep.subr.bf16.mxu0 0
        %677 = vmatpush2.bf16.msra.mxu0 0
        %678 = vmatprep.subr.bf16.mxu0 0
        %679 = vmatpush2.bf16.msra.mxu0 0
        %680 = vmatprep.subr.bf16.mxu0 0
        %681 = vmatpush2.bf16.msra.mxu0 0
        %682 = vmatprep.subr.bf16.mxu0 0
        %683 = vmatpush2.bf16.msra.mxu0 0
        %684 = vmatprep.mubr.bf16.mxu0 0
        %685 = vmatmul.mubr.bf16.gmra.mxu0 %v540
        %v686 = vpop.f32.mrf.mxu0
        %v687 = vadd.f32 0.0, %v686
        %v688 = vpop.f32.mrf.mxu0
        %v689 = vadd.f32 0.0, %v688
        %v690 = vpop.f32.mrf.mxu0
        %v691 = vadd.f32 0.0, %v690
        %v692 = vpop.f32.mrf.mxu0
        %v693 = vadd.f32 0.0, %v692
        %694 = vmatprep.mubr.bf16.mxu0 0
        %695 = vmatmul.mubr.bf16.gmra.mxu0 %v541
        %v696 = vpop.f32.mrf.mxu0
        %v697 = vadd.f32 0.0, %v696
        %v698 = vpop.f32.mrf.mxu0
        %v699 = vadd.f32 0.0, %v698
        %v700 = vpop.f32.mrf.mxu0
        %v701 = vadd.f32 0.0, %v700
        %v702 = vpop.f32.mrf.mxu0
        %v703 = vadd.f32 0.0, %v702
        %704 = vmatprep.mubr.bf16.mxu0 0
        %705 = vmatmul.mubr.bf16.gmra.mxu0 %v542
        %v706 = vpop.f32.mrf.mxu0
        %v707 = vadd.f32 0.0, %v706
        %v708 = vpop.f32.mrf.mxu0
        %v709 = vadd.f32 0.0, %v708
        %v710 = vpop.f32.mrf.mxu0
        %v711 = vadd.f32 0.0, %v710
        %v712 = vpop.f32.mrf.mxu0
        %v713 = vadd.f32 0.0, %v712
        %714 = vmatprep.mubr.bf16.mxu0 0
        %715 = vmatmul.mubr.bf16.gmra.mxu0 %v543
        %v716 = vpop.f32.mrf.mxu0
        %v717 = vadd.f32 0.0, %v716
        %v718 = vpop.f32.mrf.mxu0
        %v719 = vadd.f32 0.0, %v718
        %v720 = vpop.f32.mrf.mxu0
        %v721 = vadd.f32 0.0, %v720
        %v722 = vpop.f32.mrf.mxu0
        %v723 = vadd.f32 0.0, %v722
        %724 = vmatprep.mubr.bf16.mxu0 0
        %725 = vmatmul.mubr.bf16.gmra.mxu0 %v544
        %v726 = vpop.f32.mrf.mxu0
        %v727 = vadd.f32 0.0, %v726
        %v728 = vpop.f32.mrf.mxu0
        %v729 = vadd.f32 0.0, %v728
        %v730 = vpop.f32.mrf.mxu0
        %v731 = vadd.f32 0.0, %v730
        %v732 = vpop.f32.mrf.mxu0
        %v733 = vadd.f32 0.0, %v732
        %734 = vmatprep.mubr.bf16.mxu0 0
        %735 = vmatmul.mubr.bf16.gmra.mxu0 %v545
        %v736 = vpop.f32.mrf.mxu0
        %v737 = vadd.f32 0.0, %v736
        %v738 = vpop.f32.mrf.mxu0
        %v739 = vadd.f32 0.0, %v738
        %v740 = vpop.f32.mrf.mxu0
        %v741 = vadd.f32 0.0, %v740
        %v742 = vpop.f32.mrf.mxu0
        %v743 = vadd.f32 0.0, %v742
        %744 = vmatprep.mubr.bf16.mxu0 0
        %745 = vmatmul.mubr.bf16.gmra.mxu0 %v546
        %v746 = vpop.f32.mrf.mxu0
        %v747 = vadd.f32 0.0, %v746
        %v748 = vpop.f32.mrf.mxu0
        %v749 = vadd.f32 0.0, %v748
        %v750 = vpop.f32.mrf.mxu0
        %v751 = vadd.f32 0.0, %v750
        %v752 = vpop.f32.mrf.mxu0
        %v753 = vadd.f32 0.0, %v752
        %754 = vmatprep.mubr.bf16.mxu0 0
        %755 = vmatmul.mubr.bf16.gmra.mxu0 %v547
        %v756 = vpop.f32.mrf.mxu0
        %v757 = vadd.f32 0.0, %v756
        %v758 = vpop.f32.mrf.mxu0
        %v759 = vadd.f32 0.0, %v758
        %v760 = vpop.f32.mrf.mxu0
        %v761 = vadd.f32 0.0, %v760
        %v762 = vpop.f32.mrf.mxu0
        %v763 = vadd.f32 0.0, %v762
        %764 = vmatprep.mubr.bf16.mxu0 0
        %765 = vmatmul.mubr.bf16.gmra.mxu0 %v548
        %v766 = vpop.f32.mrf.mxu0
        %v767 = vadd.f32 0.0, %v766
        %v768 = vpop.f32.mrf.mxu0
        %v769 = vadd.f32 0.0, %v768
        %v770 = vpop.f32.mrf.mxu0
        %v771 = vadd.f32 0.0, %v770
        %v772 = vpop.f32.mrf.mxu0
        %v773 = vadd.f32 0.0, %v772
        %774 = vmatprep.mubr.bf16.mxu0 0
        %775 = vmatmul.mubr.bf16.gmra.mxu0 %v549
        %v776 = vpop.f32.mrf.mxu0
        %v777 = vadd.f32 0.0, %v776
        %v778 = vpop.f32.mrf.mxu0
        %v779 = vadd.f32 0.0, %v778
        %v780 = vpop.f32.mrf.mxu0
        %v781 = vadd.f32 0.0, %v780
        %v782 = vpop.f32.mrf.mxu0
        %v783 = vadd.f32 0.0, %v782
        %784 = vmatprep.mubr.bf16.mxu0 0
        %785 = vmatmul.mubr.bf16.gmra.mxu0 %v550
        %v786 = vpop.f32.mrf.mxu0
        %v787 = vadd.f32 0.0, %v786
        %v788 = vpop.f32.mrf.mxu0
        %v789 = vadd.f32 0.0, %v788
        %v790 = vpop.f32.mrf.mxu0
        %v791 = vadd.f32 0.0, %v790
        %v792 = vpop.f32.mrf.mxu0
        %v793 = vadd.f32 0.0, %v792
        %794 = vmatprep.mubr.bf16.mxu0 0
        %795 = vmatmul.mubr.bf16.gmra.mxu0 %v551
        %v796 = vpop.f32.mrf.mxu0
        %v797 = vadd.f32 0.0, %v796
        %v798 = vpop.f32.mrf.mxu0
        %v799 = vadd.f32 0.0, %v798
        %v800 = vpop.f32.mrf.mxu0
        %v801 = vadd.f32 0.0, %v800
        %v802 = vpop.f32.mrf.mxu0
        %v803 = vadd.f32 0.0, %v802
        %804 = vmatprep.mubr.bf16.mxu0 0
        %805 = vmatmul.mubr.bf16.gmra.mxu0 %v552
        %v806 = vpop.f32.mrf.mxu0
        %v807 = vadd.f32 0.0, %v806
        %v808 = vpop.f32.mrf.mxu0
        %v809 = vadd.f32 0.0, %v808
        %v810 = vpop.f32.mrf.mxu0
        %v811 = vadd.f32 0.0, %v810
        %v812 = vpop.f32.mrf.mxu0
        %v813 = vadd.f32 0.0, %v812
        %814 = vmatprep.mubr.bf16.mxu0 0
        %815 = vmatmul.mubr.bf16.gmra.mxu0 %v553
        %v816 = vpop.f32.mrf.mxu0
        %v817 = vadd.f32 0.0, %v816
        %v818 = vpop.f32.mrf.mxu0
        %v819 = vadd.f32 0.0, %v818
        %v820 = vpop.f32.mrf.mxu0
        %v821 = vadd.f32 0.0, %v820
        %v822 = vpop.f32.mrf.mxu0
        %v823 = vadd.f32 0.0, %v822
        %824 = vmatprep.mubr.bf16.mxu0 0
        %825 = vmatmul.mubr.bf16.gmra.mxu0 %v554
        %v826 = vpop.f32.mrf.mxu0
        %v827 = vadd.f32 0.0, %v826
        %v828 = vpop.f32.mrf.mxu0
        %v829 = vadd.f32 0.0, %v828
        %v830 = vpop.f32.mrf.mxu0
        %v831 = vadd.f32 0.0, %v830
        %v832 = vpop.f32.mrf.mxu0
        %v833 = vadd.f32 0.0, %v832
        %834 = vmatprep.mubr.bf16.mxu0 0
        %835 = vmatmul.mubr.bf16.gmra.mxu0 %v555
        %v836 = vpop.f32.mrf.mxu0
        %v837 = vadd.f32 0.0, %v836
        %v838 = vpop.f32.mrf.mxu0
        %v839 = vadd.f32 0.0, %v838
        %v840 = vpop.f32.mrf.mxu0
        %v841 = vadd.f32 0.0, %v840
        %v842 = vpop.f32.mrf.mxu0
        %v843 = vadd.f32 0.0, %v842
        %844 = vdwg.mxu0
        %v845 = vadd.f32 %v501, %v687
        %v846 = vadd.f32 %v505, %v689
        %v847 = vadd.f32 %v501, %v691
        %v848 = vadd.f32 %v505, %v693
        %v849 = vadd.f32 %v501, %v697
        %v850 = vadd.f32 %v505, %v699
        %v851 = vadd.f32 %v501, %v701
        %v852 = vadd.f32 %v505, %v703
        %v853 = vadd.f32 %v501, %v707
        %v854 = vadd.f32 %v505, %v709
        %v855 = vadd.f32 %v501, %v711
        %v856 = vadd.f32 %v505, %v713
        %v857 = vadd.f32 %v501, %v717
        %v858 = vadd.f32 %v505, %v719
        %v859 = vadd.f32 %v501, %v721
        %v860 = vadd.f32 %v505, %v723
        %v861 = vadd.f32 %v501, %v727
        %v862 = vadd.f32 %v505, %v729
        %v863 = vadd.f32 %v501, %v731
        %v864 = vadd.f32 %v505, %v733
        %v865 = vadd.f32 %v501, %v737
        %v866 = vadd.f32 %v505, %v739
        %v867 = vadd.f32 %v501, %v741
        %v868 = vadd.f32 %v505, %v743
        %v869 = vadd.f32 %v501, %v747
        %v870 = vadd.f32 %v505, %v749
        %v871 = vadd.f32 %v501, %v751
        %v872 = vadd.f32 %v505, %v753
        %v873 = vadd.f32 %v501, %v757
        %v874 = vadd.f32 %v505, %v759
        %v875 = vadd.f32 %v501, %v761
        %v876 = vadd.f32 %v505, %v763
        %v877 = vadd.f32 %v501, %v767
        %v878 = vadd.f32 %v505, %v769
        %v879 = vadd.f32 %v501, %v771
        %v880 = vadd.f32 %v505, %v773
        %v881 = vadd.f32 %v501, %v777
        %v882 = vadd.f32 %v505, %v779
        %v883 = vadd.f32 %v501, %v781
        %v884 = vadd.f32 %v505, %v783
        %v885 = vadd.f32 %v501, %v787
        %v886 = vadd.f32 %v505, %v789
        %v887 = vadd.f32 %v501, %v791
        %v888 = vadd.f32 %v505, %v793
        %v889 = vadd.f32 %v501, %v797
        %v890 = vadd.f32 %v505, %v799
        %v891 = vadd.f32 %v501, %v801
        %v892 = vadd.f32 %v505, %v803
        %v893 = vadd.f32 %v501, %v807
        %v894 = vadd.f32 %v505, %v809
        %v895 = vadd.f32 %v501, %v811
        %v896 = vadd.f32 %v505, %v813
        %v897 = vadd.f32 %v501, %v817
        %v898 = vadd.f32 %v505, %v819
        %v899 = vadd.f32 %v501, %v821
        %v900 = vadd.f32 %v505, %v823
        %v901 = vadd.f32 %v501, %v827
        %v902 = vadd.f32 %v505, %v829
        %v903 = vadd.f32 %v501, %v831
        %v904 = vadd.f32 %v505, %v833
        %v905 = vadd.f32 %v501, %v837
        %v906 = vadd.f32 %v505, %v839
        %v907 = vadd.f32 %v501, %v841
        %v908 = vadd.f32 %v505, %v843
        %v909 = vld [vmem:[%s493 + $0x1] sm:$0xff]
        %v910 = vld [vmem:[%s493 + $0x9] sm:$0xff]
        %v911 = vld [vmem:[%s493 + $0x11] sm:$0xff]
        %v912 = vld [vmem:[%s493 + $0x19] sm:$0xff]
        %v913 = vld [vmem:[%s493 + $0x21] sm:$0xff]
        %v914 = vld [vmem:[%s493 + $0x29] sm:$0xff]
        %v915 = vld [vmem:[%s493 + $0x31] sm:$0xff]
        %v916 = vld [vmem:[%s493 + $0x39] sm:$0xff]
        %v917 = vld [vmem:[%s493 + $0x41] sm:$0xff]
        %v918 = vld [vmem:[%s493 + $0x49] sm:$0xff]
        %v919 = vld [vmem:[%s493 + $0x51] sm:$0xff]
        %v920 = vld [vmem:[%s493 + $0x59] sm:$0xff]
        %v921 = vld [vmem:[%s493 + $0x61] sm:$0xff]
        %v922 = vld [vmem:[%s493 + $0x69] sm:$0xff]
        %v923 = vld [vmem:[%s493 + $0x71] sm:$0xff]
        %v924 = vld [vmem:[%s493 + $0x79] sm:$0xff]
        %v925 = vld [vmem:[%s493 + $0x81] sm:$0xff]
        %v926 = vld [vmem:[%s493 + $0x89] sm:$0xff]
        %v927 = vld [vmem:[%s493 + $0x91] sm:$0xff]
        %v928 = vld [vmem:[%s493 + $0x99] sm:$0xff]
        %v929 = vld [vmem:[%s493 + $0xa1] sm:$0xff]
        %v930 = vld [vmem:[%s493 + $0xa9] sm:$0xff]
        %v931 = vld [vmem:[%s493 + $0xb1] sm:$0xff]
        %v932 = vld [vmem:[%s493 + $0xb9] sm:$0xff]
        %v933 = vld [vmem:[%s493 + $0xc1] sm:$0xff]
        %v934 = vld [vmem:[%s493 + $0xc9] sm:$0xff]
        %v935 = vld [vmem:[%s493 + $0xd1] sm:$0xff]
        %v936 = vld [vmem:[%s493 + $0xd9] sm:$0xff]
        %v937 = vld [vmem:[%s493 + $0xe1] sm:$0xff]
        %v938 = vld [vmem:[%s493 + $0xe9] sm:$0xff]
        %v939 = vld [vmem:[%s493 + $0xf1] sm:$0xff]
        %v940 = vld [vmem:[%s493 + $0xf9] sm:$0xf]
        %v941 = vpack.c.bf16 %v910, %v909
        %v942 = vpack.c.bf16 %v912, %v911
        %v943 = vpack.c.bf16 %v914, %v913
        %v944 = vpack.c.bf16 %v916, %v915
        %v945 = vpack.c.bf16 %v918, %v917
        %v946 = vpack.c.bf16 %v920, %v919
        %v947 = vpack.c.bf16 %v922, %v921
        %v948 = vpack.c.bf16 %v924, %v923
        %v949 = vpack.c.bf16 %v926, %v925
        %v950 = vpack.c.bf16 %v928, %v927
        %v951 = vpack.c.bf16 %v930, %v929
        %v952 = vpack.c.bf16 %v932, %v931
        %v953 = vpack.c.bf16 %v934, %v933
        %v954 = vpack.c.bf16 %v936, %v935
        %v955 = vpack.c.bf16 %v938, %v937
        %v956 = vpack.c.bf16 %v940, %v939
        %s957 = scalar_lea.vmem %s1, 128
        %v958 = vld [vmem:[%s957] sm:$0xff]
        %v959 = vld [vmem:[%s957 + $0x8] sm:$0xff]
        %v960 = vld [vmem:[%s957 + $0x10] sm:$0xff]
        %v961 = vld [vmem:[%s957 + $0x18] sm:$0xff]
        %v962 = vld [vmem:[%s957 + $0x20] sm:$0xff]
        %v963 = vld [vmem:[%s957 + $0x28] sm:$0xff]
        %v964 = vld [vmem:[%s957 + $0x30] sm:$0xff]
        %v965 = vld [vmem:[%s957 + $0x38] sm:$0xff]
        %v966 = vld [vmem:[%s957 + $0x40] sm:$0xff]
        %v967 = vld [vmem:[%s957 + $0x48] sm:$0xff]
        %v968 = vld [vmem:[%s957 + $0x50] sm:$0xff]
        %v969 = vld [vmem:[%s957 + $0x58] sm:$0xff]
        %v970 = vld [vmem:[%s957 + $0x60] sm:$0xff]
        %v971 = vld [vmem:[%s957 + $0x68] sm:$0xff]
        %v972 = vld [vmem:[%s957 + $0x70] sm:$0xff]
        %v973 = vld [vmem:[%s957 + $0x78] sm:$0xff]
        %v990 = vunpack.c.l.b16 %v958
        %v991 = vunpack.c.h.b16 %v958
        %v992 = vunpack.c.l.b16 %v959
        %v993 = vunpack.c.h.b16 %v959
        %v994 = vunpack.c.l.b16 %v960
        %v995 = vunpack.c.h.b16 %v960
        %v996 = vunpack.c.l.b16 %v961
        %v997 = vunpack.c.h.b16 %v961
        %v998 = vunpack.c.l.b16 %v962
        %v999 = vunpack.c.h.b16 %v962
        %v1000 = vunpack.c.l.b16 %v963
        %v1001 = vunpack.c.h.b16 %v963
        %v1002 = vunpack.c.l.b16 %v964
        %v1003 = vunpack.c.h.b16 %v964
        %v1004 = vunpack.c.l.b16 %v965
        %v1005 = vunpack.c.h.b16 %v965
        %v1006 = vunpack.c.l.b16 %v966
        %v1007 = vunpack.c.h.b16 %v966
        %v1008 = vunpack.c.l.b16 %v967
        %v1009 = vunpack.c.h.b16 %v967
        %v1010 = vunpack.c.l.b16 %v968
        %v1011 = vunpack.c.h.b16 %v968
        %v1012 = vunpack.c.l.b16 %v969
        %v1013 = vunpack.c.h.b16 %v969
        %v1014 = vunpack.c.l.b16 %v970
        %v1015 = vunpack.c.h.b16 %v970
        %v1016 = vunpack.c.l.b16 %v971
        %v1017 = vunpack.c.h.b16 %v971
        %v1018 = vunpack.c.l.b16 %v972
        %v1019 = vunpack.c.h.b16 %v972
        %v1020 = vunpack.c.l.b16 %v973
        %v1021 = vunpack.c.h.b16 %v973
        %v1022 = vpack.c.b16 %v992, %v990
        %v1023 = vpack.c.b16 %v993, %v991
        %v1024 = vpack.c.b16 %v996, %v994
        %v1025 = vpack.c.b16 %v997, %v995
        %v1026 = vpack.c.b16 %v1000, %v998
        %v1027 = vpack.c.b16 %v1001, %v999
        %v1028 = vpack.c.b16 %v1004, %v1002
        %v1029 = vpack.c.b16 %v1005, %v1003
        %v1030 = vpack.c.b16 %v1008, %v1006
        %v1031 = vpack.c.b16 %v1009, %v1007
        %v1032 = vpack.c.b16 %v1012, %v1010
        %v1033 = vpack.c.b16 %v1013, %v1011
        %v1034 = vpack.c.b16 %v1016, %v1014
        %v1035 = vpack.c.b16 %v1017, %v1015
        %v1036 = vpack.c.b16 %v1020, %v1018
        %v1037 = vpack.c.b16 %v1021, %v1019
        %1054 = vmatprep.subr.bf16.mxu0 %v1037
        %1055 = vmatpush1.bf16.msra.mxu0 %v1036
        %1056 = vmatprep.subr.bf16.mxu0 %v1035
        %1057 = vmatpush1.bf16.msra.mxu0 %v1034
        %1058 = vmatprep.subr.bf16.mxu0 %v1033
        %1059 = vmatpush1.bf16.msra.mxu0 %v1032
        %1060 = vmatprep.subr.bf16.mxu0 %v1031
        %1061 = vmatpush1.bf16.msra.mxu0 %v1030
        %1062 = vmatprep.subr.bf16.mxu0 %v1029
        %1063 = vmatpush1.bf16.msra.mxu0 %v1028
        %1064 = vmatprep.subr.bf16.mxu0 %v1027
        %1065 = vmatpush1.bf16.msra.mxu0 %v1026
        %1066 = vmatprep.subr.bf16.mxu0 %v1025
        %1067 = vmatpush1.bf16.msra.mxu0 %v1024
        %1068 = vmatprep.subr.bf16.mxu0 %v1023
        %1069 = vmatpush1.bf16.msra.mxu0 %v1022
        %1070 = vmatprep.subr.bf16.mxu0 0
        %1071 = vmatpush2.bf16.msra.mxu0 0
        %1072 = vmatprep.subr.bf16.mxu0 0
        %1073 = vmatpush2.bf16.msra.mxu0 0
        %1074 = vmatprep.subr.bf16.mxu0 0
        %1075 = vmatpush2.bf16.msra.mxu0 0
        %1076 = vmatprep.subr.bf16.mxu0 0
        %1077 = vmatpush2.bf16.msra.mxu0 0
        %1078 = vmatprep.subr.bf16.mxu0 0
        %1079 = vmatpush2.bf16.msra.mxu0 0
        %1080 = vmatprep.subr.bf16.mxu0 0
        %1081 = vmatpush2.bf16.msra.mxu0 0
        %1082 = vmatprep.subr.bf16.mxu0 0
        %1083 = vmatpush2.bf16.msra.mxu0 0
        %1084 = vmatprep.subr.bf16.mxu0 0
        %1085 = vmatpush2.bf16.msra.mxu0 0
        %1086 = vmatprep.mubr.bf16.mxu0 0
        %1087 = vmatmul.mubr.bf16.gmra.mxu0 %v941
        %v1088 = vpop.f32.mrf.mxu0
        %v1089 = vadd.f32 0.0, %v1088
        %v1090 = vpop.f32.mrf.mxu0
        %v1091 = vadd.f32 0.0, %v1090
        %v1092 = vpop.f32.mrf.mxu0
        %v1093 = vadd.f32 0.0, %v1092
        %v1094 = vpop.f32.mrf.mxu0
        %v1095 = vadd.f32 0.0, %v1094
        %1096 = vmatprep.mubr.bf16.mxu0 0
        %1097 = vmatmul.mubr.bf16.gmra.mxu0 %v942
        %v1098 = vpop.f32.mrf.mxu0
        %v1099 = vadd.f32 0.0, %v1098
        %v1100 = vpop.f32.mrf.mxu0
        %v1101 = vadd.f32 0.0, %v1100
        %v1102 = vpop.f32.mrf.mxu0
        %v1103 = vadd.f32 0.0, %v1102
        %v1104 = vpop.f32.mrf.mxu0
        %v1105 = vadd.f32 0.0, %v1104
        %1106 = vmatprep.mubr.bf16.mxu0 0
        %1107 = vmatmul.mubr.bf16.gmra.mxu0 %v943
        %v1108 = vpop.f32.mrf.mxu0
        %v1109 = vadd.f32 0.0, %v1108
        %v1110 = vpop.f32.mrf.mxu0
        %v1111 = vadd.f32 0.0, %v1110
        %v1112 = vpop.f32.mrf.mxu0
        %v1113 = vadd.f32 0.0, %v1112
        %v1114 = vpop.f32.mrf.mxu0
        %v1115 = vadd.f32 0.0, %v1114
        %1116 = vmatprep.mubr.bf16.mxu0 0
        %1117 = vmatmul.mubr.bf16.gmra.mxu0 %v944
        %v1118 = vpop.f32.mrf.mxu0
        %v1119 = vadd.f32 0.0, %v1118
        %v1120 = vpop.f32.mrf.mxu0
        %v1121 = vadd.f32 0.0, %v1120
        %v1122 = vpop.f32.mrf.mxu0
        %v1123 = vadd.f32 0.0, %v1122
        %v1124 = vpop.f32.mrf.mxu0
        %v1125 = vadd.f32 0.0, %v1124
        %1126 = vmatprep.mubr.bf16.mxu0 0
        %1127 = vmatmul.mubr.bf16.gmra.mxu0 %v945
        %v1128 = vpop.f32.mrf.mxu0
        %v1129 = vadd.f32 0.0, %v1128
        %v1130 = vpop.f32.mrf.mxu0
        %v1131 = vadd.f32 0.0, %v1130
        %v1132 = vpop.f32.mrf.mxu0
        %v1133 = vadd.f32 0.0, %v1132
        %v1134 = vpop.f32.mrf.mxu0
        %v1135 = vadd.f32 0.0, %v1134
        %1136 = vmatprep.mubr.bf16.mxu0 0
        %1137 = vmatmul.mubr.bf16.gmra.mxu0 %v946
        %v1138 = vpop.f32.mrf.mxu0
        %v1139 = vadd.f32 0.0, %v1138
        %v1140 = vpop.f32.mrf.mxu0
        %v1141 = vadd.f32 0.0, %v1140
        %v1142 = vpop.f32.mrf.mxu0
        %v1143 = vadd.f32 0.0, %v1142
        %v1144 = vpop.f32.mrf.mxu0
        %v1145 = vadd.f32 0.0, %v1144
        %1146 = vmatprep.mubr.bf16.mxu0 0
        %1147 = vmatmul.mubr.bf16.gmra.mxu0 %v947
        %v1148 = vpop.f32.mrf.mxu0
        %v1149 = vadd.f32 0.0, %v1148
        %v1150 = vpop.f32.mrf.mxu0
        %v1151 = vadd.f32 0.0, %v1150
        %v1152 = vpop.f32.mrf.mxu0
        %v1153 = vadd.f32 0.0, %v1152
        %v1154 = vpop.f32.mrf.mxu0
        %v1155 = vadd.f32 0.0, %v1154
        %1156 = vmatprep.mubr.bf16.mxu0 0
        %1157 = vmatmul.mubr.bf16.gmra.mxu0 %v948
        %v1158 = vpop.f32.mrf.mxu0
        %v1159 = vadd.f32 0.0, %v1158
        %v1160 = vpop.f32.mrf.mxu0
        %v1161 = vadd.f32 0.0, %v1160
        %v1162 = vpop.f32.mrf.mxu0
        %v1163 = vadd.f32 0.0, %v1162
        %v1164 = vpop.f32.mrf.mxu0
        %v1165 = vadd.f32 0.0, %v1164
        %1166 = vmatprep.mubr.bf16.mxu0 0
        %1167 = vmatmul.mubr.bf16.gmra.mxu0 %v949
        %v1168 = vpop.f32.mrf.mxu0
        %v1169 = vadd.f32 0.0, %v1168
        %v1170 = vpop.f32.mrf.mxu0
        %v1171 = vadd.f32 0.0, %v1170
        %v1172 = vpop.f32.mrf.mxu0
        %v1173 = vadd.f32 0.0, %v1172
        %v1174 = vpop.f32.mrf.mxu0
        %v1175 = vadd.f32 0.0, %v1174
        %1176 = vmatprep.mubr.bf16.mxu0 0
        %1177 = vmatmul.mubr.bf16.gmra.mxu0 %v950
        %v1178 = vpop.f32.mrf.mxu0
        %v1179 = vadd.f32 0.0, %v1178
        %v1180 = vpop.f32.mrf.mxu0
        %v1181 = vadd.f32 0.0, %v1180
        %v1182 = vpop.f32.mrf.mxu0
        %v1183 = vadd.f32 0.0, %v1182
        %v1184 = vpop.f32.mrf.mxu0
        %v1185 = vadd.f32 0.0, %v1184
        %1186 = vmatprep.mubr.bf16.mxu0 0
        %1187 = vmatmul.mubr.bf16.gmra.mxu0 %v951
        %v1188 = vpop.f32.mrf.mxu0
        %v1189 = vadd.f32 0.0, %v1188
        %v1190 = vpop.f32.mrf.mxu0
        %v1191 = vadd.f32 0.0, %v1190
        %v1192 = vpop.f32.mrf.mxu0
        %v1193 = vadd.f32 0.0, %v1192
        %v1194 = vpop.f32.mrf.mxu0
        %v1195 = vadd.f32 0.0, %v1194
        %1196 = vmatprep.mubr.bf16.mxu0 0
        %1197 = vmatmul.mubr.bf16.gmra.mxu0 %v952
        %v1198 = vpop.f32.mrf.mxu0
        %v1199 = vadd.f32 0.0, %v1198
        %v1200 = vpop.f32.mrf.mxu0
        %v1201 = vadd.f32 0.0, %v1200
        %v1202 = vpop.f32.mrf.mxu0
        %v1203 = vadd.f32 0.0, %v1202
        %v1204 = vpop.f32.mrf.mxu0
        %v1205 = vadd.f32 0.0, %v1204
        %1206 = vmatprep.mubr.bf16.mxu0 0
        %1207 = vmatmul.mubr.bf16.gmra.mxu0 %v953
        %v1208 = vpop.f32.mrf.mxu0
        %v1209 = vadd.f32 0.0, %v1208
        %v1210 = vpop.f32.mrf.mxu0
        %v1211 = vadd.f32 0.0, %v1210
        %v1212 = vpop.f32.mrf.mxu0
        %v1213 = vadd.f32 0.0, %v1212
        %v1214 = vpop.f32.mrf.mxu0
        %v1215 = vadd.f32 0.0, %v1214
        %1216 = vmatprep.mubr.bf16.mxu0 0
        %1217 = vmatmul.mubr.bf16.gmra.mxu0 %v954
        %v1218 = vpop.f32.mrf.mxu0
        %v1219 = vadd.f32 0.0, %v1218
        %v1220 = vpop.f32.mrf.mxu0
        %v1221 = vadd.f32 0.0, %v1220
        %v1222 = vpop.f32.mrf.mxu0
        %v1223 = vadd.f32 0.0, %v1222
        %v1224 = vpop.f32.mrf.mxu0
        %v1225 = vadd.f32 0.0, %v1224
        %1226 = vmatprep.mubr.bf16.mxu0 0
        %1227 = vmatmul.mubr.bf16.gmra.mxu0 %v955
        %v1228 = vpop.f32.mrf.mxu0
        %v1229 = vadd.f32 0.0, %v1228
        %v1230 = vpop.f32.mrf.mxu0
        %v1231 = vadd.f32 0.0, %v1230
        %v1232 = vpop.f32.mrf.mxu0
        %v1233 = vadd.f32 0.0, %v1232
        %v1234 = vpop.f32.mrf.mxu0
        %v1235 = vadd.f32 0.0, %v1234
        %1236 = vmatprep.mubr.bf16.mxu0 0
        %1237 = vmatmul.mubr.bf16.gmra.mxu0 %v956
        %v1238 = vpop.f32.mrf.mxu0
        %v1239 = vadd.f32 0.0, %v1238
        %v1240 = vpop.f32.mrf.mxu0
        %v1241 = vadd.f32 0.0, %v1240
        %v1242 = vpop.f32.mrf.mxu0
        %v1243 = vadd.f32 0.0, %v1242
        %v1244 = vpop.f32.mrf.mxu0
        %v1245 = vadd.f32 0.0, %v1244
        %1246 = vdwg.mxu0
        %v1247 = vadd.f32 %v845, %v1089
        %v1248 = vadd.f32 %v846, %v1091
        %v1249 = vadd.f32 %v847, %v1093
        %v1250 = vadd.f32 %v848, %v1095
        %v1251 = vadd.f32 %v849, %v1099
        %v1252 = vadd.f32 %v850, %v1101
        %v1253 = vadd.f32 %v851, %v1103
        %v1254 = vadd.f32 %v852, %v1105
        %v1255 = vadd.f32 %v853, %v1109
        %v1256 = vadd.f32 %v854, %v1111
        %v1257 = vadd.f32 %v855, %v1113
        %v1258 = vadd.f32 %v856, %v1115
        %v1259 = vadd.f32 %v857, %v1119
        %v1260 = vadd.f32 %v858, %v1121
        %v1261 = vadd.f32 %v859, %v1123
        %v1262 = vadd.f32 %v860, %v1125
        %v1263 = vadd.f32 %v861, %v1129
        %v1264 = vadd.f32 %v862, %v1131
        %v1265 = vadd.f32 %v863, %v1133
        %v1266 = vadd.f32 %v864, %v1135
        %v1267 = vadd.f32 %v865, %v1139
        %v1268 = vadd.f32 %v866, %v1141
        %v1269 = vadd.f32 %v867, %v1143
        %v1270 = vadd.f32 %v868, %v1145
        %v1271 = vadd.f32 %v869, %v1149
        %v1272 = vadd.f32 %v870, %v1151
        %v1273 = vadd.f32 %v871, %v1153
        %v1274 = vadd.f32 %v872, %v1155
        %v1275 = vadd.f32 %v873, %v1159
        %v1276 = vadd.f32 %v874, %v1161
        %v1277 = vadd.f32 %v875, %v1163
        %v1278 = vadd.f32 %v876, %v1165
        %v1279 = vadd.f32 %v877, %v1169
        %v1280 = vadd.f32 %v878, %v1171
        %v1281 = vadd.f32 %v879, %v1173
        %v1282 = vadd.f32 %v880, %v1175
        %v1283 = vadd.f32 %v881, %v1179
        %v1284 = vadd.f32 %v882, %v1181
        %v1285 = vadd.f32 %v883, %v1183
        %v1286 = vadd.f32 %v884, %v1185
        %v1287 = vadd.f32 %v885, %v1189
        %v1288 = vadd.f32 %v886, %v1191
        %v1289 = vadd.f32 %v887, %v1193
        %v1290 = vadd.f32 %v888, %v1195
        %v1291 = vadd.f32 %v889, %v1199
        %v1292 = vadd.f32 %v890, %v1201
        %v1293 = vadd.f32 %v891, %v1203
        %v1294 = vadd.f32 %v892, %v1205
        %v1295 = vadd.f32 %v893, %v1209
        %v1296 = vadd.f32 %v894, %v1211
        %v1297 = vadd.f32 %v895, %v1213
        %v1298 = vadd.f32 %v896, %v1215
        %v1299 = vadd.f32 %v897, %v1219
        %v1300 = vadd.f32 %v898, %v1221
        %v1301 = vadd.f32 %v899, %v1223
        %v1302 = vadd.f32 %v900, %v1225
        %v1303 = vadd.f32 %v901, %v1229
        %v1304 = vadd.f32 %v902, %v1231
        %v1305 = vadd.f32 %v903, %v1233
        %v1306 = vadd.f32 %v904, %v1235
        %v1307 = vadd.f32 %v905, %v1239
        %v1308 = vadd.f32 %v906, %v1241
        %v1309 = vadd.f32 %v907, %v1243
        %v1310 = vadd.f32 %v908, %v1245
        %v1311 = vld [vmem:[%s493 + $0x2] sm:$0xff]
        %v1312 = vld [vmem:[%s493 + $0xa] sm:$0xff]
        %v1313 = vld [vmem:[%s493 + $0x12] sm:$0xff]
        %v1314 = vld [vmem:[%s493 + $0x1a] sm:$0xff]
        %v1315 = vld [vmem:[%s493 + $0x22] sm:$0xff]
        %v1316 = vld [vmem:[%s493 + $0x2a] sm:$0xff]
        %v1317 = vld [vmem:[%s493 + $0x32] sm:$0xff]
        %v1318 = vld [vmem:[%s493 + $0x3a] sm:$0xff]
        %v1319 = vld [vmem:[%s493 + $0x42] sm:$0xff]
        %v1320 = vld [vmem:[%s493 + $0x4a] sm:$0xff]
        %v1321 = vld [vmem:[%s493 + $0x52] sm:$0xff]
        %v1322 = vld [vmem:[%s493 + $0x5a] sm:$0xff]
        %v1323 = vld [vmem:[%s493 + $0x62] sm:$0xff]
        %v1324 = vld [vmem:[%s493 + $0x6a] sm:$0xff]
        %v1325 = vld [vmem:[%s493 + $0x72] sm:$0xff]
        %v1326 = vld [vmem:[%s493 + $0x7a] sm:$0xff]
        %v1327 = vld [vmem:[%s493 + $0x82] sm:$0xff]
        %v1328 = vld [vmem:[%s493 + $0x8a] sm:$0xff]
        %v1329 = vld [vmem:[%s493 + $0x92] sm:$0xff]
        %v1330 = vld [vmem:[%s493 + $0x9a] sm:$0xff]
        %v1331 = vld [vmem:[%s493 + $0xa2] sm:$0xff]
        %v1332 = vld [vmem:[%s493 + $0xaa] sm:$0xff]
        %v1333 = vld [vmem:[%s493 + $0xb2] sm:$0xff]
        %v1334 = vld [vmem:[%s493 + $0xba] sm:$0xff]
        %v1335 = vld [vmem:[%s493 + $0xc2] sm:$0xff]
        %v1336 = vld [vmem:[%s493 + $0xca] sm:$0xff]
        %v1337 = vld [vmem:[%s493 + $0xd2] sm:$0xff]
        %v1338 = vld [vmem:[%s493 + $0xda] sm:$0xff]
        %v1339 = vld [vmem:[%s493 + $0xe2] sm:$0xff]
        %v1340 = vld [vmem:[%s493 + $0xea] sm:$0xff]
        %v1341 = vld [vmem:[%s493 + $0xf2] sm:$0xff]
        %v1342 = vld [vmem:[%s493 + $0xfa] sm:$0xf]
        %v1343 = vpack.c.bf16 %v1312, %v1311
        %v1344 = vpack.c.bf16 %v1314, %v1313
        %v1345 = vpack.c.bf16 %v1316, %v1315
        %v1346 = vpack.c.bf16 %v1318, %v1317
        %v1347 = vpack.c.bf16 %v1320, %v1319
        %v1348 = vpack.c.bf16 %v1322, %v1321
        %v1349 = vpack.c.bf16 %v1324, %v1323
        %v1350 = vpack.c.bf16 %v1326, %v1325
        %v1351 = vpack.c.bf16 %v1328, %v1327
        %v1352 = vpack.c.bf16 %v1330, %v1329
        %v1353 = vpack.c.bf16 %v1332, %v1331
        %v1354 = vpack.c.bf16 %v1334, %v1333
        %v1355 = vpack.c.bf16 %v1336, %v1335
        %v1356 = vpack.c.bf16 %v1338, %v1337
        %v1357 = vpack.c.bf16 %v1340, %v1339
        %v1358 = vpack.c.bf16 %v1342, %v1341
        %s1359 = scalar_lea.vmem %s1, 256
        %v1360 = vld [vmem:[%s1359] sm:$0xff]
        %v1361 = vld [vmem:[%s1359 + $0x8] sm:$0xff]
        %v1362 = vld [vmem:[%s1359 + $0x10] sm:$0xff]
        %v1363 = vld [vmem:[%s1359 + $0x18] sm:$0xff]
        %v1364 = vld [vmem:[%s1359 + $0x20] sm:$0xff]
        %v1365 = vld [vmem:[%s1359 + $0x28] sm:$0xff]
        %v1366 = vld [vmem:[%s1359 + $0x30] sm:$0xff]
        %v1367 = vld [vmem:[%s1359 + $0x38] sm:$0xff]
        %v1368 = vld [vmem:[%s1359 + $0x40] sm:$0xff]
        %v1369 = vld [vmem:[%s1359 + $0x48] sm:$0xff]
        %v1370 = vld [vmem:[%s1359 + $0x50] sm:$0xff]
        %v1371 = vld [vmem:[%s1359 + $0x58] sm:$0xff]
        %v1372 = vld [vmem:[%s1359 + $0x60] sm:$0xff]
        %v1373 = vld [vmem:[%s1359 + $0x68] sm:$0xff]
        %v1374 = vld [vmem:[%s1359 + $0x70] sm:$0xff]
        %v1375 = vld [vmem:[%s1359 + $0x78] sm:$0xff]
        %v1392 = vunpack.c.l.b16 %v1360
        %v1393 = vunpack.c.h.b16 %v1360
        %v1394 = vunpack.c.l.b16 %v1361
        %v1395 = vunpack.c.h.b16 %v1361
        %v1396 = vunpack.c.l.b16 %v1362
        %v1397 = vunpack.c.h.b16 %v1362
        %v1398 = vunpack.c.l.b16 %v1363
        %v1399 = vunpack.c.h.b16 %v1363
        %v1400 = vunpack.c.l.b16 %v1364
        %v1401 = vunpack.c.h.b16 %v1364
        %v1402 = vunpack.c.l.b16 %v1365
        %v1403 = vunpack.c.h.b16 %v1365
        %v1404 = vunpack.c.l.b16 %v1366
        %v1405 = vunpack.c.h.b16 %v1366
        %v1406 = vunpack.c.l.b16 %v1367
        %v1407 = vunpack.c.h.b16 %v1367
        %v1408 = vunpack.c.l.b16 %v1368
        %v1409 = vunpack.c.h.b16 %v1368
        %v1410 = vunpack.c.l.b16 %v1369
        %v1411 = vunpack.c.h.b16 %v1369
        %v1412 = vunpack.c.l.b16 %v1370
        %v1413 = vunpack.c.h.b16 %v1370
        %v1414 = vunpack.c.l.b16 %v1371
        %v1415 = vunpack.c.h.b16 %v1371
        %v1416 = vunpack.c.l.b16 %v1372
        %v1417 = vunpack.c.h.b16 %v1372
        %v1418 = vunpack.c.l.b16 %v1373
        %v1419 = vunpack.c.h.b16 %v1373
        %v1420 = vunpack.c.l.b16 %v1374
        %v1421 = vunpack.c.h.b16 %v1374
        %v1422 = vunpack.c.l.b16 %v1375
        %v1423 = vunpack.c.h.b16 %v1375
        %v1424 = vpack.c.b16 %v1394, %v1392
        %v1425 = vpack.c.b16 %v1395, %v1393
        %v1426 = vpack.c.b16 %v1398, %v1396
        %v1427 = vpack.c.b16 %v1399, %v1397
        %v1428 = vpack.c.b16 %v1402, %v1400
        %v1429 = vpack.c.b16 %v1403, %v1401
        %v1430 = vpack.c.b16 %v1406, %v1404
        %v1431 = vpack.c.b16 %v1407, %v1405
        %v1432 = vpack.c.b16 %v1410, %v1408
        %v1433 = vpack.c.b16 %v1411, %v1409
        %v1434 = vpack.c.b16 %v1414, %v1412
        %v1435 = vpack.c.b16 %v1415, %v1413
        %v1436 = vpack.c.b16 %v1418, %v1416
        %v1437 = vpack.c.b16 %v1419, %v1417
        %v1438 = vpack.c.b16 %v1422, %v1420
        %v1439 = vpack.c.b16 %v1423, %v1421
        %1456 = vmatprep.subr.bf16.mxu0 %v1439
        %1457 = vmatpush1.bf16.msra.mxu0 %v1438
        %1458 = vmatprep.subr.bf16.mxu0 %v1437
        %1459 = vmatpush1.bf16.msra.mxu0 %v1436
        %1460 = vmatprep.subr.bf16.mxu0 %v1435
        %1461 = vmatpush1.bf16.msra.mxu0 %v1434
        %1462 = vmatprep.subr.bf16.mxu0 %v1433
        %1463 = vmatpush1.bf16.msra.mxu0 %v1432
        %1464 = vmatprep.subr.bf16.mxu0 %v1431
        %1465 = vmatpush1.bf16.msra.mxu0 %v1430
        %1466 = vmatprep.subr.bf16.mxu0 %v1429
        %1467 = vmatpush1.bf16.msra.mxu0 %v1428
        %1468 = vmatprep.subr.bf16.mxu0 %v1427
        %1469 = vmatpush1.bf16.msra.mxu0 %v1426
        %1470 = vmatprep.subr.bf16.mxu0 %v1425
        %1471 = vmatpush1.bf16.msra.mxu0 %v1424
        %1472 = vmatprep.subr.bf16.mxu0 0
        %1473 = vmatpush2.bf16.msra.mxu0 0
        %1474 = vmatprep.subr.bf16.mxu0 0
        %1475 = vmatpush2.bf16.msra.mxu0 0
        %1476 = vmatprep.subr.bf16.mxu0 0
        %1477 = vmatpush2.bf16.msra.mxu0 0
        %1478 = vmatprep.subr.bf16.mxu0 0
        %1479 = vmatpush2.bf16.msra.mxu0 0
        %1480 = vmatprep.subr.bf16.mxu0 0
        %1481 = vmatpush2.bf16.msra.mxu0 0
        %1482 = vmatprep.subr.bf16.mxu0 0
        %1483 = vmatpush2.bf16.msra.mxu0 0
        %1484 = vmatprep.subr.bf16.mxu0 0
        %1485 = vmatpush2.bf16.msra.mxu0 0
        %1486 = vmatprep.subr.bf16.mxu0 0
        %1487 = vmatpush2.bf16.msra.mxu0 0
        %1488 = vmatprep.mubr.bf16.mxu0 0
        %1489 = vmatmul.mubr.bf16.gmra.mxu0 %v1343
        %v1490 = vpop.f32.mrf.mxu0
        %v1491 = vadd.f32 0.0, %v1490
        %v1492 = vpop.f32.mrf.mxu0
        %v1493 = vadd.f32 0.0, %v1492
        %v1494 = vpop.f32.mrf.mxu0
        %v1495 = vadd.f32 0.0, %v1494
        %v1496 = vpop.f32.mrf.mxu0
        %v1497 = vadd.f32 0.0, %v1496
        %1498 = vmatprep.mubr.bf16.mxu0 0
        %1499 = vmatmul.mubr.bf16.gmra.mxu0 %v1344
        %v1500 = vpop.f32.mrf.mxu0
        %v1501 = vadd.f32 0.0, %v1500
        %v1502 = vpop.f32.mrf.mxu0
        %v1503 = vadd.f32 0.0, %v1502
        %v1504 = vpop.f32.mrf.mxu0
        %v1505 = vadd.f32 0.0, %v1504
        %v1506 = vpop.f32.mrf.mxu0
        %v1507 = vadd.f32 0.0, %v1506
        %1508 = vmatprep.mubr.bf16.mxu0 0
        %1509 = vmatmul.mubr.bf16.gmra.mxu0 %v1345
        %v1510 = vpop.f32.mrf.mxu0
        %v1511 = vadd.f32 0.0, %v1510
        %v1512 = vpop.f32.mrf.mxu0
        %v1513 = vadd.f32 0.0, %v1512
        %v1514 = vpop.f32.mrf.mxu0
        %v1515 = vadd.f32 0.0, %v1514
        %v1516 = vpop.f32.mrf.mxu0
        %v1517 = vadd.f32 0.0, %v1516
        %1518 = vmatprep.mubr.bf16.mxu0 0
        %1519 = vmatmul.mubr.bf16.gmra.mxu0 %v1346
        %v1520 = vpop.f32.mrf.mxu0
        %v1521 = vadd.f32 0.0, %v1520
        %v1522 = vpop.f32.mrf.mxu0
        %v1523 = vadd.f32 0.0, %v1522
        %v1524 = vpop.f32.mrf.mxu0
        %v1525 = vadd.f32 0.0, %v1524
        %v1526 = vpop.f32.mrf.mxu0
        %v1527 = vadd.f32 0.0, %v1526
        %1528 = vmatprep.mubr.bf16.mxu0 0
        %1529 = vmatmul.mubr.bf16.gmra.mxu0 %v1347
        %v1530 = vpop.f32.mrf.mxu0
        %v1531 = vadd.f32 0.0, %v1530
        %v1532 = vpop.f32.mrf.mxu0
        %v1533 = vadd.f32 0.0, %v1532
        %v1534 = vpop.f32.mrf.mxu0
        %v1535 = vadd.f32 0.0, %v1534
        %v1536 = vpop.f32.mrf.mxu0
        %v1537 = vadd.f32 0.0, %v1536
        %1538 = vmatprep.mubr.bf16.mxu0 0
        %1539 = vmatmul.mubr.bf16.gmra.mxu0 %v1348
        %v1540 = vpop.f32.mrf.mxu0
        %v1541 = vadd.f32 0.0, %v1540
        %v1542 = vpop.f32.mrf.mxu0
        %v1543 = vadd.f32 0.0, %v1542
        %v1544 = vpop.f32.mrf.mxu0
        %v1545 = vadd.f32 0.0, %v1544
        %v1546 = vpop.f32.mrf.mxu0
        %v1547 = vadd.f32 0.0, %v1546
        %1548 = vmatprep.mubr.bf16.mxu0 0
        %1549 = vmatmul.mubr.bf16.gmra.mxu0 %v1349
        %v1550 = vpop.f32.mrf.mxu0
        %v1551 = vadd.f32 0.0, %v1550
        %v1552 = vpop.f32.mrf.mxu0
        %v1553 = vadd.f32 0.0, %v1552
        %v1554 = vpop.f32.mrf.mxu0
        %v1555 = vadd.f32 0.0, %v1554
        %v1556 = vpop.f32.mrf.mxu0
        %v1557 = vadd.f32 0.0, %v1556
        %1558 = vmatprep.mubr.bf16.mxu0 0
        %1559 = vmatmul.mubr.bf16.gmra.mxu0 %v1350
        %v1560 = vpop.f32.mrf.mxu0
        %v1561 = vadd.f32 0.0, %v1560
        %v1562 = vpop.f32.mrf.mxu0
        %v1563 = vadd.f32 0.0, %v1562
        %v1564 = vpop.f32.mrf.mxu0
        %v1565 = vadd.f32 0.0, %v1564
        %v1566 = vpop.f32.mrf.mxu0
        %v1567 = vadd.f32 0.0, %v1566
        %1568 = vmatprep.mubr.bf16.mxu0 0
        %1569 = vmatmul.mubr.bf16.gmra.mxu0 %v1351
        %v1570 = vpop.f32.mrf.mxu0
        %v1571 = vadd.f32 0.0, %v1570
        %v1572 = vpop.f32.mrf.mxu0
        %v1573 = vadd.f32 0.0, %v1572
        %v1574 = vpop.f32.mrf.mxu0
        %v1575 = vadd.f32 0.0, %v1574
        %v1576 = vpop.f32.mrf.mxu0
        %v1577 = vadd.f32 0.0, %v1576
        %1578 = vmatprep.mubr.bf16.mxu0 0
        %1579 = vmatmul.mubr.bf16.gmra.mxu0 %v1352
        %v1580 = vpop.f32.mrf.mxu0
        %v1581 = vadd.f32 0.0, %v1580
        %v1582 = vpop.f32.mrf.mxu0
        %v1583 = vadd.f32 0.0, %v1582
        %v1584 = vpop.f32.mrf.mxu0
        %v1585 = vadd.f32 0.0, %v1584
        %v1586 = vpop.f32.mrf.mxu0
        %v1587 = vadd.f32 0.0, %v1586
        %1588 = vmatprep.mubr.bf16.mxu0 0
        %1589 = vmatmul.mubr.bf16.gmra.mxu0 %v1353
        %v1590 = vpop.f32.mrf.mxu0
        %v1591 = vadd.f32 0.0, %v1590
        %v1592 = vpop.f32.mrf.mxu0
        %v1593 = vadd.f32 0.0, %v1592
        %v1594 = vpop.f32.mrf.mxu0
        %v1595 = vadd.f32 0.0, %v1594
        %v1596 = vpop.f32.mrf.mxu0
        %v1597 = vadd.f32 0.0, %v1596
        %1598 = vmatprep.mubr.bf16.mxu0 0
        %1599 = vmatmul.mubr.bf16.gmra.mxu0 %v1354
        %v1600 = vpop.f32.mrf.mxu0
        %v1601 = vadd.f32 0.0, %v1600
        %v1602 = vpop.f32.mrf.mxu0
        %v1603 = vadd.f32 0.0, %v1602
        %v1604 = vpop.f32.mrf.mxu0
        %v1605 = vadd.f32 0.0, %v1604
        %v1606 = vpop.f32.mrf.mxu0
        %v1607 = vadd.f32 0.0, %v1606
        %1608 = vmatprep.mubr.bf16.mxu0 0
        %1609 = vmatmul.mubr.bf16.gmra.mxu0 %v1355
        %v1610 = vpop.f32.mrf.mxu0
        %v1611 = vadd.f32 0.0, %v1610
        %v1612 = vpop.f32.mrf.mxu0
        %v1613 = vadd.f32 0.0, %v1612
        %v1614 = vpop.f32.mrf.mxu0
        %v1615 = vadd.f32 0.0, %v1614
        %v1616 = vpop.f32.mrf.mxu0
        %v1617 = vadd.f32 0.0, %v1616
        %1618 = vmatprep.mubr.bf16.mxu0 0
        %1619 = vmatmul.mubr.bf16.gmra.mxu0 %v1356
        %v1620 = vpop.f32.mrf.mxu0
        %v1621 = vadd.f32 0.0, %v1620
        %v1622 = vpop.f32.mrf.mxu0
        %v1623 = vadd.f32 0.0, %v1622
        %v1624 = vpop.f32.mrf.mxu0
        %v1625 = vadd.f32 0.0, %v1624
        %v1626 = vpop.f32.mrf.mxu0
        %v1627 = vadd.f32 0.0, %v1626
        %1628 = vmatprep.mubr.bf16.mxu0 0
        %1629 = vmatmul.mubr.bf16.gmra.mxu0 %v1357
        %v1630 = vpop.f32.mrf.mxu0
        %v1631 = vadd.f32 0.0, %v1630
        %v1632 = vpop.f32.mrf.mxu0
        %v1633 = vadd.f32 0.0, %v1632
        %v1634 = vpop.f32.mrf.mxu0
        %v1635 = vadd.f32 0.0, %v1634
        %v1636 = vpop.f32.mrf.mxu0
        %v1637 = vadd.f32 0.0, %v1636
        %1638 = vmatprep.mubr.bf16.mxu0 0
        %1639 = vmatmul.mubr.bf16.gmra.mxu0 %v1358
        %v1640 = vpop.f32.mrf.mxu0
        %v1641 = vadd.f32 0.0, %v1640
        %v1642 = vpop.f32.mrf.mxu0
        %v1643 = vadd.f32 0.0, %v1642
        %v1644 = vpop.f32.mrf.mxu0
        %v1645 = vadd.f32 0.0, %v1644
        %v1646 = vpop.f32.mrf.mxu0
        %v1647 = vadd.f32 0.0, %v1646
        %1648 = vdwg.mxu0
        %v1649 = vadd.f32 %v1247, %v1491
        %v1650 = vadd.f32 %v1248, %v1493
        %v1651 = vadd.f32 %v1249, %v1495
        %v1652 = vadd.f32 %v1250, %v1497
        %v1653 = vadd.f32 %v1251, %v1501
        %v1654 = vadd.f32 %v1252, %v1503
        %v1655 = vadd.f32 %v1253, %v1505
        %v1656 = vadd.f32 %v1254, %v1507
        %v1657 = vadd.f32 %v1255, %v1511
        %v1658 = vadd.f32 %v1256, %v1513
        %v1659 = vadd.f32 %v1257, %v1515
        %v1660 = vadd.f32 %v1258, %v1517
        %v1661 = vadd.f32 %v1259, %v1521
        %v1662 = vadd.f32 %v1260, %v1523
        %v1663 = vadd.f32 %v1261, %v1525
        %v1664 = vadd.f32 %v1262, %v1527
        %v1665 = vadd.f32 %v1263, %v1531
        %v1666 = vadd.f32 %v1264, %v1533
        %v1667 = vadd.f32 %v1265, %v1535
        %v1668 = vadd.f32 %v1266, %v1537
        %v1669 = vadd.f32 %v1267, %v1541
        %v1670 = vadd.f32 %v1268, %v1543
        %v1671 = vadd.f32 %v1269, %v1545
        %v1672 = vadd.f32 %v1270, %v1547
        %v1673 = vadd.f32 %v1271, %v1551
        %v1674 = vadd.f32 %v1272, %v1553
        %v1675 = vadd.f32 %v1273, %v1555
        %v1676 = vadd.f32 %v1274, %v1557
        %v1677 = vadd.f32 %v1275, %v1561
        %v1678 = vadd.f32 %v1276, %v1563
        %v1679 = vadd.f32 %v1277, %v1565
        %v1680 = vadd.f32 %v1278, %v1567
        %v1681 = vadd.f32 %v1279, %v1571
        %v1682 = vadd.f32 %v1280, %v1573
        %v1683 = vadd.f32 %v1281, %v1575
        %v1684 = vadd.f32 %v1282, %v1577
        %v1685 = vadd.f32 %v1283, %v1581
        %v1686 = vadd.f32 %v1284, %v1583
        %v1687 = vadd.f32 %v1285, %v1585
        %v1688 = vadd.f32 %v1286, %v1587
        %v1689 = vadd.f32 %v1287, %v1591
        %v1690 = vadd.f32 %v1288, %v1593
        %v1691 = vadd.f32 %v1289, %v1595
        %v1692 = vadd.f32 %v1290, %v1597
        %v1693 = vadd.f32 %v1291, %v1601
        %v1694 = vadd.f32 %v1292, %v1603
        %v1695 = vadd.f32 %v1293, %v1605
        %v1696 = vadd.f32 %v1294, %v1607
        %v1697 = vadd.f32 %v1295, %v1611
        %v1698 = vadd.f32 %v1296, %v1613
        %v1699 = vadd.f32 %v1297, %v1615
        %v1700 = vadd.f32 %v1298, %v1617
        %v1701 = vadd.f32 %v1299, %v1621
        %v1702 = vadd.f32 %v1300, %v1623
        %v1703 = vadd.f32 %v1301, %v1625
        %v1704 = vadd.f32 %v1302, %v1627
        %v1705 = vadd.f32 %v1303, %v1631
        %v1706 = vadd.f32 %v1304, %v1633
        %v1707 = vadd.f32 %v1305, %v1635
        %v1708 = vadd.f32 %v1306, %v1637
        %v1709 = vadd.f32 %v1307, %v1641
        %v1710 = vadd.f32 %v1308, %v1643
        %v1711 = vadd.f32 %v1309, %v1645
        %v1712 = vadd.f32 %v1310, %v1647
        %v1713 = vld [vmem:[%s493 + $0x3] sm:$0xff]
        %v1714 = vld [vmem:[%s493 + $0xb] sm:$0xff]
        %v1715 = vld [vmem:[%s493 + $0x13] sm:$0xff]
        %v1716 = vld [vmem:[%s493 + $0x1b] sm:$0xff]
        %v1717 = vld [vmem:[%s493 + $0x23] sm:$0xff]
        %v1718 = vld [vmem:[%s493 + $0x2b] sm:$0xff]
        %v1719 = vld [vmem:[%s493 + $0x33] sm:$0xff]
        %v1720 = vld [vmem:[%s493 + $0x3b] sm:$0xff]
        %v1721 = vld [vmem:[%s493 + $0x43] sm:$0xff]
        %v1722 = vld [vmem:[%s493 + $0x4b] sm:$0xff]
        %v1723 = vld [vmem:[%s493 + $0x53] sm:$0xff]
        %v1724 = vld [vmem:[%s493 + $0x5b] sm:$0xff]
        %v1725 = vld [vmem:[%s493 + $0x63] sm:$0xff]
        %v1726 = vld [vmem:[%s493 + $0x6b] sm:$0xff]
        %v1727 = vld [vmem:[%s493 + $0x73] sm:$0xff]
        %v1728 = vld [vmem:[%s493 + $0x7b] sm:$0xff]
        %v1729 = vld [vmem:[%s493 + $0x83] sm:$0xff]
        %v1730 = vld [vmem:[%s493 + $0x8b] sm:$0xff]
        %v1731 = vld [vmem:[%s493 + $0x93] sm:$0xff]
        %v1732 = vld [vmem:[%s493 + $0x9b] sm:$0xff]
        %v1733 = vld [vmem:[%s493 + $0xa3] sm:$0xff]
        %v1734 = vld [vmem:[%s493 + $0xab] sm:$0xff]
        %v1735 = vld [vmem:[%s493 + $0xb3] sm:$0xff]
        %v1736 = vld [vmem:[%s493 + $0xbb] sm:$0xff]
        %v1737 = vld [vmem:[%s493 + $0xc3] sm:$0xff]
        %v1738 = vld [vmem:[%s493 + $0xcb] sm:$0xff]
        %v1739 = vld [vmem:[%s493 + $0xd3] sm:$0xff]
        %v1740 = vld [vmem:[%s493 + $0xdb] sm:$0xff]
        %v1741 = vld [vmem:[%s493 + $0xe3] sm:$0xff]
        %v1742 = vld [vmem:[%s493 + $0xeb] sm:$0xff]
        %v1743 = vld [vmem:[%s493 + $0xf3] sm:$0xff]
        %v1744 = vld [vmem:[%s493 + $0xfb] sm:$0xf]
        %v1745 = vpack.c.bf16 %v1714, %v1713
        %v1746 = vpack.c.bf16 %v1716, %v1715
        %v1747 = vpack.c.bf16 %v1718, %v1717
        %v1748 = vpack.c.bf16 %v1720, %v1719
        %v1749 = vpack.c.bf16 %v1722, %v1721
        %v1750 = vpack.c.bf16 %v1724, %v1723
        %v1751 = vpack.c.bf16 %v1726, %v1725
        %v1752 = vpack.c.bf16 %v1728, %v1727
        %v1753 = vpack.c.bf16 %v1730, %v1729
        %v1754 = vpack.c.bf16 %v1732, %v1731
        %v1755 = vpack.c.bf16 %v1734, %v1733
        %v1756 = vpack.c.bf16 %v1736, %v1735
        %v1757 = vpack.c.bf16 %v1738, %v1737
        %v1758 = vpack.c.bf16 %v1740, %v1739
        %v1759 = vpack.c.bf16 %v1742, %v1741
        %v1760 = vpack.c.bf16 %v1744, %v1743
        %s1761 = scalar_lea.vmem %s1, 384
        %v1762 = vld [vmem:[%s1761] sm:$0xff]
        %v1763 = vld [vmem:[%s1761 + $0x8] sm:$0xff]
        %v1764 = vld [vmem:[%s1761 + $0x10] sm:$0xff]
        %v1765 = vld [vmem:[%s1761 + $0x18] sm:$0xff]
        %v1766 = vld [vmem:[%s1761 + $0x20] sm:$0xff]
        %v1767 = vld [vmem:[%s1761 + $0x28] sm:$0xff]
        %v1768 = vld [vmem:[%s1761 + $0x30] sm:$0xff]
        %v1769 = vld [vmem:[%s1761 + $0x38] sm:$0xff]
        %v1770 = vld [vmem:[%s1761 + $0x40] sm:$0xff]
        %v1771 = vld [vmem:[%s1761 + $0x48] sm:$0xff]
        %v1772 = vld [vmem:[%s1761 + $0x50] sm:$0xff]
        %v1773 = vld [vmem:[%s1761 + $0x58] sm:$0xff]
        %v1774 = vld [vmem:[%s1761 + $0x60] sm:$0xff]
        %v1775 = vld [vmem:[%s1761 + $0x68] sm:$0xff]
        %v1776 = vld [vmem:[%s1761 + $0x70] sm:$0xff]
        %v1777 = vld [vmem:[%s1761 + $0x78] sm:$0xff]
        %v1794 = vunpack.c.l.b16 %v1762
        %v1795 = vunpack.c.h.b16 %v1762
        %v1796 = vunpack.c.l.b16 %v1763
        %v1797 = vunpack.c.h.b16 %v1763
        %v1798 = vunpack.c.l.b16 %v1764
        %v1799 = vunpack.c.h.b16 %v1764
        %v1800 = vunpack.c.l.b16 %v1765
        %v1801 = vunpack.c.h.b16 %v1765
        %v1802 = vunpack.c.l.b16 %v1766
        %v1803 = vunpack.c.h.b16 %v1766
        %v1804 = vunpack.c.l.b16 %v1767
        %v1805 = vunpack.c.h.b16 %v1767
        %v1806 = vunpack.c.l.b16 %v1768
        %v1807 = vunpack.c.h.b16 %v1768
        %v1808 = vunpack.c.l.b16 %v1769
        %v1809 = vunpack.c.h.b16 %v1769
        %v1810 = vunpack.c.l.b16 %v1770
        %v1811 = vunpack.c.h.b16 %v1770
        %v1812 = vunpack.c.l.b16 %v1771
        %v1813 = vunpack.c.h.b16 %v1771
        %v1814 = vunpack.c.l.b16 %v1772
        %v1815 = vunpack.c.h.b16 %v1772
        %v1816 = vunpack.c.l.b16 %v1773
        %v1817 = vunpack.c.h.b16 %v1773
        %v1818 = vunpack.c.l.b16 %v1774
        %v1819 = vunpack.c.h.b16 %v1774
        %v1820 = vunpack.c.l.b16 %v1775
        %v1821 = vunpack.c.h.b16 %v1775
        %v1822 = vunpack.c.l.b16 %v1776
        %v1823 = vunpack.c.h.b16 %v1776
        %v1824 = vunpack.c.l.b16 %v1777
        %v1825 = vunpack.c.h.b16 %v1777
        %v1826 = vpack.c.b16 %v1796, %v1794
        %v1827 = vpack.c.b16 %v1797, %v1795
        %v1828 = vpack.c.b16 %v1800, %v1798
        %v1829 = vpack.c.b16 %v1801, %v1799
        %v1830 = vpack.c.b16 %v1804, %v1802
        %v1831 = vpack.c.b16 %v1805, %v1803
        %v1832 = vpack.c.b16 %v1808, %v1806
        %v1833 = vpack.c.b16 %v1809, %v1807
        %v1834 = vpack.c.b16 %v1812, %v1810
        %v1835 = vpack.c.b16 %v1813, %v1811
        %v1836 = vpack.c.b16 %v1816, %v1814
        %v1837 = vpack.c.b16 %v1817, %v1815
        %v1838 = vpack.c.b16 %v1820, %v1818
        %v1839 = vpack.c.b16 %v1821, %v1819
        %v1840 = vpack.c.b16 %v1824, %v1822
        %v1841 = vpack.c.b16 %v1825, %v1823
        %1858 = vmatprep.subr.bf16.mxu0 %v1841
        %1859 = vmatpush1.bf16.msra.mxu0 %v1840
        %1860 = vmatprep.subr.bf16.mxu0 %v1839
        %1861 = vmatpush1.bf16.msra.mxu0 %v1838
        %1862 = vmatprep.subr.bf16.mxu0 %v1837
        %1863 = vmatpush1.bf16.msra.mxu0 %v1836
        %1864 = vmatprep.subr.bf16.mxu0 %v1835
        %1865 = vmatpush1.bf16.msra.mxu0 %v1834
        %1866 = vmatprep.subr.bf16.mxu0 %v1833
        %1867 = vmatpush1.bf16.msra.mxu0 %v1832
        %1868 = vmatprep.subr.bf16.mxu0 %v1831
        %1869 = vmatpush1.bf16.msra.mxu0 %v1830
        %1870 = vmatprep.subr.bf16.mxu0 %v1829
        %1871 = vmatpush1.bf16.msra.mxu0 %v1828
        %1872 = vmatprep.subr.bf16.mxu0 %v1827
        %1873 = vmatpush1.bf16.msra.mxu0 %v1826
        %1874 = vmatprep.subr.bf16.mxu0 0
        %1875 = vmatpush2.bf16.msra.mxu0 0
        %1876 = vmatprep.subr.bf16.mxu0 0
        %1877 = vmatpush2.bf16.msra.mxu0 0
        %1878 = vmatprep.subr.bf16.mxu0 0
        %1879 = vmatpush2.bf16.msra.mxu0 0
        %1880 = vmatprep.subr.bf16.mxu0 0
        %1881 = vmatpush2.bf16.msra.mxu0 0
        %1882 = vmatprep.subr.bf16.mxu0 0
        %1883 = vmatpush2.bf16.msra.mxu0 0
        %1884 = vmatprep.subr.bf16.mxu0 0
        %1885 = vmatpush2.bf16.msra.mxu0 0
        %1886 = vmatprep.subr.bf16.mxu0 0
        %1887 = vmatpush2.bf16.msra.mxu0 0
        %1888 = vmatprep.subr.bf16.mxu0 0
        %1889 = vmatpush2.bf16.msra.mxu0 0
        %1890 = vmatprep.mubr.bf16.mxu0 0
        %1891 = vmatmul.mubr.bf16.gmra.mxu0 %v1745
        %v1892 = vpop.f32.mrf.mxu0
        %v1893 = vadd.f32 0.0, %v1892
        %v1894 = vpop.f32.mrf.mxu0
        %v1895 = vadd.f32 0.0, %v1894
        %v1896 = vpop.f32.mrf.mxu0
        %v1897 = vadd.f32 0.0, %v1896
        %v1898 = vpop.f32.mrf.mxu0
        %v1899 = vadd.f32 0.0, %v1898
        %1900 = vmatprep.mubr.bf16.mxu0 0
        %1901 = vmatmul.mubr.bf16.gmra.mxu0 %v1746
        %v1902 = vpop.f32.mrf.mxu0
        %v1903 = vadd.f32 0.0, %v1902
        %v1904 = vpop.f32.mrf.mxu0
        %v1905 = vadd.f32 0.0, %v1904
        %v1906 = vpop.f32.mrf.mxu0
        %v1907 = vadd.f32 0.0, %v1906
        %v1908 = vpop.f32.mrf.mxu0
        %v1909 = vadd.f32 0.0, %v1908
        %1910 = vmatprep.mubr.bf16.mxu0 0
        %1911 = vmatmul.mubr.bf16.gmra.mxu0 %v1747
        %v1912 = vpop.f32.mrf.mxu0
        %v1913 = vadd.f32 0.0, %v1912
        %v1914 = vpop.f32.mrf.mxu0
        %v1915 = vadd.f32 0.0, %v1914
        %v1916 = vpop.f32.mrf.mxu0
        %v1917 = vadd.f32 0.0, %v1916
        %v1918 = vpop.f32.mrf.mxu0
        %v1919 = vadd.f32 0.0, %v1918
        %1920 = vmatprep.mubr.bf16.mxu0 0
        %1921 = vmatmul.mubr.bf16.gmra.mxu0 %v1748
        %v1922 = vpop.f32.mrf.mxu0
        %v1923 = vadd.f32 0.0, %v1922
        %v1924 = vpop.f32.mrf.mxu0
        %v1925 = vadd.f32 0.0, %v1924
        %v1926 = vpop.f32.mrf.mxu0
        %v1927 = vadd.f32 0.0, %v1926
        %v1928 = vpop.f32.mrf.mxu0
        %v1929 = vadd.f32 0.0, %v1928
        %1930 = vmatprep.mubr.bf16.mxu0 0
        %1931 = vmatmul.mubr.bf16.gmra.mxu0 %v1749
        %v1932 = vpop.f32.mrf.mxu0
        %v1933 = vadd.f32 0.0, %v1932
        %v1934 = vpop.f32.mrf.mxu0
        %v1935 = vadd.f32 0.0, %v1934
        %v1936 = vpop.f32.mrf.mxu0
        %v1937 = vadd.f32 0.0, %v1936
        %v1938 = vpop.f32.mrf.mxu0
        %v1939 = vadd.f32 0.0, %v1938
        %1940 = vmatprep.mubr.bf16.mxu0 0
        %1941 = vmatmul.mubr.bf16.gmra.mxu0 %v1750
        %v1942 = vpop.f32.mrf.mxu0
        %v1943 = vadd.f32 0.0, %v1942
        %v1944 = vpop.f32.mrf.mxu0
        %v1945 = vadd.f32 0.0, %v1944
        %v1946 = vpop.f32.mrf.mxu0
        %v1947 = vadd.f32 0.0, %v1946
        %v1948 = vpop.f32.mrf.mxu0
        %v1949 = vadd.f32 0.0, %v1948
        %1950 = vmatprep.mubr.bf16.mxu0 0
        %1951 = vmatmul.mubr.bf16.gmra.mxu0 %v1751
        %v1952 = vpop.f32.mrf.mxu0
        %v1953 = vadd.f32 0.0, %v1952
        %v1954 = vpop.f32.mrf.mxu0
        %v1955 = vadd.f32 0.0, %v1954
        %v1956 = vpop.f32.mrf.mxu0
        %v1957 = vadd.f32 0.0, %v1956
        %v1958 = vpop.f32.mrf.mxu0
        %v1959 = vadd.f32 0.0, %v1958
        %1960 = vmatprep.mubr.bf16.mxu0 0
        %1961 = vmatmul.mubr.bf16.gmra.mxu0 %v1752
        %v1962 = vpop.f32.mrf.mxu0
        %v1963 = vadd.f32 0.0, %v1962
        %v1964 = vpop.f32.mrf.mxu0
        %v1965 = vadd.f32 0.0, %v1964
        %v1966 = vpop.f32.mrf.mxu0
        %v1967 = vadd.f32 0.0, %v1966
        %v1968 = vpop.f32.mrf.mxu0
        %v1969 = vadd.f32 0.0, %v1968
        %1970 = vmatprep.mubr.bf16.mxu0 0
        %1971 = vmatmul.mubr.bf16.gmra.mxu0 %v1753
        %v1972 = vpop.f32.mrf.mxu0
        %v1973 = vadd.f32 0.0, %v1972
        %v1974 = vpop.f32.mrf.mxu0
        %v1975 = vadd.f32 0.0, %v1974
        %v1976 = vpop.f32.mrf.mxu0
        %v1977 = vadd.f32 0.0, %v1976
        %v1978 = vpop.f32.mrf.mxu0
        %v1979 = vadd.f32 0.0, %v1978
        %1980 = vmatprep.mubr.bf16.mxu0 0
        %1981 = vmatmul.mubr.bf16.gmra.mxu0 %v1754
        %v1982 = vpop.f32.mrf.mxu0
        %v1983 = vadd.f32 0.0, %v1982
        %v1984 = vpop.f32.mrf.mxu0
        %v1985 = vadd.f32 0.0, %v1984
        %v1986 = vpop.f32.mrf.mxu0
        %v1987 = vadd.f32 0.0, %v1986
        %v1988 = vpop.f32.mrf.mxu0
        %v1989 = vadd.f32 0.0, %v1988
        %1990 = vmatprep.mubr.bf16.mxu0 0
        %1991 = vmatmul.mubr.bf16.gmra.mxu0 %v1755
        %v1992 = vpop.f32.mrf.mxu0
        %v1993 = vadd.f32 0.0, %v1992
        %v1994 = vpop.f32.mrf.mxu0
        %v1995 = vadd.f32 0.0, %v1994
        %v1996 = vpop.f32.mrf.mxu0
        %v1997 = vadd.f32 0.0, %v1996
        %v1998 = vpop.f32.mrf.mxu0
        %v1999 = vadd.f32 0.0, %v1998
        %2000 = vmatprep.mubr.bf16.mxu0 0
        %2001 = vmatmul.mubr.bf16.gmra.mxu0 %v1756
        %v2002 = vpop.f32.mrf.mxu0
        %v2003 = vadd.f32 0.0, %v2002
        %v2004 = vpop.f32.mrf.mxu0
        %v2005 = vadd.f32 0.0, %v2004
        %v2006 = vpop.f32.mrf.mxu0
        %v2007 = vadd.f32 0.0, %v2006
        %v2008 = vpop.f32.mrf.mxu0
        %v2009 = vadd.f32 0.0, %v2008
        %2010 = vmatprep.mubr.bf16.mxu0 0
        %2011 = vmatmul.mubr.bf16.gmra.mxu0 %v1757
        %v2012 = vpop.f32.mrf.mxu0
        %v2013 = vadd.f32 0.0, %v2012
        %v2014 = vpop.f32.mrf.mxu0
        %v2015 = vadd.f32 0.0, %v2014
        %v2016 = vpop.f32.mrf.mxu0
        %v2017 = vadd.f32 0.0, %v2016
        %v2018 = vpop.f32.mrf.mxu0
        %v2019 = vadd.f32 0.0, %v2018
        %2020 = vmatprep.mubr.bf16.mxu0 0
        %2021 = vmatmul.mubr.bf16.gmra.mxu0 %v1758
        %v2022 = vpop.f32.mrf.mxu0
        %v2023 = vadd.f32 0.0, %v2022
        %v2024 = vpop.f32.mrf.mxu0
        %v2025 = vadd.f32 0.0, %v2024
        %v2026 = vpop.f32.mrf.mxu0
        %v2027 = vadd.f32 0.0, %v2026
        %v2028 = vpop.f32.mrf.mxu0
        %v2029 = vadd.f32 0.0, %v2028
        %2030 = vmatprep.mubr.bf16.mxu0 0
        %2031 = vmatmul.mubr.bf16.gmra.mxu0 %v1759
        %v2032 = vpop.f32.mrf.mxu0
        %v2033 = vadd.f32 0.0, %v2032
        %v2034 = vpop.f32.mrf.mxu0
        %v2035 = vadd.f32 0.0, %v2034
        %v2036 = vpop.f32.mrf.mxu0
        %v2037 = vadd.f32 0.0, %v2036
        %v2038 = vpop.f32.mrf.mxu0
        %v2039 = vadd.f32 0.0, %v2038
        %2040 = vmatprep.mubr.bf16.mxu0 0
        %2041 = vmatmul.mubr.bf16.gmra.mxu0 %v1760
        %v2042 = vpop.f32.mrf.mxu0
        %v2043 = vadd.f32 0.0, %v2042
        %v2044 = vpop.f32.mrf.mxu0
        %v2045 = vadd.f32 0.0, %v2044
        %v2046 = vpop.f32.mrf.mxu0
        %v2047 = vadd.f32 0.0, %v2046
        %v2048 = vpop.f32.mrf.mxu0
        %v2049 = vadd.f32 0.0, %v2048
        %2050 = vdwg.mxu0
        %v2051 = vadd.f32 %v1649, %v1893
        %v2052 = vadd.f32 %v1650, %v1895
        %v2053 = vadd.f32 %v1651, %v1897
        %v2054 = vadd.f32 %v1652, %v1899
        %v2055 = vadd.f32 %v1653, %v1903
        %v2056 = vadd.f32 %v1654, %v1905
        %v2057 = vadd.f32 %v1655, %v1907
        %v2058 = vadd.f32 %v1656, %v1909
        %v2059 = vadd.f32 %v1657, %v1913
        %v2060 = vadd.f32 %v1658, %v1915
        %v2061 = vadd.f32 %v1659, %v1917
        %v2062 = vadd.f32 %v1660, %v1919
        %v2063 = vadd.f32 %v1661, %v1923
        %v2064 = vadd.f32 %v1662, %v1925
        %v2065 = vadd.f32 %v1663, %v1927
        %v2066 = vadd.f32 %v1664, %v1929
        %v2067 = vadd.f32 %v1665, %v1933
        %v2068 = vadd.f32 %v1666, %v1935
        %v2069 = vadd.f32 %v1667, %v1937
        %v2070 = vadd.f32 %v1668, %v1939
        %v2071 = vadd.f32 %v1669, %v1943
        %v2072 = vadd.f32 %v1670, %v1945
        %v2073 = vadd.f32 %v1671, %v1947
        %v2074 = vadd.f32 %v1672, %v1949
        %v2075 = vadd.f32 %v1673, %v1953
        %v2076 = vadd.f32 %v1674, %v1955
        %v2077 = vadd.f32 %v1675, %v1957
        %v2078 = vadd.f32 %v1676, %v1959
        %v2079 = vadd.f32 %v1677, %v1963
        %v2080 = vadd.f32 %v1678, %v1965
        %v2081 = vadd.f32 %v1679, %v1967
        %v2082 = vadd.f32 %v1680, %v1969
        %v2083 = vadd.f32 %v1681, %v1973
        %v2084 = vadd.f32 %v1682, %v1975
        %v2085 = vadd.f32 %v1683, %v1977
        %v2086 = vadd.f32 %v1684, %v1979
        %v2087 = vadd.f32 %v1685, %v1983
        %v2088 = vadd.f32 %v1686, %v1985
        %v2089 = vadd.f32 %v1687, %v1987
        %v2090 = vadd.f32 %v1688, %v1989
        %v2091 = vadd.f32 %v1689, %v1993
        %v2092 = vadd.f32 %v1690, %v1995
        %v2093 = vadd.f32 %v1691, %v1997
        %v2094 = vadd.f32 %v1692, %v1999
        %v2095 = vadd.f32 %v1693, %v2003
        %v2096 = vadd.f32 %v1694, %v2005
        %v2097 = vadd.f32 %v1695, %v2007
        %v2098 = vadd.f32 %v1696, %v2009
        %v2099 = vadd.f32 %v1697, %v2013
        %v2100 = vadd.f32 %v1698, %v2015
        %v2101 = vadd.f32 %v1699, %v2017
        %v2102 = vadd.f32 %v1700, %v2019
        %v2103 = vadd.f32 %v1701, %v2023
        %v2104 = vadd.f32 %v1702, %v2025
        %v2105 = vadd.f32 %v1703, %v2027
        %v2106 = vadd.f32 %v1704, %v2029
        %v2107 = vadd.f32 %v1705, %v2033
        %v2108 = vadd.f32 %v1706, %v2035
        %v2109 = vadd.f32 %v1707, %v2037
        %v2110 = vadd.f32 %v1708, %v2039
        %v2111 = vadd.f32 %v1709, %v2043
        %v2112 = vadd.f32 %v1710, %v2045
        %v2113 = vadd.f32 %v1711, %v2047
        %v2114 = vadd.f32 %v1712, %v2049
        %v2115 = vld [vmem:[%s493 + $0x4] sm:$0xff]
        %v2116 = vld [vmem:[%s493 + $0xc] sm:$0xff]
        %v2117 = vld [vmem:[%s493 + $0x14] sm:$0xff]
        %v2118 = vld [vmem:[%s493 + $0x1c] sm:$0xff]
        %v2119 = vld [vmem:[%s493 + $0x24] sm:$0xff]
        %v2120 = vld [vmem:[%s493 + $0x2c] sm:$0xff]
        %v2121 = vld [vmem:[%s493 + $0x34] sm:$0xff]
        %v2122 = vld [vmem:[%s493 + $0x3c] sm:$0xff]
        %v2123 = vld [vmem:[%s493 + $0x44] sm:$0xff]
        %v2124 = vld [vmem:[%s493 + $0x4c] sm:$0xff]
        %v2125 = vld [vmem:[%s493 + $0x54] sm:$0xff]
        %v2126 = vld [vmem:[%s493 + $0x5c] sm:$0xff]
        %v2127 = vld [vmem:[%s493 + $0x64] sm:$0xff]
        %v2128 = vld [vmem:[%s493 + $0x6c] sm:$0xff]
        %v2129 = vld [vmem:[%s493 + $0x74] sm:$0xff]
        %v2130 = vld [vmem:[%s493 + $0x7c] sm:$0xff]
        %v2131 = vld [vmem:[%s493 + $0x84] sm:$0xff]
        %v2132 = vld [vmem:[%s493 + $0x8c] sm:$0xff]
        %v2133 = vld [vmem:[%s493 + $0x94] sm:$0xff]
        %v2134 = vld [vmem:[%s493 + $0x9c] sm:$0xff]
        %v2135 = vld [vmem:[%s493 + $0xa4] sm:$0xff]
        %v2136 = vld [vmem:[%s493 + $0xac] sm:$0xff]
        %v2137 = vld [vmem:[%s493 + $0xb4] sm:$0xff]
        %v2138 = vld [vmem:[%s493 + $0xbc] sm:$0xff]
        %v2139 = vld [vmem:[%s493 + $0xc4] sm:$0xff]
        %v2140 = vld [vmem:[%s493 + $0xcc] sm:$0xff]
        %v2141 = vld [vmem:[%s493 + $0xd4] sm:$0xff]
        %v2142 = vld [vmem:[%s493 + $0xdc] sm:$0xff]
        %v2143 = vld [vmem:[%s493 + $0xe4] sm:$0xff]
        %v2144 = vld [vmem:[%s493 + $0xec] sm:$0xff]
        %v2145 = vld [vmem:[%s493 + $0xf4] sm:$0xff]
        %v2146 = vld [vmem:[%s493 + $0xfc] sm:$0xf]
        %v2147 = vpack.c.bf16 %v2116, %v2115
        %v2148 = vpack.c.bf16 %v2118, %v2117
        %v2149 = vpack.c.bf16 %v2120, %v2119
        %v2150 = vpack.c.bf16 %v2122, %v2121
        %v2151 = vpack.c.bf16 %v2124, %v2123
        %v2152 = vpack.c.bf16 %v2126, %v2125
        %v2153 = vpack.c.bf16 %v2128, %v2127
        %v2154 = vpack.c.bf16 %v2130, %v2129
        %v2155 = vpack.c.bf16 %v2132, %v2131
        %v2156 = vpack.c.bf16 %v2134, %v2133
        %v2157 = vpack.c.bf16 %v2136, %v2135
        %v2158 = vpack.c.bf16 %v2138, %v2137
        %v2159 = vpack.c.bf16 %v2140, %v2139
        %v2160 = vpack.c.bf16 %v2142, %v2141
        %v2161 = vpack.c.bf16 %v2144, %v2143
        %v2162 = vpack.c.bf16 %v2146, %v2145
        %s2163 = scalar_lea.vmem %s1, 512
        %v2164 = vld [vmem:[%s2163] sm:$0xff]
        %v2165 = vld [vmem:[%s2163 + $0x8] sm:$0xff]
        %v2166 = vld [vmem:[%s2163 + $0x10] sm:$0xff]
        %v2167 = vld [vmem:[%s2163 + $0x18] sm:$0xff]
        %v2168 = vld [vmem:[%s2163 + $0x20] sm:$0xff]
        %v2169 = vld [vmem:[%s2163 + $0x28] sm:$0xff]
        %v2170 = vld [vmem:[%s2163 + $0x30] sm:$0xff]
        %v2171 = vld [vmem:[%s2163 + $0x38] sm:$0xff]
        %v2172 = vld [vmem:[%s2163 + $0x40] sm:$0xff]
        %v2173 = vld [vmem:[%s2163 + $0x48] sm:$0xff]
        %v2174 = vld [vmem:[%s2163 + $0x50] sm:$0xff]
        %v2175 = vld [vmem:[%s2163 + $0x58] sm:$0xff]
        %v2176 = vld [vmem:[%s2163 + $0x60] sm:$0xff]
        %v2177 = vld [vmem:[%s2163 + $0x68] sm:$0xff]
        %v2178 = vld [vmem:[%s2163 + $0x70] sm:$0xff]
        %v2179 = vld [vmem:[%s2163 + $0x78] sm:$0xff]
        %v2196 = vunpack.c.l.b16 %v2164
        %v2197 = vunpack.c.h.b16 %v2164
        %v2198 = vunpack.c.l.b16 %v2165
        %v2199 = vunpack.c.h.b16 %v2165
        %v2200 = vunpack.c.l.b16 %v2166
        %v2201 = vunpack.c.h.b16 %v2166
        %v2202 = vunpack.c.l.b16 %v2167
        %v2203 = vunpack.c.h.b16 %v2167
        %v2204 = vunpack.c.l.b16 %v2168
        %v2205 = vunpack.c.h.b16 %v2168
        %v2206 = vunpack.c.l.b16 %v2169
        %v2207 = vunpack.c.h.b16 %v2169
        %v2208 = vunpack.c.l.b16 %v2170
        %v2209 = vunpack.c.h.b16 %v2170
        %v2210 = vunpack.c.l.b16 %v2171
        %v2211 = vunpack.c.h.b16 %v2171
        %v2212 = vunpack.c.l.b16 %v2172
        %v2213 = vunpack.c.h.b16 %v2172
        %v2214 = vunpack.c.l.b16 %v2173
        %v2215 = vunpack.c.h.b16 %v2173
        %v2216 = vunpack.c.l.b16 %v2174
        %v2217 = vunpack.c.h.b16 %v2174
        %v2218 = vunpack.c.l.b16 %v2175
        %v2219 = vunpack.c.h.b16 %v2175
        %v2220 = vunpack.c.l.b16 %v2176
        %v2221 = vunpack.c.h.b16 %v2176
        %v2222 = vunpack.c.l.b16 %v2177
        %v2223 = vunpack.c.h.b16 %v2177
        %v2224 = vunpack.c.l.b16 %v2178
        %v2225 = vunpack.c.h.b16 %v2178
        %v2226 = vunpack.c.l.b16 %v2179
        %v2227 = vunpack.c.h.b16 %v2179
        %v2228 = vpack.c.b16 %v2198, %v2196
        %v2229 = vpack.c.b16 %v2199, %v2197
        %v2230 = vpack.c.b16 %v2202, %v2200
        %v2231 = vpack.c.b16 %v2203, %v2201
        %v2232 = vpack.c.b16 %v2206, %v2204
        %v2233 = vpack.c.b16 %v2207, %v2205
        %v2234 = vpack.c.b16 %v2210, %v2208
        %v2235 = vpack.c.b16 %v2211, %v2209
        %v2236 = vpack.c.b16 %v2214, %v2212
        %v2237 = vpack.c.b16 %v2215, %v2213
        %v2238 = vpack.c.b16 %v2218, %v2216
        %v2239 = vpack.c.b16 %v2219, %v2217
        %v2240 = vpack.c.b16 %v2222, %v2220
        %v2241 = vpack.c.b16 %v2223, %v2221
        %v2242 = vpack.c.b16 %v2226, %v2224
        %v2243 = vpack.c.b16 %v2227, %v2225
        %2260 = vmatprep.subr.bf16.mxu0 %v2243
        %2261 = vmatpush1.bf16.msra.mxu0 %v2242
        %2262 = vmatprep.subr.bf16.mxu0 %v2241
        %2263 = vmatpush1.bf16.msra.mxu0 %v2240
        %2264 = vmatprep.subr.bf16.mxu0 %v2239
        %2265 = vmatpush1.bf16.msra.mxu0 %v2238
        %2266 = vmatprep.subr.bf16.mxu0 %v2237
        %2267 = vmatpush1.bf16.msra.mxu0 %v2236
        %2268 = vmatprep.subr.bf16.mxu0 %v2235
        %2269 = vmatpush1.bf16.msra.mxu0 %v2234
        %2270 = vmatprep.subr.bf16.mxu0 %v2233
        %2271 = vmatpush1.bf16.msra.mxu0 %v2232
        %2272 = vmatprep.subr.bf16.mxu0 %v2231
        %2273 = vmatpush1.bf16.msra.mxu0 %v2230
        %2274 = vmatprep.subr.bf16.mxu0 %v2229
        %2275 = vmatpush1.bf16.msra.mxu0 %v2228
        %2276 = vmatprep.subr.bf16.mxu0 0
        %2277 = vmatpush2.bf16.msra.mxu0 0
        %2278 = vmatprep.subr.bf16.mxu0 0
        %2279 = vmatpush2.bf16.msra.mxu0 0
        %2280 = vmatprep.subr.bf16.mxu0 0
        %2281 = vmatpush2.bf16.msra.mxu0 0
        %2282 = vmatprep.subr.bf16.mxu0 0
        %2283 = vmatpush2.bf16.msra.mxu0 0
        %2284 = vmatprep.subr.bf16.mxu0 0
        %2285 = vmatpush2.bf16.msra.mxu0 0
        %2286 = vmatprep.subr.bf16.mxu0 0
        %2287 = vmatpush2.bf16.msra.mxu0 0
        %2288 = vmatprep.subr.bf16.mxu0 0
        %2289 = vmatpush2.bf16.msra.mxu0 0
        %2290 = vmatprep.subr.bf16.mxu0 0
        %2291 = vmatpush2.bf16.msra.mxu0 0
        %2292 = vmatprep.mubr.bf16.mxu0 0
        %2293 = vmatmul.mubr.bf16.gmra.mxu0 %v2147
        %v2294 = vpop.f32.mrf.mxu0
        %v2295 = vadd.f32 0.0, %v2294
        %v2296 = vpop.f32.mrf.mxu0
        %v2297 = vadd.f32 0.0, %v2296
        %v2298 = vpop.f32.mrf.mxu0
        %v2299 = vadd.f32 0.0, %v2298
        %v2300 = vpop.f32.mrf.mxu0
        %v2301 = vadd.f32 0.0, %v2300
        %2302 = vmatprep.mubr.bf16.mxu0 0
        %2303 = vmatmul.mubr.bf16.gmra.mxu0 %v2148
        %v2304 = vpop.f32.mrf.mxu0
        %v2305 = vadd.f32 0.0, %v2304
        %v2306 = vpop.f32.mrf.mxu0
        %v2307 = vadd.f32 0.0, %v2306
        %v2308 = vpop.f32.mrf.mxu0
        %v2309 = vadd.f32 0.0, %v2308
        %v2310 = vpop.f32.mrf.mxu0
        %v2311 = vadd.f32 0.0, %v2310
        %2312 = vmatprep.mubr.bf16.mxu0 0
        %2313 = vmatmul.mubr.bf16.gmra.mxu0 %v2149
        %v2314 = vpop.f32.mrf.mxu0
        %v2315 = vadd.f32 0.0, %v2314
        %v2316 = vpop.f32.mrf.mxu0
        %v2317 = vadd.f32 0.0, %v2316
        %v2318 = vpop.f32.mrf.mxu0
        %v2319 = vadd.f32 0.0, %v2318
        %v2320 = vpop.f32.mrf.mxu0
        %v2321 = vadd.f32 0.0, %v2320
        %2322 = vmatprep.mubr.bf16.mxu0 0
        %2323 = vmatmul.mubr.bf16.gmra.mxu0 %v2150
        %v2324 = vpop.f32.mrf.mxu0
        %v2325 = vadd.f32 0.0, %v2324
        %v2326 = vpop.f32.mrf.mxu0
        %v2327 = vadd.f32 0.0, %v2326
        %v2328 = vpop.f32.mrf.mxu0
        %v2329 = vadd.f32 0.0, %v2328
        %v2330 = vpop.f32.mrf.mxu0
        %v2331 = vadd.f32 0.0, %v2330
        %2332 = vmatprep.mubr.bf16.mxu0 0
        %2333 = vmatmul.mubr.bf16.gmra.mxu0 %v2151
        %v2334 = vpop.f32.mrf.mxu0
        %v2335 = vadd.f32 0.0, %v2334
        %v2336 = vpop.f32.mrf.mxu0
        %v2337 = vadd.f32 0.0, %v2336
        %v2338 = vpop.f32.mrf.mxu0
        %v2339 = vadd.f32 0.0, %v2338
        %v2340 = vpop.f32.mrf.mxu0
        %v2341 = vadd.f32 0.0, %v2340
        %2342 = vmatprep.mubr.bf16.mxu0 0
        %2343 = vmatmul.mubr.bf16.gmra.mxu0 %v2152
        %v2344 = vpop.f32.mrf.mxu0
        %v2345 = vadd.f32 0.0, %v2344
        %v2346 = vpop.f32.mrf.mxu0
        %v2347 = vadd.f32 0.0, %v2346
        %v2348 = vpop.f32.mrf.mxu0
        %v2349 = vadd.f32 0.0, %v2348
        %v2350 = vpop.f32.mrf.mxu0
        %v2351 = vadd.f32 0.0, %v2350
        %2352 = vmatprep.mubr.bf16.mxu0 0
        %2353 = vmatmul.mubr.bf16.gmra.mxu0 %v2153
        %v2354 = vpop.f32.mrf.mxu0
        %v2355 = vadd.f32 0.0, %v2354
        %v2356 = vpop.f32.mrf.mxu0
        %v2357 = vadd.f32 0.0, %v2356
        %v2358 = vpop.f32.mrf.mxu0
        %v2359 = vadd.f32 0.0, %v2358
        %v2360 = vpop.f32.mrf.mxu0
        %v2361 = vadd.f32 0.0, %v2360
        %2362 = vmatprep.mubr.bf16.mxu0 0
        %2363 = vmatmul.mubr.bf16.gmra.mxu0 %v2154
        %v2364 = vpop.f32.mrf.mxu0
        %v2365 = vadd.f32 0.0, %v2364
        %v2366 = vpop.f32.mrf.mxu0
        %v2367 = vadd.f32 0.0, %v2366
        %v2368 = vpop.f32.mrf.mxu0
        %v2369 = vadd.f32 0.0, %v2368
        %v2370 = vpop.f32.mrf.mxu0
        %v2371 = vadd.f32 0.0, %v2370
        %2372 = vmatprep.mubr.bf16.mxu0 0
        %2373 = vmatmul.mubr.bf16.gmra.mxu0 %v2155
        %v2374 = vpop.f32.mrf.mxu0
        %v2375 = vadd.f32 0.0, %v2374
        %v2376 = vpop.f32.mrf.mxu0
        %v2377 = vadd.f32 0.0, %v2376
        %v2378 = vpop.f32.mrf.mxu0
        %v2379 = vadd.f32 0.0, %v2378
        %v2380 = vpop.f32.mrf.mxu0
        %v2381 = vadd.f32 0.0, %v2380
        %2382 = vmatprep.mubr.bf16.mxu0 0
        %2383 = vmatmul.mubr.bf16.gmra.mxu0 %v2156
        %v2384 = vpop.f32.mrf.mxu0
        %v2385 = vadd.f32 0.0, %v2384
        %v2386 = vpop.f32.mrf.mxu0
        %v2387 = vadd.f32 0.0, %v2386
        %v2388 = vpop.f32.mrf.mxu0
        %v2389 = vadd.f32 0.0, %v2388
        %v2390 = vpop.f32.mrf.mxu0
        %v2391 = vadd.f32 0.0, %v2390
        %2392 = vmatprep.mubr.bf16.mxu0 0
        %2393 = vmatmul.mubr.bf16.gmra.mxu0 %v2157
        %v2394 = vpop.f32.mrf.mxu0
        %v2395 = vadd.f32 0.0, %v2394
        %v2396 = vpop.f32.mrf.mxu0
        %v2397 = vadd.f32 0.0, %v2396
        %v2398 = vpop.f32.mrf.mxu0
        %v2399 = vadd.f32 0.0, %v2398
        %v2400 = vpop.f32.mrf.mxu0
        %v2401 = vadd.f32 0.0, %v2400
        %2402 = vmatprep.mubr.bf16.mxu0 0
        %2403 = vmatmul.mubr.bf16.gmra.mxu0 %v2158
        %v2404 = vpop.f32.mrf.mxu0
        %v2405 = vadd.f32 0.0, %v2404
        %v2406 = vpop.f32.mrf.mxu0
        %v2407 = vadd.f32 0.0, %v2406
        %v2408 = vpop.f32.mrf.mxu0
        %v2409 = vadd.f32 0.0, %v2408
        %v2410 = vpop.f32.mrf.mxu0
        %v2411 = vadd.f32 0.0, %v2410
        %2412 = vmatprep.mubr.bf16.mxu0 0
        %2413 = vmatmul.mubr.bf16.gmra.mxu0 %v2159
        %v2414 = vpop.f32.mrf.mxu0
        %v2415 = vadd.f32 0.0, %v2414
        %v2416 = vpop.f32.mrf.mxu0
        %v2417 = vadd.f32 0.0, %v2416
        %v2418 = vpop.f32.mrf.mxu0
        %v2419 = vadd.f32 0.0, %v2418
        %v2420 = vpop.f32.mrf.mxu0
        %v2421 = vadd.f32 0.0, %v2420
        %2422 = vmatprep.mubr.bf16.mxu0 0
        %2423 = vmatmul.mubr.bf16.gmra.mxu0 %v2160
        %v2424 = vpop.f32.mrf.mxu0
        %v2425 = vadd.f32 0.0, %v2424
        %v2426 = vpop.f32.mrf.mxu0
        %v2427 = vadd.f32 0.0, %v2426
        %v2428 = vpop.f32.mrf.mxu0
        %v2429 = vadd.f32 0.0, %v2428
        %v2430 = vpop.f32.mrf.mxu0
        %v2431 = vadd.f32 0.0, %v2430
        %2432 = vmatprep.mubr.bf16.mxu0 0
        %2433 = vmatmul.mubr.bf16.gmra.mxu0 %v2161
        %v2434 = vpop.f32.mrf.mxu0
        %v2435 = vadd.f32 0.0, %v2434
        %v2436 = vpop.f32.mrf.mxu0
        %v2437 = vadd.f32 0.0, %v2436
        %v2438 = vpop.f32.mrf.mxu0
        %v2439 = vadd.f32 0.0, %v2438
        %v2440 = vpop.f32.mrf.mxu0
        %v2441 = vadd.f32 0.0, %v2440
        %2442 = vmatprep.mubr.bf16.mxu0 0
        %2443 = vmatmul.mubr.bf16.gmra.mxu0 %v2162
        %v2444 = vpop.f32.mrf.mxu0
        %v2445 = vadd.f32 0.0, %v2444
        %v2446 = vpop.f32.mrf.mxu0
        %v2447 = vadd.f32 0.0, %v2446
        %v2448 = vpop.f32.mrf.mxu0
        %v2449 = vadd.f32 0.0, %v2448
        %v2450 = vpop.f32.mrf.mxu0
        %v2451 = vadd.f32 0.0, %v2450
        %2452 = vdwg.mxu0
        %v2453 = vadd.f32 %v2051, %v2295
        %v2454 = vadd.f32 %v2052, %v2297
        %v2455 = vadd.f32 %v2053, %v2299
        %v2456 = vadd.f32 %v2054, %v2301
        %v2457 = vadd.f32 %v2055, %v2305
        %v2458 = vadd.f32 %v2056, %v2307
        %v2459 = vadd.f32 %v2057, %v2309
        %v2460 = vadd.f32 %v2058, %v2311
        %v2461 = vadd.f32 %v2059, %v2315
        %v2462 = vadd.f32 %v2060, %v2317
        %v2463 = vadd.f32 %v2061, %v2319
        %v2464 = vadd.f32 %v2062, %v2321
        %v2465 = vadd.f32 %v2063, %v2325
        %v2466 = vadd.f32 %v2064, %v2327
        %v2467 = vadd.f32 %v2065, %v2329
        %v2468 = vadd.f32 %v2066, %v2331
        %v2469 = vadd.f32 %v2067, %v2335
        %v2470 = vadd.f32 %v2068, %v2337
        %v2471 = vadd.f32 %v2069, %v2339
        %v2472 = vadd.f32 %v2070, %v2341
        %v2473 = vadd.f32 %v2071, %v2345
        %v2474 = vadd.f32 %v2072, %v2347
        %v2475 = vadd.f32 %v2073, %v2349
        %v2476 = vadd.f32 %v2074, %v2351
        %v2477 = vadd.f32 %v2075, %v2355
        %v2478 = vadd.f32 %v2076, %v2357
        %v2479 = vadd.f32 %v2077, %v2359
        %v2480 = vadd.f32 %v2078, %v2361
        %v2481 = vadd.f32 %v2079, %v2365
        %v2482 = vadd.f32 %v2080, %v2367
        %v2483 = vadd.f32 %v2081, %v2369
        %v2484 = vadd.f32 %v2082, %v2371
        %v2485 = vadd.f32 %v2083, %v2375
        %v2486 = vadd.f32 %v2084, %v2377
        %v2487 = vadd.f32 %v2085, %v2379
        %v2488 = vadd.f32 %v2086, %v2381
        %v2489 = vadd.f32 %v2087, %v2385
        %v2490 = vadd.f32 %v2088, %v2387
        %v2491 = vadd.f32 %v2089, %v2389
        %v2492 = vadd.f32 %v2090, %v2391
        %v2493 = vadd.f32 %v2091, %v2395
        %v2494 = vadd.f32 %v2092, %v2397
        %v2495 = vadd.f32 %v2093, %v2399
        %v2496 = vadd.f32 %v2094, %v2401
        %v2497 = vadd.f32 %v2095, %v2405
        %v2498 = vadd.f32 %v2096, %v2407
        %v2499 = vadd.f32 %v2097, %v2409
        %v2500 = vadd.f32 %v2098, %v2411
        %v2501 = vadd.f32 %v2099, %v2415
        %v2502 = vadd.f32 %v2100, %v2417
        %v2503 = vadd.f32 %v2101, %v2419
        %v2504 = vadd.f32 %v2102, %v2421
        %v2505 = vadd.f32 %v2103, %v2425
        %v2506 = vadd.f32 %v2104, %v2427
        %v2507 = vadd.f32 %v2105, %v2429
        %v2508 = vadd.f32 %v2106, %v2431
        %v2509 = vadd.f32 %v2107, %v2435
        %v2510 = vadd.f32 %v2108, %v2437
        %v2511 = vadd.f32 %v2109, %v2439
        %v2512 = vadd.f32 %v2110, %v2441
        %v2513 = vadd.f32 %v2111, %v2445
        %v2514 = vadd.f32 %v2112, %v2447
        %v2515 = vadd.f32 %v2113, %v2449
        %v2516 = vadd.f32 %v2114, %v2451
        %v2517 = vmax.f32 %v2453, 0.0
        %v2518 = vmax.f32 %v2454, 0.0
        %v2519 = vmax.f32 %v2455, 0.0
        %v2520 = vmax.f32 %v2456, 0.0
        %v2521 = vmax.f32 %v2457, 0.0
        %v2522 = vmax.f32 %v2458, 0.0
        %v2523 = vmax.f32 %v2459, 0.0
        %v2524 = vmax.f32 %v2460, 0.0
        %v2525 = vmax.f32 %v2461, 0.0
        %v2526 = vmax.f32 %v2462, 0.0
        %v2527 = vmax.f32 %v2463, 0.0
        %v2528 = vmax.f32 %v2464, 0.0
        %v2529 = vmax.f32 %v2465, 0.0
        %v2530 = vmax.f32 %v2466, 0.0
        %v2531 = vmax.f32 %v2467, 0.0
        %v2532 = vmax.f32 %v2468, 0.0
        %v2533 = vmax.f32 %v2469, 0.0
        %v2534 = vmax.f32 %v2470, 0.0
        %v2535 = vmax.f32 %v2471, 0.0
        %v2536 = vmax.f32 %v2472, 0.0
        %v2537 = vmax.f32 %v2473, 0.0
        %v2538 = vmax.f32 %v2474, 0.0
        %v2539 = vmax.f32 %v2475, 0.0
        %v2540 = vmax.f32 %v2476, 0.0
        %v2541 = vmax.f32 %v2477, 0.0
        %v2542 = vmax.f32 %v2478, 0.0
        %v2543 = vmax.f32 %v2479, 0.0
        %v2544 = vmax.f32 %v2480, 0.0
        %v2545 = vmax.f32 %v2481, 0.0
        %v2546 = vmax.f32 %v2482, 0.0
        %v2547 = vmax.f32 %v2483, 0.0
        %v2548 = vmax.f32 %v2484, 0.0
        %v2549 = vmax.f32 %v2485, 0.0
        %v2550 = vmax.f32 %v2486, 0.0
        %v2551 = vmax.f32 %v2487, 0.0
        %v2552 = vmax.f32 %v2488, 0.0
        %v2553 = vmax.f32 %v2489, 0.0
        %v2554 = vmax.f32 %v2490, 0.0
        %v2555 = vmax.f32 %v2491, 0.0
        %v2556 = vmax.f32 %v2492, 0.0
        %v2557 = vmax.f32 %v2493, 0.0
        %v2558 = vmax.f32 %v2494, 0.0
        %v2559 = vmax.f32 %v2495, 0.0
        %v2560 = vmax.f32 %v2496, 0.0
        %v2561 = vmax.f32 %v2497, 0.0
        %v2562 = vmax.f32 %v2498, 0.0
        %v2563 = vmax.f32 %v2499, 0.0
        %v2564 = vmax.f32 %v2500, 0.0
        %v2565 = vmax.f32 %v2501, 0.0
        %v2566 = vmax.f32 %v2502, 0.0
        %v2567 = vmax.f32 %v2503, 0.0
        %v2568 = vmax.f32 %v2504, 0.0
        %v2569 = vmax.f32 %v2505, 0.0
        %v2570 = vmax.f32 %v2506, 0.0
        %v2571 = vmax.f32 %v2507, 0.0
        %v2572 = vmax.f32 %v2508, 0.0
        %v2573 = vmax.f32 %v2509, 0.0
        %v2574 = vmax.f32 %v2510, 0.0
        %v2575 = vmax.f32 %v2511, 0.0
        %v2576 = vmax.f32 %v2512, 0.0
        %v2577 = vmax.f32 %v2513, 0.0
        %v2578 = vmax.f32 %v2514, 0.0
        %v2579 = vmax.f32 %v2515, 0.0
        %v2580 = vmax.f32 %v2516, 0.0
        %v2581 = vpack.c.bf16 %v2519, %v2517
        %v2582 = vpack.c.bf16 %v2520, %v2518
        %v2583 = vpack.c.bf16 %v2523, %v2521
        %v2584 = vpack.c.bf16 %v2524, %v2522
        %v2585 = vpack.c.bf16 %v2527, %v2525
        %v2586 = vpack.c.bf16 %v2528, %v2526
        %v2587 = vpack.c.bf16 %v2531, %v2529
        %v2588 = vpack.c.bf16 %v2532, %v2530
        %v2589 = vpack.c.bf16 %v2535, %v2533
        %v2590 = vpack.c.bf16 %v2536, %v2534
        %v2591 = vpack.c.bf16 %v2539, %v2537
        %v2592 = vpack.c.bf16 %v2540, %v2538
        %v2593 = vpack.c.bf16 %v2543, %v2541
        %v2594 = vpack.c.bf16 %v2544, %v2542
        %v2595 = vpack.c.bf16 %v2547, %v2545
        %v2596 = vpack.c.bf16 %v2548, %v2546
        %v2597 = vpack.c.bf16 %v2551, %v2549
        %v2598 = vpack.c.bf16 %v2552, %v2550
        %v2599 = vpack.c.bf16 %v2555, %v2553
        %v2600 = vpack.c.bf16 %v2556, %v2554
        %v2601 = vpack.c.bf16 %v2559, %v2557
        %v2602 = vpack.c.bf16 %v2560, %v2558
        %v2603 = vpack.c.bf16 %v2563, %v2561
        %v2604 = vpack.c.bf16 %v2564, %v2562
        %v2605 = vpack.c.bf16 %v2567, %v2565
        %v2606 = vpack.c.bf16 %v2568, %v2566
        %v2607 = vpack.c.bf16 %v2571, %v2569
        %v2608 = vpack.c.bf16 %v2572, %v2570
        %v2609 = vpack.c.bf16 %v2575, %v2573
        %v2610 = vpack.c.bf16 %v2576, %v2574
        %v2611 = vpack.c.bf16 %v2579, %v2577
        %v2612 = vpack.c.bf16 %v2580, %v2578
        %v2613 = vld [vmem:[%s5] sm:$0xff]
        %v2614 = vld [vmem:[%s5 + $0x8] sm:$0xff]
        %v2615 = vld [vmem:[%s5 + $0x10] sm:$0xff]
        %v2616 = vld [vmem:[%s5 + $0x18] sm:$0xff]
        %v2617 = vld [vmem:[%s5 + $0x20] sm:$0xff]
        %v2618 = vld [vmem:[%s5 + $0x28] sm:$0xff]
        %v2619 = vld [vmem:[%s5 + $0x30] sm:$0xff]
        %v2620 = vld [vmem:[%s5 + $0x38] sm:$0xff]
        %v2621 = vld [vmem:[%s5 + $0x40] sm:$0xff]
        %v2622 = vld [vmem:[%s5 + $0x48] sm:$0xff]
        %v2623 = vld [vmem:[%s5 + $0x50] sm:$0xff]
        %v2624 = vld [vmem:[%s5 + $0x58] sm:$0xff]
        %v2625 = vld [vmem:[%s5 + $0x60] sm:$0xff]
        %v2626 = vld [vmem:[%s5 + $0x68] sm:$0xff]
        %v2641 = vunpack.c.l.b16 %v2613
        %v2642 = vunpack.c.h.b16 %v2613
        %v2643 = vunpack.c.l.b16 %v2614
        %v2644 = vunpack.c.h.b16 %v2614
        %v2645 = vunpack.c.l.b16 %v2615
        %v2646 = vunpack.c.h.b16 %v2615
        %v2647 = vunpack.c.l.b16 %v2616
        %v2648 = vunpack.c.h.b16 %v2616
        %v2649 = vunpack.c.l.b16 %v2617
        %v2650 = vunpack.c.h.b16 %v2617
        %v2651 = vunpack.c.l.b16 %v2618
        %v2652 = vunpack.c.h.b16 %v2618
        %v2653 = vunpack.c.l.b16 %v2619
        %v2654 = vunpack.c.h.b16 %v2619
        %v2655 = vunpack.c.l.b16 %v2620
        %v2656 = vunpack.c.h.b16 %v2620
        %v2657 = vunpack.c.l.b16 %v2621
        %v2658 = vunpack.c.h.b16 %v2621
        %v2659 = vunpack.c.l.b16 %v2622
        %v2660 = vunpack.c.h.b16 %v2622
        %v2661 = vunpack.c.l.b16 %v2623
        %v2662 = vunpack.c.h.b16 %v2623
        %v2663 = vunpack.c.l.b16 %v2624
        %v2664 = vunpack.c.h.b16 %v2624
        %v2665 = vunpack.c.l.b16 %v2625
        %v2666 = vunpack.c.h.b16 %v2625
        %v2667 = vunpack.c.l.b16 %v2626
        %v2668 = vunpack.c.h.b16 %v2626
        %v2669 = vpack.c.b16 %v2643, %v2641
        %v2670 = vpack.c.b16 %v2644, %v2642
        %v2671 = vpack.c.b16 %v2647, %v2645
        %v2672 = vpack.c.b16 %v2648, %v2646
        %v2673 = vpack.c.b16 %v2651, %v2649
        %v2674 = vpack.c.b16 %v2652, %v2650
        %v2675 = vpack.c.b16 %v2655, %v2653
        %v2676 = vpack.c.b16 %v2656, %v2654
        %v2677 = vpack.c.b16 %v2659, %v2657
        %v2678 = vpack.c.b16 %v2660, %v2658
        %v2679 = vpack.c.b16 %v2663, %v2661
        %v2680 = vpack.c.b16 %v2664, %v2662
        %v2681 = vpack.c.b16 %v2667, %v2665
        %v2682 = vpack.c.b16 %v2668, %v2666
        %vm2690 = vcmask 1014784
        %v2692 = vsel %vm2690, %v2670, 0
        %v2695 = vsel %vm2690, %v2672, 0
        %v2698 = vsel %vm2690, %v2674, 0
        %v2701 = vsel %vm2690, %v2676, 0
        %v2704 = vsel %vm2690, %v2678, 0
        %v2707 = vsel %vm2690, %v2680, 0
        %v2710 = vsel %vm2690, %v2682, 0
        %vm2712 = vcmask 1045504
        %v2714 = vsel %vm2712, %v2611, 0
        %v2717 = vsel %vm2712, %v2612, 0
        %2719 = vmatprep.subr.bf16.mxu0 %v2596
        %2720 = vmatpush1.bf16.msra.mxu0 %v2595
        %2721 = vmatprep.subr.bf16.mxu0 %v2594
        %2722 = vmatpush1.bf16.msra.mxu0 %v2593
        %2723 = vmatprep.subr.bf16.mxu0 %v2592
        %2724 = vmatpush1.bf16.msra.mxu0 %v2591
        %2725 = vmatprep.subr.bf16.mxu0 %v2590
        %2726 = vmatpush1.bf16.msra.mxu0 %v2589
        %2727 = vmatprep.subr.bf16.mxu0 %v2588
        %2728 = vmatpush1.bf16.msra.mxu0 %v2587
        %2729 = vmatprep.subr.bf16.mxu0 %v2586
        %2730 = vmatpush1.bf16.msra.mxu0 %v2585
        %2731 = vmatprep.subr.bf16.mxu0 %v2584
        %2732 = vmatpush1.bf16.msra.mxu0 %v2583
        %2733 = vmatprep.subr.bf16.mxu0 %v2582
        %2734 = vmatpush1.bf16.msra.mxu0 %v2581
        %2735 = vmatprep.subr.bf16.mxu0 %v2717
        %2736 = vmatpush2.bf16.msra.mxu0 %v2714
        %2737 = vmatprep.subr.bf16.mxu0 %v2610
        %2738 = vmatpush2.bf16.msra.mxu0 %v2609
        %2739 = vmatprep.subr.bf16.mxu0 %v2608
        %2740 = vmatpush2.bf16.msra.mxu0 %v2607
        %2741 = vmatprep.subr.bf16.mxu0 %v2606
        %2742 = vmatpush2.bf16.msra.mxu0 %v2605
        %2743 = vmatprep.subr.bf16.mxu0 %v2604
        %2744 = vmatpush2.bf16.msra.mxu0 %v2603
        %2745 = vmatprep.subr.bf16.mxu0 %v2602
        %2746 = vmatpush2.bf16.msra.mxu0 %v2601
        %2747 = vmatprep.subr.bf16.mxu0 %v2600
        %2748 = vmatpush2.bf16.msra.mxu0 %v2599
        %2749 = vmatprep.subr.bf16.mxu0 %v2598
        %2750 = vmatpush2.bf16.msra.mxu0 %v2597
        %2751 = vmatprep.mubr.bf16.mxu0 %v2692
        %2752 = vmatmul.mubr.bf16.gmra.mxu0 %v2669
        %v2753 = vpop.f32.mrf.mxu0
        %v2754 = vadd.f32 0.0, %v2753
        %v2755 = vpop.f32.mrf.mxu0
        %v2756 = vadd.f32 0.0, %v2755
        %v2757 = vpop.f32.mrf.mxu0
        %v2758 = vadd.f32 0.0, %v2757
        %v2759 = vpop.f32.mrf.mxu0
        %v2760 = vadd.f32 0.0, %v2759
        %2761 = vmatprep.mubr.bf16.mxu0 %v2695
        %2762 = vmatmul.mubr.bf16.gmra.mxu0 %v2671
        %v2763 = vpop.f32.mrf.mxu0
        %v2764 = vadd.f32 0.0, %v2763
        %v2765 = vpop.f32.mrf.mxu0
        %v2766 = vadd.f32 0.0, %v2765
        %v2767 = vpop.f32.mrf.mxu0
        %v2768 = vadd.f32 0.0, %v2767
        %v2769 = vpop.f32.mrf.mxu0
        %v2770 = vadd.f32 0.0, %v2769
        %2771 = vmatprep.mubr.bf16.mxu0 %v2698
        %2772 = vmatmul.mubr.bf16.gmra.mxu0 %v2673
        %v2773 = vpop.f32.mrf.mxu0
        %v2774 = vadd.f32 0.0, %v2773
        %v2775 = vpop.f32.mrf.mxu0
        %v2776 = vadd.f32 0.0, %v2775
        %v2777 = vpop.f32.mrf.mxu0
        %v2778 = vadd.f32 0.0, %v2777
        %v2779 = vpop.f32.mrf.mxu0
        %v2780 = vadd.f32 0.0, %v2779
        %2781 = vmatprep.mubr.bf16.mxu0 %v2701
        %2782 = vmatmul.mubr.bf16.gmra.mxu0 %v2675
        %v2783 = vpop.f32.mrf.mxu0
        %v2784 = vadd.f32 0.0, %v2783
        %v2785 = vpop.f32.mrf.mxu0
        %v2786 = vadd.f32 0.0, %v2785
        %v2787 = vpop.f32.mrf.mxu0
        %v2788 = vadd.f32 0.0, %v2787
        %v2789 = vpop.f32.mrf.mxu0
        %v2790 = vadd.f32 0.0, %v2789
        %2791 = vmatprep.mubr.bf16.mxu0 %v2704
        %2792 = vmatmul.mubr.bf16.gmra.mxu0 %v2677
        %v2793 = vpop.f32.mrf.mxu0
        %v2794 = vadd.f32 0.0, %v2793
        %v2795 = vpop.f32.mrf.mxu0
        %v2796 = vadd.f32 0.0, %v2795
        %v2797 = vpop.f32.mrf.mxu0
        %v2798 = vadd.f32 0.0, %v2797
        %v2799 = vpop.f32.mrf.mxu0
        %v2800 = vadd.f32 0.0, %v2799
        %2801 = vmatprep.mubr.bf16.mxu0 %v2707
        %2802 = vmatmul.mubr.bf16.gmra.mxu0 %v2679
        %v2803 = vpop.f32.mrf.mxu0
        %v2804 = vadd.f32 0.0, %v2803
        %v2805 = vpop.f32.mrf.mxu0
        %v2806 = vadd.f32 0.0, %v2805
        %v2807 = vpop.f32.mrf.mxu0
        %v2808 = vadd.f32 0.0, %v2807
        %v2809 = vpop.f32.mrf.mxu0
        %v2810 = vadd.f32 0.0, %v2809
        %2811 = vmatprep.mubr.bf16.mxu0 %v2710
        %2812 = vmatmul.mubr.bf16.gmra.mxu0 %v2681
        %v2813 = vpop.f32.mrf.mxu0
        %v2814 = vadd.f32 0.0, %v2813
        %v2815 = vpop.f32.mrf.mxu0
        %v2816 = vadd.f32 0.0, %v2815
        %v2817 = vpop.f32.mrf.mxu0
        %v2818 = vadd.f32 0.0, %v2817
        %v2819 = vpop.f32.mrf.mxu0
        %v2820 = vadd.f32 0.0, %v2819
        %2821 = vdwg.mxu0
        %v2822 = vld [vmem:[%s6] sm:$0xff]
        %v2823 = vld [vmem:[%s6 + $0x8] sm:$0xff]
        %v2824 = vld [vmem:[%s6 + $0x10] sm:$0xff]
        %v2825 = vld [vmem:[%s6 + $0x18] sm:$0xff]
        %v2826 = vld [vmem:[%s6 + $0x20] sm:$0xff]
        %v2827 = vld [vmem:[%s6 + $0x28] sm:$0xff]
        %v2828 = vld [vmem:[%s6 + $0x30] sm:$0xff]
        %v2829 = vld [vmem:[%s6 + $0x38] sm:$0xff]
        %v2830 = vld [vmem:[%s6 + $0x40] sm:$0xff]
        %v2831 = vld [vmem:[%s6 + $0x48] sm:$0xff]
        %v2832 = vld [vmem:[%s6 + $0x50] sm:$0xff]
        %v2833 = vld [vmem:[%s6 + $0x58] sm:$0xff]
        %v2834 = vld [vmem:[%s6 + $0x60] sm:$0xff]
        %v2835 = vld [vmem:[%s6 + $0x68] sm:$0xff]
        %v2850 = vunpack.c.l.b16 %v2822
        %v2851 = vunpack.c.h.b16 %v2822
        %v2852 = vunpack.c.l.b16 %v2823
        %v2853 = vunpack.c.h.b16 %v2823
        %v2854 = vunpack.c.l.b16 %v2824
        %v2855 = vunpack.c.h.b16 %v2824
        %v2856 = vunpack.c.l.b16 %v2825
        %v2857 = vunpack.c.h.b16 %v2825
        %v2858 = vunpack.c.l.b16 %v2826
        %v2859 = vunpack.c.h.b16 %v2826
        %v2860 = vunpack.c.l.b16 %v2827
        %v2861 = vunpack.c.h.b16 %v2827
        %v2862 = vunpack.c.l.b16 %v2828
        %v2863 = vunpack.c.h.b16 %v2828
        %v2864 = vunpack.c.l.b16 %v2829
        %v2865 = vunpack.c.h.b16 %v2829
        %v2866 = vunpack.c.l.b16 %v2830
        %v2867 = vunpack.c.h.b16 %v2830
        %v2868 = vunpack.c.l.b16 %v2831
        %v2869 = vunpack.c.h.b16 %v2831
        %v2870 = vunpack.c.l.b16 %v2832
        %v2871 = vunpack.c.h.b16 %v2832
        %v2872 = vunpack.c.l.b16 %v2833
        %v2873 = vunpack.c.h.b16 %v2833
        %v2874 = vunpack.c.l.b16 %v2834
        %v2875 = vunpack.c.h.b16 %v2834
        %v2876 = vunpack.c.l.b16 %v2835
        %v2877 = vunpack.c.h.b16 %v2835
        %v2878 = vpack.c.b16 %v2852, %v2850
        %v2879 = vpack.c.b16 %v2853, %v2851
        %v2880 = vpack.c.b16 %v2856, %v2854
        %v2881 = vpack.c.b16 %v2857, %v2855
        %v2882 = vpack.c.b16 %v2860, %v2858
        %v2883 = vpack.c.b16 %v2861, %v2859
        %v2884 = vpack.c.b16 %v2864, %v2862
        %v2885 = vpack.c.b16 %v2865, %v2863
        %v2886 = vpack.c.b16 %v2868, %v2866
        %v2887 = vpack.c.b16 %v2869, %v2867
        %v2888 = vpack.c.b16 %v2872, %v2870
        %v2889 = vpack.c.b16 %v2873, %v2871
        %v2890 = vpack.c.b16 %v2876, %v2874
        %v2891 = vpack.c.b16 %v2877, %v2875
        %v2900 = vsel %vm2690, %v2879, 0
        %v2903 = vsel %vm2690, %v2881, 0
        %v2906 = vsel %vm2690, %v2883, 0
        %v2909 = vsel %vm2690, %v2885, 0
        %v2912 = vsel %vm2690, %v2887, 0
        %v2915 = vsel %vm2690, %v2889, 0
        %v2918 = vsel %vm2690, %v2891, 0
        %2920 = vmatprep.subr.bf16.mxu0 %v2596
        %2921 = vmatpush1.bf16.msra.mxu0 %v2595
        %2922 = vmatprep.subr.bf16.mxu0 %v2594
        %2923 = vmatpush1.bf16.msra.mxu0 %v2593
        %2924 = vmatprep.subr.bf16.mxu0 %v2592
        %2925 = vmatpush1.bf16.msra.mxu0 %v2591
        %2926 = vmatprep.subr.bf16.mxu0 %v2590
        %2927 = vmatpush1.bf16.msra.mxu0 %v2589
        %2928 = vmatprep.subr.bf16.mxu0 %v2588
        %2929 = vmatpush1.bf16.msra.mxu0 %v2587
        %2930 = vmatprep.subr.bf16.mxu0 %v2586
        %2931 = vmatpush1.bf16.msra.mxu0 %v2585
        %2932 = vmatprep.subr.bf16.mxu0 %v2584
        %2933 = vmatpush1.bf16.msra.mxu0 %v2583
        %2934 = vmatprep.subr.bf16.mxu0 %v2582
        %2935 = vmatpush1.bf16.msra.mxu0 %v2581
        %2936 = vmatprep.subr.bf16.mxu0 %v2717
        %2937 = vmatpush2.bf16.msra.mxu0 %v2714
        %2938 = vmatprep.subr.bf16.mxu0 %v2610
        %2939 = vmatpush2.bf16.msra.mxu0 %v2609
        %2940 = vmatprep.subr.bf16.mxu0 %v2608
        %2941 = vmatpush2.bf16.msra.mxu0 %v2607
        %2942 = vmatprep.subr.bf16.mxu0 %v2606
        %2943 = vmatpush2.bf16.msra.mxu0 %v2605
        %2944 = vmatprep.subr.bf16.mxu0 %v2604
        %2945 = vmatpush2.bf16.msra.mxu0 %v2603
        %2946 = vmatprep.subr.bf16.mxu0 %v2602
        %2947 = vmatpush2.bf16.msra.mxu0 %v2601
        %2948 = vmatprep.subr.bf16.mxu0 %v2600
        %2949 = vmatpush2.bf16.msra.mxu0 %v2599
        %2950 = vmatprep.subr.bf16.mxu0 %v2598
        %2951 = vmatpush2.bf16.msra.mxu0 %v2597
        %2952 = vmatprep.mubr.bf16.mxu0 %v2900
        %2953 = vmatmul.mubr.bf16.gmra.mxu0 %v2878
        %v2954 = vpop.f32.mrf.mxu0
        %v2955 = vadd.f32 0.0, %v2954
        %v2956 = vpop.f32.mrf.mxu0
        %v2957 = vadd.f32 0.0, %v2956
        %v2958 = vpop.f32.mrf.mxu0
        %v2959 = vadd.f32 0.0, %v2958
        %v2960 = vpop.f32.mrf.mxu0
        %v2961 = vadd.f32 0.0, %v2960
        %2962 = vmatprep.mubr.bf16.mxu0 %v2903
        %2963 = vmatmul.mubr.bf16.gmra.mxu0 %v2880
        %v2964 = vpop.f32.mrf.mxu0
        %v2965 = vadd.f32 0.0, %v2964
        %v2966 = vpop.f32.mrf.mxu0
        %v2967 = vadd.f32 0.0, %v2966
        %v2968 = vpop.f32.mrf.mxu0
        %v2969 = vadd.f32 0.0, %v2968
        %v2970 = vpop.f32.mrf.mxu0
        %v2971 = vadd.f32 0.0, %v2970
        %2972 = vmatprep.mubr.bf16.mxu0 %v2906
        %2973 = vmatmul.mubr.bf16.gmra.mxu0 %v2882
        %v2974 = vpop.f32.mrf.mxu0
        %v2975 = vadd.f32 0.0, %v2974
        %v2976 = vpop.f32.mrf.mxu0
        %v2977 = vadd.f32 0.0, %v2976
        %v2978 = vpop.f32.mrf.mxu0
        %v2979 = vadd.f32 0.0, %v2978
        %v2980 = vpop.f32.mrf.mxu0
        %v2981 = vadd.f32 0.0, %v2980
        %2982 = vmatprep.mubr.bf16.mxu0 %v2909
        %2983 = vmatmul.mubr.bf16.gmra.mxu0 %v2884
        %v2984 = vpop.f32.mrf.mxu0
        %v2985 = vadd.f32 0.0, %v2984
        %v2986 = vpop.f32.mrf.mxu0
        %v2987 = vadd.f32 0.0, %v2986
        %v2988 = vpop.f32.mrf.mxu0
        %v2989 = vadd.f32 0.0, %v2988
        %v2990 = vpop.f32.mrf.mxu0
        %v2991 = vadd.f32 0.0, %v2990
        %2992 = vmatprep.mubr.bf16.mxu0 %v2912
        %2993 = vmatmul.mubr.bf16.gmra.mxu0 %v2886
        %v2994 = vpop.f32.mrf.mxu0
        %v2995 = vadd.f32 0.0, %v2994
        %v2996 = vpop.f32.mrf.mxu0
        %v2997 = vadd.f32 0.0, %v2996
        %v2998 = vpop.f32.mrf.mxu0
        %v2999 = vadd.f32 0.0, %v2998
        %v3000 = vpop.f32.mrf.mxu0
        %v3001 = vadd.f32 0.0, %v3000
        %3002 = vmatprep.mubr.bf16.mxu0 %v2915
        %3003 = vmatmul.mubr.bf16.gmra.mxu0 %v2888
        %v3004 = vpop.f32.mrf.mxu0
        %v3005 = vadd.f32 0.0, %v3004
        %v3006 = vpop.f32.mrf.mxu0
        %v3007 = vadd.f32 0.0, %v3006
        %v3008 = vpop.f32.mrf.mxu0
        %v3009 = vadd.f32 0.0, %v3008
        %v3010 = vpop.f32.mrf.mxu0
        %v3011 = vadd.f32 0.0, %v3010
        %3012 = vmatprep.mubr.bf16.mxu0 %v2918
        %3013 = vmatmul.mubr.bf16.gmra.mxu0 %v2890
        %v3014 = vpop.f32.mrf.mxu0
        %v3015 = vadd.f32 0.0, %v3014
        %v3016 = vpop.f32.mrf.mxu0
        %v3017 = vadd.f32 0.0, %v3016
        %v3018 = vpop.f32.mrf.mxu0
        %v3019 = vadd.f32 0.0, %v3018
        %v3020 = vpop.f32.mrf.mxu0
        %v3021 = vadd.f32 0.0, %v3020
        %3022 = vdwg.mxu0
        %v3023 = vmax.f32 %v2754, %v2955
        %v3024 = vmax.f32 %v2756, %v2957
        %v3025 = vmax.f32 %v2758, %v2959
        %v3026 = vmax.f32 %v2760, %v2961
        %v3027 = vmax.f32 %v2764, %v2965
        %v3028 = vmax.f32 %v2766, %v2967
        %v3029 = vmax.f32 %v2768, %v2969
        %v3030 = vmax.f32 %v2770, %v2971
        %v3031 = vmax.f32 %v2774, %v2975
        %v3032 = vmax.f32 %v2776, %v2977
        %v3033 = vmax.f32 %v2778, %v2979
        %v3034 = vmax.f32 %v2780, %v2981
        %v3035 = vmax.f32 %v2784, %v2985
        %v3036 = vmax.f32 %v2786, %v2987
        %v3037 = vmax.f32 %v2788, %v2989
        %v3038 = vmax.f32 %v2790, %v2991
        %v3039 = vmax.f32 %v2794, %v2995
        %v3040 = vmax.f32 %v2796, %v2997
        %v3041 = vmax.f32 %v2798, %v2999
        %v3042 = vmax.f32 %v2800, %v3001
        %v3043 = vmax.f32 %v2804, %v3005
        %v3044 = vmax.f32 %v2806, %v3007
        %v3045 = vmax.f32 %v2808, %v3009
        %v3046 = vmax.f32 %v2810, %v3011
        %v3047 = vmax.f32 %v2814, %v3015
        %v3048 = vmax.f32 %v2816, %v3017
        %v3049 = vmax.f32 %v2818, %v3019
        %v3050 = vmax.f32 %v2820, %v3021
        %v3051 = vmax.f32 %v3023, %v3024
        %v3052 = vmax.f32 %v3025, %v3026
        %v3053 = vmax.f32 %v3027, %v3028
        %v3054 = vmax.f32 %v3029, %v3030
        %v3055 = vmax.f32 %v3031, %v3032
        %v3056 = vmax.f32 %v3033, %v3034
        %v3057 = vmax.f32 %v3035, %v3036
        %v3058 = vmax.f32 %v3037, %v3038
        %v3059 = vmax.f32 %v3039, %v3040
        %v3060 = vmax.f32 %v3041, %v3042
        %v3061 = vmax.f32 %v3043, %v3044
        %v3062 = vmax.f32 %v3045, %v3046
        %v3063 = vmax.f32 %v3047, %v3048
        %v3064 = vmax.f32 %v3049, %v3050
        %3065 = vst [vmem:[#allocation2] sm:$0xff] %v3051
        %3066 = vst [vmem:[#allocation2 + $0x8] sm:$0xff] %v3052
        %3067 = vst [vmem:[#allocation2 + $0x10] sm:$0xff] %v3053
        %3068 = vst [vmem:[#allocation2 + $0x18] sm:$0xff] %v3054
        %3069 = vst [vmem:[#allocation2 + $0x20] sm:$0xff] %v3055
        %3070 = vst [vmem:[#allocation2 + $0x28] sm:$0xff] %v3056
        %3071 = vst [vmem:[#allocation2 + $0x30] sm:$0xff] %v3057
        %3072 = vst [vmem:[#allocation2 + $0x38] sm:$0xff] %v3058
        %3073 = vst [vmem:[#allocation2 + $0x40] sm:$0xff] %v3059
        %3074 = vst [vmem:[#allocation2 + $0x48] sm:$0xff] %v3060
        %3075 = vst [vmem:[#allocation2 + $0x50] sm:$0xff] %v3061
        %3076 = vst [vmem:[#allocation2 + $0x58] sm:$0xff] %v3062
        %3077 = vst [vmem:[#allocation2 + $0x60] sm:$0xff] %v3063
        %3078 = vst [vmem:[#allocation2 + $0x68] sm:$0xff] %v3064
        %v3079 = vld [vmem:[%s4] sm:$0x3]
        %v3081 = vlaneseq
        %v3082 = vshrl.u32 %v3081, 7
        %v3083 = vsub.s32 0, %v3082
        %v3084 = vrot.slane %v3079, %v3083
        %v3085 = vlaneseq
        %v3086 = vshrl.u32 %v3085, 7
        %v3087 = vsub.s32 1, %v3086
        %v3088 = vrot.slane %v3079, %v3087
        %v3091 = vld [vmem:[#allocation2] sm:$0xff]
        %v3092 = vld [vmem:[#allocation2 + $0x8] sm:$0xff]
        %v3093 = vld [vmem:[#allocation2 + $0x10] sm:$0xff]
        %v3094 = vld [vmem:[#allocation2 + $0x18] sm:$0xff]
        %v3095 = vld [vmem:[#allocation2 + $0x20] sm:$0xff]
        %v3096 = vld [vmem:[#allocation2 + $0x28] sm:$0xff]
        %v3097 = vld [vmem:[#allocation2 + $0x30] sm:$0xff]
        %v3098 = vld [vmem:[#allocation2 + $0x38] sm:$0xff]
        %v3099 = vld [vmem:[#allocation2 + $0x40] sm:$0xff]
        %v3100 = vld [vmem:[#allocation2 + $0x48] sm:$0xff]
        %v3101 = vld [vmem:[#allocation2 + $0x50] sm:$0xff]
        %v3102 = vld [vmem:[#allocation2 + $0x58] sm:$0xff]
        %v3103 = vld [vmem:[#allocation2 + $0x60] sm:$0xff]
        %v3104 = vld [vmem:[#allocation2 + $0x68] sm:$0xf]
        %v3105 = vpack.c.bf16 %v3092, %v3091
        %v3106 = vpack.c.bf16 %v3094, %v3093
        %v3107 = vpack.c.bf16 %v3096, %v3095
        %v3108 = vpack.c.bf16 %v3098, %v3097
        %v3109 = vpack.c.bf16 %v3100, %v3099
        %v3110 = vpack.c.bf16 %v3102, %v3101
        %v3111 = vpack.c.bf16 %v3104, %v3103
        %v3112 = vld [vmem:[%s3] sm:$0xff]
        %v3113 = vld [vmem:[%s3 + $0x8] sm:$0xff]
        %v3114 = vld [vmem:[%s3 + $0x10] sm:$0xff]
        %v3115 = vld [vmem:[%s3 + $0x18] sm:$0xff]
        %v3116 = vld [vmem:[%s3 + $0x20] sm:$0xff]
        %v3117 = vld [vmem:[%s3 + $0x28] sm:$0xff]
        %v3118 = vld [vmem:[%s3 + $0x30] sm:$0xff]
        %v3119 = vld [vmem:[%s3 + $0x38] sm:$0xff]
        %v3120 = vld [vmem:[%s3 + $0x40] sm:$0xff]
        %v3121 = vld [vmem:[%s3 + $0x48] sm:$0xff]
        %v3122 = vld [vmem:[%s3 + $0x50] sm:$0xff]
        %v3123 = vld [vmem:[%s3 + $0x58] sm:$0xff]
        %v3124 = vld [vmem:[%s3 + $0x60] sm:$0xff]
        %v3125 = vld [vmem:[%s3 + $0x68] sm:$0xff]
        %v3126 = vld [vmem:[%s3 + $0x70] sm:$0xff]
        %v3127 = vld [vmem:[%s3 + $0x78] sm:$0xff]
        %v3144 = vunpack.c.l.b16 %v3112
        %v3145 = vunpack.c.h.b16 %v3112
        %v3146 = vunpack.c.l.b16 %v3113
        %v3147 = vunpack.c.h.b16 %v3113
        %v3148 = vunpack.c.l.b16 %v3114
        %v3149 = vunpack.c.h.b16 %v3114
        %v3150 = vunpack.c.l.b16 %v3115
        %v3151 = vunpack.c.h.b16 %v3115
        %v3152 = vunpack.c.l.b16 %v3116
        %v3153 = vunpack.c.h.b16 %v3116
        %v3154 = vunpack.c.l.b16 %v3117
        %v3155 = vunpack.c.h.b16 %v3117
        %v3156 = vunpack.c.l.b16 %v3118
        %v3157 = vunpack.c.h.b16 %v3118
        %v3158 = vunpack.c.l.b16 %v3119
        %v3159 = vunpack.c.h.b16 %v3119
        %v3160 = vunpack.c.l.b16 %v3120
        %v3161 = vunpack.c.h.b16 %v3120
        %v3162 = vunpack.c.l.b16 %v3121
        %v3163 = vunpack.c.h.b16 %v3121
        %v3164 = vunpack.c.l.b16 %v3122
        %v3165 = vunpack.c.h.b16 %v3122
        %v3166 = vunpack.c.l.b16 %v3123
        %v3167 = vunpack.c.h.b16 %v3123
        %v3168 = vunpack.c.l.b16 %v3124
        %v3169 = vunpack.c.h.b16 %v3124
        %v3170 = vunpack.c.l.b16 %v3125
        %v3171 = vunpack.c.h.b16 %v3125
        %v3172 = vunpack.c.l.b16 %v3126
        %v3173 = vunpack.c.h.b16 %v3126
        %v3174 = vunpack.c.l.b16 %v3127
        %v3175 = vunpack.c.h.b16 %v3127
        %v3176 = vpack.c.b16 %v3146, %v3144
        %v3177 = vpack.c.b16 %v3147, %v3145
        %v3178 = vpack.c.b16 %v3150, %v3148
        %v3179 = vpack.c.b16 %v3151, %v3149
        %v3180 = vpack.c.b16 %v3154, %v3152
        %v3181 = vpack.c.b16 %v3155, %v3153
        %v3182 = vpack.c.b16 %v3158, %v3156
        %v3183 = vpack.c.b16 %v3159, %v3157
        %v3184 = vpack.c.b16 %v3162, %v3160
        %v3185 = vpack.c.b16 %v3163, %v3161
        %v3186 = vpack.c.b16 %v3166, %v3164
        %v3187 = vpack.c.b16 %v3167, %v3165
        %v3188 = vpack.c.b16 %v3170, %v3168
        %v3189 = vpack.c.b16 %v3171, %v3169
        %v3190 = vpack.c.b16 %v3174, %v3172
        %v3191 = vpack.c.b16 %v3175, %v3173
        %3208 = vmatprep.subr.bf16.mxu0 %v3191
        %3209 = vmatpush1.bf16.msra.mxu0 %v3190
        %3210 = vmatprep.subr.bf16.mxu0 %v3189
        %3211 = vmatpush1.bf16.msra.mxu0 %v3188
        %3212 = vmatprep.subr.bf16.mxu0 %v3187
        %3213 = vmatpush1.bf16.msra.mxu0 %v3186
        %3214 = vmatprep.subr.bf16.mxu0 %v3185
        %3215 = vmatpush1.bf16.msra.mxu0 %v3184
        %3216 = vmatprep.subr.bf16.mxu0 %v3183
        %3217 = vmatpush1.bf16.msra.mxu0 %v3182
        %3218 = vmatprep.subr.bf16.mxu0 %v3181
        %3219 = vmatpush1.bf16.msra.mxu0 %v3180
        %3220 = vmatprep.subr.bf16.mxu0 %v3179
        %3221 = vmatpush1.bf16.msra.mxu0 %v3178
        %3222 = vmatprep.subr.bf16.mxu0 %v3177
        %3223 = vmatpush1.bf16.msra.mxu0 %v3176
        %3224 = vmatprep.subr.bf16.mxu0 0
        %3225 = vmatpush2.bf16.msra.mxu0 0
        %3226 = vmatprep.subr.bf16.mxu0 0
        %3227 = vmatpush2.bf16.msra.mxu0 0
        %3228 = vmatprep.subr.bf16.mxu0 0
        %3229 = vmatpush2.bf16.msra.mxu0 0
        %3230 = vmatprep.subr.bf16.mxu0 0
        %3231 = vmatpush2.bf16.msra.mxu0 0
        %3232 = vmatprep.subr.bf16.mxu0 0
        %3233 = vmatpush2.bf16.msra.mxu0 0
        %3234 = vmatprep.subr.bf16.mxu0 0
        %3235 = vmatpush2.bf16.msra.mxu0 0
        %3236 = vmatprep.subr.bf16.mxu0 0
        %3237 = vmatpush2.bf16.msra.mxu0 0
        %3238 = vmatprep.subr.bf16.mxu0 0
        %3239 = vmatpush2.bf16.msra.mxu0 0
        %3240 = vmatprep.mubr.bf16.mxu0 0
        %3241 = vmatmul.mubr.bf16.gmra.mxu0 %v3105
        %v3242 = vpop.f32.mrf.mxu0
        %v3243 = vadd.f32 0.0, %v3242
        %v3244 = vpop.f32.mrf.mxu0
        %v3245 = vadd.f32 0.0, %v3244
        %v3246 = vpop.f32.mrf.mxu0
        %v3247 = vadd.f32 0.0, %v3246
        %v3248 = vpop.f32.mrf.mxu0
        %v3249 = vadd.f32 0.0, %v3248
        %3250 = vmatprep.mubr.bf16.mxu0 0
        %3251 = vmatmul.mubr.bf16.gmra.mxu0 %v3106
        %v3252 = vpop.f32.mrf.mxu0
        %v3253 = vadd.f32 0.0, %v3252
        %v3254 = vpop.f32.mrf.mxu0
        %v3255 = vadd.f32 0.0, %v3254
        %v3256 = vpop.f32.mrf.mxu0
        %v3257 = vadd.f32 0.0, %v3256
        %v3258 = vpop.f32.mrf.mxu0
        %v3259 = vadd.f32 0.0, %v3258
        %3260 = vmatprep.mubr.bf16.mxu0 0
        %3261 = vmatmul.mubr.bf16.gmra.mxu0 %v3107
        %v3262 = vpop.f32.mrf.mxu0
        %v3263 = vadd.f32 0.0, %v3262
        %v3264 = vpop.f32.mrf.mxu0
        %v3265 = vadd.f32 0.0, %v3264
        %v3266 = vpop.f32.mrf.mxu0
        %v3267 = vadd.f32 0.0, %v3266
        %v3268 = vpop.f32.mrf.mxu0
        %v3269 = vadd.f32 0.0, %v3268
        %3270 = vmatprep.mubr.bf16.mxu0 0
        %3271 = vmatmul.mubr.bf16.gmra.mxu0 %v3108
        %v3272 = vpop.f32.mrf.mxu0
        %v3273 = vadd.f32 0.0, %v3272
        %v3274 = vpop.f32.mrf.mxu0
        %v3275 = vadd.f32 0.0, %v3274
        %v3276 = vpop.f32.mrf.mxu0
        %v3277 = vadd.f32 0.0, %v3276
        %v3278 = vpop.f32.mrf.mxu0
        %v3279 = vadd.f32 0.0, %v3278
        %3280 = vmatprep.mubr.bf16.mxu0 0
        %3281 = vmatmul.mubr.bf16.gmra.mxu0 %v3109
        %v3282 = vpop.f32.mrf.mxu0
        %v3283 = vadd.f32 0.0, %v3282
        %v3284 = vpop.f32.mrf.mxu0
        %v3285 = vadd.f32 0.0, %v3284
        %v3286 = vpop.f32.mrf.mxu0
        %v3287 = vadd.f32 0.0, %v3286
        %v3288 = vpop.f32.mrf.mxu0
        %v3289 = vadd.f32 0.0, %v3288
        %3290 = vmatprep.mubr.bf16.mxu0 0
        %3291 = vmatmul.mubr.bf16.gmra.mxu0 %v3110
        %v3292 = vpop.f32.mrf.mxu0
        %v3293 = vadd.f32 0.0, %v3292
        %v3294 = vpop.f32.mrf.mxu0
        %v3295 = vadd.f32 0.0, %v3294
        %v3296 = vpop.f32.mrf.mxu0
        %v3297 = vadd.f32 0.0, %v3296
        %v3298 = vpop.f32.mrf.mxu0
        %v3299 = vadd.f32 0.0, %v3298
        %3300 = vmatprep.mubr.bf16.mxu0 0
        %3301 = vmatmul.mubr.bf16.gmra.mxu0 %v3111
        %v3302 = vpop.f32.mrf.mxu0
        %v3303 = vadd.f32 0.0, %v3302
        %v3304 = vpop.f32.mrf.mxu0
        %v3305 = vadd.f32 0.0, %v3304
        %v3306 = vpop.f32.mrf.mxu0
        %v3307 = vadd.f32 0.0, %v3306
        %v3308 = vpop.f32.mrf.mxu0
        %v3309 = vadd.f32 0.0, %v3308
        %3310 = vdwg.mxu0
        %v3311 = vadd.f32 %v3084, %v3243
        %v3312 = vadd.f32 %v3088, %v3245
        %v3313 = vadd.f32 %v3084, %v3247
        %v3314 = vadd.f32 %v3088, %v3249
        %v3315 = vadd.f32 %v3084, %v3253
        %v3316 = vadd.f32 %v3088, %v3255
        %v3317 = vadd.f32 %v3084, %v3257
        %v3318 = vadd.f32 %v3088, %v3259
        %v3319 = vadd.f32 %v3084, %v3263
        %v3320 = vadd.f32 %v3088, %v3265
        %v3321 = vadd.f32 %v3084, %v3267
        %v3322 = vadd.f32 %v3088, %v3269
        %v3323 = vadd.f32 %v3084, %v3273
        %v3324 = vadd.f32 %v3088, %v3275
        %v3325 = vadd.f32 %v3084, %v3277
        %v3326 = vadd.f32 %v3088, %v3279
        %v3327 = vadd.f32 %v3084, %v3283
        %v3328 = vadd.f32 %v3088, %v3285
        %v3329 = vadd.f32 %v3084, %v3287
        %v3330 = vadd.f32 %v3088, %v3289
        %v3331 = vadd.f32 %v3084, %v3293
        %v3332 = vadd.f32 %v3088, %v3295
        %v3333 = vadd.f32 %v3084, %v3297
        %v3334 = vadd.f32 %v3088, %v3299
        %v3335 = vadd.f32 %v3084, %v3303
        %v3336 = vadd.f32 %v3088, %v3305
        %v3337 = vadd.f32 %v3084, %v3307
        %v3338 = vadd.f32 %v3088, %v3309
        %v3339 = vld [vmem:[#allocation2 + $0x1] sm:$0xff]
        %v3340 = vld [vmem:[#allocation2 + $0x9] sm:$0xff]
        %v3341 = vld [vmem:[#allocation2 + $0x11] sm:$0xff]
        %v3342 = vld [vmem:[#allocation2 + $0x19] sm:$0xff]
        %v3343 = vld [vmem:[#allocation2 + $0x21] sm:$0xff]
        %v3344 = vld [vmem:[#allocation2 + $0x29] sm:$0xff]
        %v3345 = vld [vmem:[#allocation2 + $0x31] sm:$0xff]
        %v3346 = vld [vmem:[#allocation2 + $0x39] sm:$0xff]
        %v3347 = vld [vmem:[#allocation2 + $0x41] sm:$0xff]
        %v3348 = vld [vmem:[#allocation2 + $0x49] sm:$0xff]
        %v3349 = vld [vmem:[#allocation2 + $0x51] sm:$0xff]
        %v3350 = vld [vmem:[#allocation2 + $0x59] sm:$0xff]
        %v3351 = vld [vmem:[#allocation2 + $0x61] sm:$0xff]
        %v3352 = vld [vmem:[#allocation2 + $0x69] sm:$0xf]
        %v3353 = vpack.c.bf16 %v3340, %v3339
        %v3354 = vpack.c.bf16 %v3342, %v3341
        %v3355 = vpack.c.bf16 %v3344, %v3343
        %v3356 = vpack.c.bf16 %v3346, %v3345
        %v3357 = vpack.c.bf16 %v3348, %v3347
        %v3358 = vpack.c.bf16 %v3350, %v3349
        %v3359 = vpack.c.bf16 %v3352, %v3351
        %s3360 = scalar_lea.vmem %s3, 128
        %v3361 = vld [vmem:[%s3360] sm:$0xff]
        %v3362 = vld [vmem:[%s3360 + $0x8] sm:$0xff]
        %v3363 = vld [vmem:[%s3360 + $0x10] sm:$0xff]
        %v3364 = vld [vmem:[%s3360 + $0x18] sm:$0xff]
        %v3365 = vld [vmem:[%s3360 + $0x20] sm:$0xff]
        %v3366 = vld [vmem:[%s3360 + $0x28] sm:$0xff]
        %v3367 = vld [vmem:[%s3360 + $0x30] sm:$0xff]
        %v3368 = vld [vmem:[%s3360 + $0x38] sm:$0xff]
        %v3369 = vld [vmem:[%s3360 + $0x40] sm:$0xff]
        %v3370 = vld [vmem:[%s3360 + $0x48] sm:$0xff]
        %v3371 = vld [vmem:[%s3360 + $0x50] sm:$0xff]
        %v3372 = vld [vmem:[%s3360 + $0x58] sm:$0xff]
        %v3373 = vld [vmem:[%s3360 + $0x60] sm:$0xff]
        %v3374 = vld [vmem:[%s3360 + $0x68] sm:$0xff]
        %v3375 = vld [vmem:[%s3360 + $0x70] sm:$0xff]
        %v3376 = vld [vmem:[%s3360 + $0x78] sm:$0xff]
        %v3393 = vunpack.c.l.b16 %v3361
        %v3394 = vunpack.c.h.b16 %v3361
        %v3395 = vunpack.c.l.b16 %v3362
        %v3396 = vunpack.c.h.b16 %v3362
        %v3397 = vunpack.c.l.b16 %v3363
        %v3398 = vunpack.c.h.b16 %v3363
        %v3399 = vunpack.c.l.b16 %v3364
        %v3400 = vunpack.c.h.b16 %v3364
        %v3401 = vunpack.c.l.b16 %v3365
        %v3402 = vunpack.c.h.b16 %v3365
        %v3403 = vunpack.c.l.b16 %v3366
        %v3404 = vunpack.c.h.b16 %v3366
        %v3405 = vunpack.c.l.b16 %v3367
        %v3406 = vunpack.c.h.b16 %v3367
        %v3407 = vunpack.c.l.b16 %v3368
        %v3408 = vunpack.c.h.b16 %v3368
        %v3409 = vunpack.c.l.b16 %v3369
        %v3410 = vunpack.c.h.b16 %v3369
        %v3411 = vunpack.c.l.b16 %v3370
        %v3412 = vunpack.c.h.b16 %v3370
        %v3413 = vunpack.c.l.b16 %v3371
        %v3414 = vunpack.c.h.b16 %v3371
        %v3415 = vunpack.c.l.b16 %v3372
        %v3416 = vunpack.c.h.b16 %v3372
        %v3417 = vunpack.c.l.b16 %v3373
        %v3418 = vunpack.c.h.b16 %v3373
        %v3419 = vunpack.c.l.b16 %v3374
        %v3420 = vunpack.c.h.b16 %v3374
        %v3421 = vunpack.c.l.b16 %v3375
        %v3422 = vunpack.c.h.b16 %v3375
        %v3423 = vunpack.c.l.b16 %v3376
        %v3424 = vunpack.c.h.b16 %v3376
        %v3425 = vpack.c.b16 %v3395, %v3393
        %v3426 = vpack.c.b16 %v3396, %v3394
        %v3427 = vpack.c.b16 %v3399, %v3397
        %v3428 = vpack.c.b16 %v3400, %v3398
        %v3429 = vpack.c.b16 %v3403, %v3401
        %v3430 = vpack.c.b16 %v3404, %v3402
        %v3431 = vpack.c.b16 %v3407, %v3405
        %v3432 = vpack.c.b16 %v3408, %v3406
        %v3433 = vpack.c.b16 %v3411, %v3409
        %v3434 = vpack.c.b16 %v3412, %v3410
        %v3435 = vpack.c.b16 %v3415, %v3413
        %v3436 = vpack.c.b16 %v3416, %v3414
        %v3437 = vpack.c.b16 %v3419, %v3417
        %v3438 = vpack.c.b16 %v3420, %v3418
        %v3439 = vpack.c.b16 %v3423, %v3421
        %v3440 = vpack.c.b16 %v3424, %v3422
        %3457 = vmatprep.subr.bf16.mxu0 %v3440
        %3458 = vmatpush1.bf16.msra.mxu0 %v3439
        %3459 = vmatprep.subr.bf16.mxu0 %v3438
        %3460 = vmatpush1.bf16.msra.mxu0 %v3437
        %3461 = vmatprep.subr.bf16.mxu0 %v3436
        %3462 = vmatpush1.bf16.msra.mxu0 %v3435
        %3463 = vmatprep.subr.bf16.mxu0 %v3434
        %3464 = vmatpush1.bf16.msra.mxu0 %v3433
        %3465 = vmatprep.subr.bf16.mxu0 %v3432
        %3466 = vmatpush1.bf16.msra.mxu0 %v3431
        %3467 = vmatprep.subr.bf16.mxu0 %v3430
        %3468 = vmatpush1.bf16.msra.mxu0 %v3429
        %3469 = vmatprep.subr.bf16.mxu0 %v3428
        %3470 = vmatpush1.bf16.msra.mxu0 %v3427
        %3471 = vmatprep.subr.bf16.mxu0 %v3426
        %3472 = vmatpush1.bf16.msra.mxu0 %v3425
        %3473 = vmatprep.subr.bf16.mxu0 0
        %3474 = vmatpush2.bf16.msra.mxu0 0
        %3475 = vmatprep.subr.bf16.mxu0 0
        %3476 = vmatpush2.bf16.msra.mxu0 0
        %3477 = vmatprep.subr.bf16.mxu0 0
        %3478 = vmatpush2.bf16.msra.mxu0 0
        %3479 = vmatprep.subr.bf16.mxu0 0
        %3480 = vmatpush2.bf16.msra.mxu0 0
        %3481 = vmatprep.subr.bf16.mxu0 0
        %3482 = vmatpush2.bf16.msra.mxu0 0
        %3483 = vmatprep.subr.bf16.mxu0 0
        %3484 = vmatpush2.bf16.msra.mxu0 0
        %3485 = vmatprep.subr.bf16.mxu0 0
        %3486 = vmatpush2.bf16.msra.mxu0 0
        %3487 = vmatprep.subr.bf16.mxu0 0
        %3488 = vmatpush2.bf16.msra.mxu0 0
        %3489 = vmatprep.mubr.bf16.mxu0 0
        %3490 = vmatmul.mubr.bf16.gmra.mxu0 %v3353
        %v3491 = vpop.f32.mrf.mxu0
        %v3492 = vadd.f32 0.0, %v3491
        %v3493 = vpop.f32.mrf.mxu0
        %v3494 = vadd.f32 0.0, %v3493
        %v3495 = vpop.f32.mrf.mxu0
        %v3496 = vadd.f32 0.0, %v3495
        %v3497 = vpop.f32.mrf.mxu0
        %v3498 = vadd.f32 0.0, %v3497
        %3499 = vmatprep.mubr.bf16.mxu0 0
        %3500 = vmatmul.mubr.bf16.gmra.mxu0 %v3354
        %v3501 = vpop.f32.mrf.mxu0
        %v3502 = vadd.f32 0.0, %v3501
        %v3503 = vpop.f32.mrf.mxu0
        %v3504 = vadd.f32 0.0, %v3503
        %v3505 = vpop.f32.mrf.mxu0
        %v3506 = vadd.f32 0.0, %v3505
        %v3507 = vpop.f32.mrf.mxu0
        %v3508 = vadd.f32 0.0, %v3507
        %3509 = vmatprep.mubr.bf16.mxu0 0
        %3510 = vmatmul.mubr.bf16.gmra.mxu0 %v3355
        %v3511 = vpop.f32.mrf.mxu0
        %v3512 = vadd.f32 0.0, %v3511
        %v3513 = vpop.f32.mrf.mxu0
        %v3514 = vadd.f32 0.0, %v3513
        %v3515 = vpop.f32.mrf.mxu0
        %v3516 = vadd.f32 0.0, %v3515
        %v3517 = vpop.f32.mrf.mxu0
        %v3518 = vadd.f32 0.0, %v3517
        %3519 = vmatprep.mubr.bf16.mxu0 0
        %3520 = vmatmul.mubr.bf16.gmra.mxu0 %v3356
        %v3521 = vpop.f32.mrf.mxu0
        %v3522 = vadd.f32 0.0, %v3521
        %v3523 = vpop.f32.mrf.mxu0
        %v3524 = vadd.f32 0.0, %v3523
        %v3525 = vpop.f32.mrf.mxu0
        %v3526 = vadd.f32 0.0, %v3525
        %v3527 = vpop.f32.mrf.mxu0
        %v3528 = vadd.f32 0.0, %v3527
        %3529 = vmatprep.mubr.bf16.mxu0 0
        %3530 = vmatmul.mubr.bf16.gmra.mxu0 %v3357
        %v3531 = vpop.f32.mrf.mxu0
        %v3532 = vadd.f32 0.0, %v3531
        %v3533 = vpop.f32.mrf.mxu0
        %v3534 = vadd.f32 0.0, %v3533
        %v3535 = vpop.f32.mrf.mxu0
        %v3536 = vadd.f32 0.0, %v3535
        %v3537 = vpop.f32.mrf.mxu0
        %v3538 = vadd.f32 0.0, %v3537
        %3539 = vmatprep.mubr.bf16.mxu0 0
        %3540 = vmatmul.mubr.bf16.gmra.mxu0 %v3358
        %v3541 = vpop.f32.mrf.mxu0
        %v3542 = vadd.f32 0.0, %v3541
        %v3543 = vpop.f32.mrf.mxu0
        %v3544 = vadd.f32 0.0, %v3543
        %v3545 = vpop.f32.mrf.mxu0
        %v3546 = vadd.f32 0.0, %v3545
        %v3547 = vpop.f32.mrf.mxu0
        %v3548 = vadd.f32 0.0, %v3547
        %3549 = vmatprep.mubr.bf16.mxu0 0
        %3550 = vmatmul.mubr.bf16.gmra.mxu0 %v3359
        %v3551 = vpop.f32.mrf.mxu0
        %v3552 = vadd.f32 0.0, %v3551
        %v3553 = vpop.f32.mrf.mxu0
        %v3554 = vadd.f32 0.0, %v3553
        %v3555 = vpop.f32.mrf.mxu0
        %v3556 = vadd.f32 0.0, %v3555
        %v3557 = vpop.f32.mrf.mxu0
        %v3558 = vadd.f32 0.0, %v3557
        %3559 = vdwg.mxu0
        %v3560 = vadd.f32 %v3311, %v3492
        %v3561 = vadd.f32 %v3312, %v3494
        %v3562 = vadd.f32 %v3313, %v3496
        %v3563 = vadd.f32 %v3314, %v3498
        %v3564 = vadd.f32 %v3315, %v3502
        %v3565 = vadd.f32 %v3316, %v3504
        %v3566 = vadd.f32 %v3317, %v3506
        %v3567 = vadd.f32 %v3318, %v3508
        %v3568 = vadd.f32 %v3319, %v3512
        %v3569 = vadd.f32 %v3320, %v3514
        %v3570 = vadd.f32 %v3321, %v3516
        %v3571 = vadd.f32 %v3322, %v3518
        %v3572 = vadd.f32 %v3323, %v3522
        %v3573 = vadd.f32 %v3324, %v3524
        %v3574 = vadd.f32 %v3325, %v3526
        %v3575 = vadd.f32 %v3326, %v3528
        %v3576 = vadd.f32 %v3327, %v3532
        %v3577 = vadd.f32 %v3328, %v3534
        %v3578 = vadd.f32 %v3329, %v3536
        %v3579 = vadd.f32 %v3330, %v3538
        %v3580 = vadd.f32 %v3331, %v3542
        %v3581 = vadd.f32 %v3332, %v3544
        %v3582 = vadd.f32 %v3333, %v3546
        %v3583 = vadd.f32 %v3334, %v3548
        %v3584 = vadd.f32 %v3335, %v3552
        %v3585 = vadd.f32 %v3336, %v3554
        %v3586 = vadd.f32 %v3337, %v3556
        %v3587 = vadd.f32 %v3338, %v3558
        %v3588 = vld [vmem:[#allocation2 + $0x2] sm:$0xff]
        %v3589 = vld [vmem:[#allocation2 + $0xa] sm:$0xff]
        %v3590 = vld [vmem:[#allocation2 + $0x12] sm:$0xff]
        %v3591 = vld [vmem:[#allocation2 + $0x1a] sm:$0xff]
        %v3592 = vld [vmem:[#allocation2 + $0x22] sm:$0xff]
        %v3593 = vld [vmem:[#allocation2 + $0x2a] sm:$0xff]
        %v3594 = vld [vmem:[#allocation2 + $0x32] sm:$0xff]
        %v3595 = vld [vmem:[#allocation2 + $0x3a] sm:$0xff]
        %v3596 = vld [vmem:[#allocation2 + $0x42] sm:$0xff]
        %v3597 = vld [vmem:[#allocation2 + $0x4a] sm:$0xff]
        %v3598 = vld [vmem:[#allocation2 + $0x52] sm:$0xff]
        %v3599 = vld [vmem:[#allocation2 + $0x5a] sm:$0xff]
        %v3600 = vld [vmem:[#allocation2 + $0x62] sm:$0xff]
        %v3601 = vld [vmem:[#allocation2 + $0x6a] sm:$0xf]
        %v3602 = vpack.c.bf16 %v3589, %v3588
        %v3603 = vpack.c.bf16 %v3591, %v3590
        %v3604 = vpack.c.bf16 %v3593, %v3592
        %v3605 = vpack.c.bf16 %v3595, %v3594
        %v3606 = vpack.c.bf16 %v3597, %v3596
        %v3607 = vpack.c.bf16 %v3599, %v3598
        %v3608 = vpack.c.bf16 %v3601, %v3600
        %s3609 = scalar_lea.vmem %s3, 256
        %v3610 = vld [vmem:[%s3609] sm:$0xff]
        %v3611 = vld [vmem:[%s3609 + $0x8] sm:$0xff]
        %v3612 = vld [vmem:[%s3609 + $0x10] sm:$0xff]
        %v3613 = vld [vmem:[%s3609 + $0x18] sm:$0xff]
        %v3614 = vld [vmem:[%s3609 + $0x20] sm:$0xff]
        %v3615 = vld [vmem:[%s3609 + $0x28] sm:$0xff]
        %v3616 = vld [vmem:[%s3609 + $0x30] sm:$0xff]
        %v3617 = vld [vmem:[%s3609 + $0x38] sm:$0xff]
        %v3618 = vld [vmem:[%s3609 + $0x40] sm:$0xff]
        %v3619 = vld [vmem:[%s3609 + $0x48] sm:$0xff]
        %v3620 = vld [vmem:[%s3609 + $0x50] sm:$0xff]
        %v3621 = vld [vmem:[%s3609 + $0x58] sm:$0xff]
        %v3622 = vld [vmem:[%s3609 + $0x60] sm:$0xff]
        %v3623 = vld [vmem:[%s3609 + $0x68] sm:$0xff]
        %v3624 = vld [vmem:[%s3609 + $0x70] sm:$0xff]
        %v3625 = vld [vmem:[%s3609 + $0x78] sm:$0xff]
        %v3642 = vunpack.c.l.b16 %v3610
        %v3643 = vunpack.c.h.b16 %v3610
        %v3644 = vunpack.c.l.b16 %v3611
        %v3645 = vunpack.c.h.b16 %v3611
        %v3646 = vunpack.c.l.b16 %v3612
        %v3647 = vunpack.c.h.b16 %v3612
        %v3648 = vunpack.c.l.b16 %v3613
        %v3649 = vunpack.c.h.b16 %v3613
        %v3650 = vunpack.c.l.b16 %v3614
        %v3651 = vunpack.c.h.b16 %v3614
        %v3652 = vunpack.c.l.b16 %v3615
        %v3653 = vunpack.c.h.b16 %v3615
        %v3654 = vunpack.c.l.b16 %v3616
        %v3655 = vunpack.c.h.b16 %v3616
        %v3656 = vunpack.c.l.b16 %v3617
        %v3657 = vunpack.c.h.b16 %v3617
        %v3658 = vunpack.c.l.b16 %v3618
        %v3659 = vunpack.c.h.b16 %v3618
        %v3660 = vunpack.c.l.b16 %v3619
        %v3661 = vunpack.c.h.b16 %v3619
        %v3662 = vunpack.c.l.b16 %v3620
        %v3663 = vunpack.c.h.b16 %v3620
        %v3664 = vunpack.c.l.b16 %v3621
        %v3665 = vunpack.c.h.b16 %v3621
        %v3666 = vunpack.c.l.b16 %v3622
        %v3667 = vunpack.c.h.b16 %v3622
        %v3668 = vunpack.c.l.b16 %v3623
        %v3669 = vunpack.c.h.b16 %v3623
        %v3670 = vunpack.c.l.b16 %v3624
        %v3671 = vunpack.c.h.b16 %v3624
        %v3672 = vunpack.c.l.b16 %v3625
        %v3673 = vunpack.c.h.b16 %v3625
        %v3674 = vpack.c.b16 %v3644, %v3642
        %v3675 = vpack.c.b16 %v3645, %v3643
        %v3676 = vpack.c.b16 %v3648, %v3646
        %v3677 = vpack.c.b16 %v3649, %v3647
        %v3678 = vpack.c.b16 %v3652, %v3650
        %v3679 = vpack.c.b16 %v3653, %v3651
        %v3680 = vpack.c.b16 %v3656, %v3654
        %v3681 = vpack.c.b16 %v3657, %v3655
        %v3682 = vpack.c.b16 %v3660, %v3658
        %v3683 = vpack.c.b16 %v3661, %v3659
        %v3684 = vpack.c.b16 %v3664, %v3662
        %v3685 = vpack.c.b16 %v3665, %v3663
        %v3686 = vpack.c.b16 %v3668, %v3666
        %v3687 = vpack.c.b16 %v3669, %v3667
        %v3688 = vpack.c.b16 %v3672, %v3670
        %v3689 = vpack.c.b16 %v3673, %v3671
        %3706 = vmatprep.subr.bf16.mxu0 %v3689
        %3707 = vmatpush1.bf16.msra.mxu0 %v3688
        %3708 = vmatprep.subr.bf16.mxu0 %v3687
        %3709 = vmatpush1.bf16.msra.mxu0 %v3686
        %3710 = vmatprep.subr.bf16.mxu0 %v3685
        %3711 = vmatpush1.bf16.msra.mxu0 %v3684
        %3712 = vmatprep.subr.bf16.mxu0 %v3683
        %3713 = vmatpush1.bf16.msra.mxu0 %v3682
        %3714 = vmatprep.subr.bf16.mxu0 %v3681
        %3715 = vmatpush1.bf16.msra.mxu0 %v3680
        %3716 = vmatprep.subr.bf16.mxu0 %v3679
        %3717 = vmatpush1.bf16.msra.mxu0 %v3678
        %3718 = vmatprep.subr.bf16.mxu0 %v3677
        %3719 = vmatpush1.bf16.msra.mxu0 %v3676
        %3720 = vmatprep.subr.bf16.mxu0 %v3675
        %3721 = vmatpush1.bf16.msra.mxu0 %v3674
        %3722 = vmatprep.subr.bf16.mxu0 0
        %3723 = vmatpush2.bf16.msra.mxu0 0
        %3724 = vmatprep.subr.bf16.mxu0 0
        %3725 = vmatpush2.bf16.msra.mxu0 0
        %3726 = vmatprep.subr.bf16.mxu0 0
        %3727 = vmatpush2.bf16.msra.mxu0 0
        %3728 = vmatprep.subr.bf16.mxu0 0
        %3729 = vmatpush2.bf16.msra.mxu0 0
        %3730 = vmatprep.subr.bf16.mxu0 0
        %3731 = vmatpush2.bf16.msra.mxu0 0
        %3732 = vmatprep.subr.bf16.mxu0 0
        %3733 = vmatpush2.bf16.msra.mxu0 0
        %3734 = vmatprep.subr.bf16.mxu0 0
        %3735 = vmatpush2.bf16.msra.mxu0 0
        %3736 = vmatprep.subr.bf16.mxu0 0
        %3737 = vmatpush2.bf16.msra.mxu0 0
        %3738 = vmatprep.mubr.bf16.mxu0 0
        %3739 = vmatmul.mubr.bf16.gmra.mxu0 %v3602
        %v3740 = vpop.f32.mrf.mxu0
        %v3741 = vadd.f32 0.0, %v3740
        %v3742 = vpop.f32.mrf.mxu0
        %v3743 = vadd.f32 0.0, %v3742
        %v3744 = vpop.f32.mrf.mxu0
        %v3745 = vadd.f32 0.0, %v3744
        %v3746 = vpop.f32.mrf.mxu0
        %v3747 = vadd.f32 0.0, %v3746
        %3748 = vmatprep.mubr.bf16.mxu0 0
        %3749 = vmatmul.mubr.bf16.gmra.mxu0 %v3603
        %v3750 = vpop.f32.mrf.mxu0
        %v3751 = vadd.f32 0.0, %v3750
        %v3752 = vpop.f32.mrf.mxu0
        %v3753 = vadd.f32 0.0, %v3752
        %v3754 = vpop.f32.mrf.mxu0
        %v3755 = vadd.f32 0.0, %v3754
        %v3756 = vpop.f32.mrf.mxu0
        %v3757 = vadd.f32 0.0, %v3756
        %3758 = vmatprep.mubr.bf16.mxu0 0
        %3759 = vmatmul.mubr.bf16.gmra.mxu0 %v3604
        %v3760 = vpop.f32.mrf.mxu0
        %v3761 = vadd.f32 0.0, %v3760
        %v3762 = vpop.f32.mrf.mxu0
        %v3763 = vadd.f32 0.0, %v3762
        %v3764 = vpop.f32.mrf.mxu0
        %v3765 = vadd.f32 0.0, %v3764
        %v3766 = vpop.f32.mrf.mxu0
        %v3767 = vadd.f32 0.0, %v3766
        %3768 = vmatprep.mubr.bf16.mxu0 0
        %3769 = vmatmul.mubr.bf16.gmra.mxu0 %v3605
        %v3770 = vpop.f32.mrf.mxu0
        %v3771 = vadd.f32 0.0, %v3770
        %v3772 = vpop.f32.mrf.mxu0
        %v3773 = vadd.f32 0.0, %v3772
        %v3774 = vpop.f32.mrf.mxu0
        %v3775 = vadd.f32 0.0, %v3774
        %v3776 = vpop.f32.mrf.mxu0
        %v3777 = vadd.f32 0.0, %v3776
        %3778 = vmatprep.mubr.bf16.mxu0 0
        %3779 = vmatmul.mubr.bf16.gmra.mxu0 %v3606
        %v3780 = vpop.f32.mrf.mxu0
        %v3781 = vadd.f32 0.0, %v3780
        %v3782 = vpop.f32.mrf.mxu0
        %v3783 = vadd.f32 0.0, %v3782
        %v3784 = vpop.f32.mrf.mxu0
        %v3785 = vadd.f32 0.0, %v3784
        %v3786 = vpop.f32.mrf.mxu0
        %v3787 = vadd.f32 0.0, %v3786
        %3788 = vmatprep.mubr.bf16.mxu0 0
        %3789 = vmatmul.mubr.bf16.gmra.mxu0 %v3607
        %v3790 = vpop.f32.mrf.mxu0
        %v3791 = vadd.f32 0.0, %v3790
        %v3792 = vpop.f32.mrf.mxu0
        %v3793 = vadd.f32 0.0, %v3792
        %v3794 = vpop.f32.mrf.mxu0
        %v3795 = vadd.f32 0.0, %v3794
        %v3796 = vpop.f32.mrf.mxu0
        %v3797 = vadd.f32 0.0, %v3796
        %3798 = vmatprep.mubr.bf16.mxu0 0
        %3799 = vmatmul.mubr.bf16.gmra.mxu0 %v3608
        %v3800 = vpop.f32.mrf.mxu0
        %v3801 = vadd.f32 0.0, %v3800
        %v3802 = vpop.f32.mrf.mxu0
        %v3803 = vadd.f32 0.0, %v3802
        %v3804 = vpop.f32.mrf.mxu0
        %v3805 = vadd.f32 0.0, %v3804
        %v3806 = vpop.f32.mrf.mxu0
        %v3807 = vadd.f32 0.0, %v3806
        %3808 = vdwg.mxu0
        %v3809 = vadd.f32 %v3560, %v3741
        %v3810 = vadd.f32 %v3561, %v3743
        %v3811 = vadd.f32 %v3562, %v3745
        %v3812 = vadd.f32 %v3563, %v3747
        %v3813 = vadd.f32 %v3564, %v3751
        %v3814 = vadd.f32 %v3565, %v3753
        %v3815 = vadd.f32 %v3566, %v3755
        %v3816 = vadd.f32 %v3567, %v3757
        %v3817 = vadd.f32 %v3568, %v3761
        %v3818 = vadd.f32 %v3569, %v3763
        %v3819 = vadd.f32 %v3570, %v3765
        %v3820 = vadd.f32 %v3571, %v3767
        %v3821 = vadd.f32 %v3572, %v3771
        %v3822 = vadd.f32 %v3573, %v3773
        %v3823 = vadd.f32 %v3574, %v3775
        %v3824 = vadd.f32 %v3575, %v3777
        %v3825 = vadd.f32 %v3576, %v3781
        %v3826 = vadd.f32 %v3577, %v3783
        %v3827 = vadd.f32 %v3578, %v3785
        %v3828 = vadd.f32 %v3579, %v3787
        %v3829 = vadd.f32 %v3580, %v3791
        %v3830 = vadd.f32 %v3581, %v3793
        %v3831 = vadd.f32 %v3582, %v3795
        %v3832 = vadd.f32 %v3583, %v3797
        %v3833 = vadd.f32 %v3584, %v3801
        %v3834 = vadd.f32 %v3585, %v3803
        %v3835 = vadd.f32 %v3586, %v3805
        %v3836 = vadd.f32 %v3587, %v3807
        %v3837 = vld [vmem:[#allocation2 + $0x3] sm:$0xff]
        %v3838 = vld [vmem:[#allocation2 + $0xb] sm:$0xff]
        %v3839 = vld [vmem:[#allocation2 + $0x13] sm:$0xff]
        %v3840 = vld [vmem:[#allocation2 + $0x1b] sm:$0xff]
        %v3841 = vld [vmem:[#allocation2 + $0x23] sm:$0xff]
        %v3842 = vld [vmem:[#allocation2 + $0x2b] sm:$0xff]
        %v3843 = vld [vmem:[#allocation2 + $0x33] sm:$0xff]
        %v3844 = vld [vmem:[#allocation2 + $0x3b] sm:$0xff]
        %v3845 = vld [vmem:[#allocation2 + $0x43] sm:$0xff]
        %v3846 = vld [vmem:[#allocation2 + $0x4b] sm:$0xff]
        %v3847 = vld [vmem:[#allocation2 + $0x53] sm:$0xff]
        %v3848 = vld [vmem:[#allocation2 + $0x5b] sm:$0xff]
        %v3849 = vld [vmem:[#allocation2 + $0x63] sm:$0xff]
        %v3850 = vld [vmem:[#allocation2 + $0x6b] sm:$0xf]
        %v3851 = vpack.c.bf16 %v3838, %v3837
        %v3852 = vpack.c.bf16 %v3840, %v3839
        %v3853 = vpack.c.bf16 %v3842, %v3841
        %v3854 = vpack.c.bf16 %v3844, %v3843
        %v3855 = vpack.c.bf16 %v3846, %v3845
        %v3856 = vpack.c.bf16 %v3848, %v3847
        %v3857 = vpack.c.bf16 %v3850, %v3849
        %s3858 = scalar_lea.vmem %s3, 384
        %v3859 = vld [vmem:[%s3858] sm:$0xff]
        %v3860 = vld [vmem:[%s3858 + $0x8] sm:$0xff]
        %v3861 = vld [vmem:[%s3858 + $0x10] sm:$0xff]
        %v3862 = vld [vmem:[%s3858 + $0x18] sm:$0xff]
        %v3863 = vld [vmem:[%s3858 + $0x20] sm:$0xff]
        %v3864 = vld [vmem:[%s3858 + $0x28] sm:$0xff]
        %v3865 = vld [vmem:[%s3858 + $0x30] sm:$0xff]
        %v3866 = vld [vmem:[%s3858 + $0x38] sm:$0xff]
        %v3867 = vld [vmem:[%s3858 + $0x40] sm:$0xff]
        %v3868 = vld [vmem:[%s3858 + $0x48] sm:$0xff]
        %v3869 = vld [vmem:[%s3858 + $0x50] sm:$0xff]
        %v3870 = vld [vmem:[%s3858 + $0x58] sm:$0xff]
        %v3871 = vld [vmem:[%s3858 + $0x60] sm:$0xff]
        %v3872 = vld [vmem:[%s3858 + $0x68] sm:$0xff]
        %v3873 = vld [vmem:[%s3858 + $0x70] sm:$0xff]
        %v3874 = vld [vmem:[%s3858 + $0x78] sm:$0xff]
        %v3891 = vunpack.c.l.b16 %v3859
        %v3892 = vunpack.c.h.b16 %v3859
        %v3893 = vunpack.c.l.b16 %v3860
        %v3894 = vunpack.c.h.b16 %v3860
        %v3895 = vunpack.c.l.b16 %v3861
        %v3896 = vunpack.c.h.b16 %v3861
        %v3897 = vunpack.c.l.b16 %v3862
        %v3898 = vunpack.c.h.b16 %v3862
        %v3899 = vunpack.c.l.b16 %v3863
        %v3900 = vunpack.c.h.b16 %v3863
        %v3901 = vunpack.c.l.b16 %v3864
        %v3902 = vunpack.c.h.b16 %v3864
        %v3903 = vunpack.c.l.b16 %v3865
        %v3904 = vunpack.c.h.b16 %v3865
        %v3905 = vunpack.c.l.b16 %v3866
        %v3906 = vunpack.c.h.b16 %v3866
        %v3907 = vunpack.c.l.b16 %v3867
        %v3908 = vunpack.c.h.b16 %v3867
        %v3909 = vunpack.c.l.b16 %v3868
        %v3910 = vunpack.c.h.b16 %v3868
        %v3911 = vunpack.c.l.b16 %v3869
        %v3912 = vunpack.c.h.b16 %v3869
        %v3913 = vunpack.c.l.b16 %v3870
        %v3914 = vunpack.c.h.b16 %v3870
        %v3915 = vunpack.c.l.b16 %v3871
        %v3916 = vunpack.c.h.b16 %v3871
        %v3917 = vunpack.c.l.b16 %v3872
        %v3918 = vunpack.c.h.b16 %v3872
        %v3919 = vunpack.c.l.b16 %v3873
        %v3920 = vunpack.c.h.b16 %v3873
        %v3921 = vunpack.c.l.b16 %v3874
        %v3922 = vunpack.c.h.b16 %v3874
        %v3923 = vpack.c.b16 %v3893, %v3891
        %v3924 = vpack.c.b16 %v3894, %v3892
        %v3925 = vpack.c.b16 %v3897, %v3895
        %v3926 = vpack.c.b16 %v3898, %v3896
        %v3927 = vpack.c.b16 %v3901, %v3899
        %v3928 = vpack.c.b16 %v3902, %v3900
        %v3929 = vpack.c.b16 %v3905, %v3903
        %v3930 = vpack.c.b16 %v3906, %v3904
        %v3931 = vpack.c.b16 %v3909, %v3907
        %v3932 = vpack.c.b16 %v3910, %v3908
        %v3933 = vpack.c.b16 %v3913, %v3911
        %v3934 = vpack.c.b16 %v3914, %v3912
        %v3935 = vpack.c.b16 %v3917, %v3915
        %v3936 = vpack.c.b16 %v3918, %v3916
        %v3937 = vpack.c.b16 %v3921, %v3919
        %v3938 = vpack.c.b16 %v3922, %v3920
        %3955 = vmatprep.subr.bf16.mxu0 %v3938
        %3956 = vmatpush1.bf16.msra.mxu0 %v3937
        %3957 = vmatprep.subr.bf16.mxu0 %v3936
        %3958 = vmatpush1.bf16.msra.mxu0 %v3935
        %3959 = vmatprep.subr.bf16.mxu0 %v3934
        %3960 = vmatpush1.bf16.msra.mxu0 %v3933
        %3961 = vmatprep.subr.bf16.mxu0 %v3932
        %3962 = vmatpush1.bf16.msra.mxu0 %v3931
        %3963 = vmatprep.subr.bf16.mxu0 %v3930
        %3964 = vmatpush1.bf16.msra.mxu0 %v3929
        %3965 = vmatprep.subr.bf16.mxu0 %v3928
        %3966 = vmatpush1.bf16.msra.mxu0 %v3927
        %3967 = vmatprep.subr.bf16.mxu0 %v3926
        %3968 = vmatpush1.bf16.msra.mxu0 %v3925
        %3969 = vmatprep.subr.bf16.mxu0 %v3924
        %3970 = vmatpush1.bf16.msra.mxu0 %v3923
        %3971 = vmatprep.subr.bf16.mxu0 0
        %3972 = vmatpush2.bf16.msra.mxu0 0
        %3973 = vmatprep.subr.bf16.mxu0 0
        %3974 = vmatpush2.bf16.msra.mxu0 0
        %3975 = vmatprep.subr.bf16.mxu0 0
        %3976 = vmatpush2.bf16.msra.mxu0 0
        %3977 = vmatprep.subr.bf16.mxu0 0
        %3978 = vmatpush2.bf16.msra.mxu0 0
        %3979 = vmatprep.subr.bf16.mxu0 0
        %3980 = vmatpush2.bf16.msra.mxu0 0
        %3981 = vmatprep.subr.bf16.mxu0 0
        %3982 = vmatpush2.bf16.msra.mxu0 0
        %3983 = vmatprep.subr.bf16.mxu0 0
        %3984 = vmatpush2.bf16.msra.mxu0 0
        %3985 = vmatprep.subr.bf16.mxu0 0
        %3986 = vmatpush2.bf16.msra.mxu0 0
        %3987 = vmatprep.mubr.bf16.mxu0 0
        %3988 = vmatmul.mubr.bf16.gmra.mxu0 %v3851
        %v3989 = vpop.f32.mrf.mxu0
        %v3990 = vadd.f32 0.0, %v3989
        %v3991 = vpop.f32.mrf.mxu0
        %v3992 = vadd.f32 0.0, %v3991
        %v3993 = vpop.f32.mrf.mxu0
        %v3994 = vadd.f32 0.0, %v3993
        %v3995 = vpop.f32.mrf.mxu0
        %v3996 = vadd.f32 0.0, %v3995
        %3997 = vmatprep.mubr.bf16.mxu0 0
        %3998 = vmatmul.mubr.bf16.gmra.mxu0 %v3852
        %v3999 = vpop.f32.mrf.mxu0
        %v4000 = vadd.f32 0.0, %v3999
        %v4001 = vpop.f32.mrf.mxu0
        %v4002 = vadd.f32 0.0, %v4001
        %v4003 = vpop.f32.mrf.mxu0
        %v4004 = vadd.f32 0.0, %v4003
        %v4005 = vpop.f32.mrf.mxu0
        %v4006 = vadd.f32 0.0, %v4005
        %4007 = vmatprep.mubr.bf16.mxu0 0
        %4008 = vmatmul.mubr.bf16.gmra.mxu0 %v3853
        %v4009 = vpop.f32.mrf.mxu0
        %v4010 = vadd.f32 0.0, %v4009
        %v4011 = vpop.f32.mrf.mxu0
        %v4012 = vadd.f32 0.0, %v4011
        %v4013 = vpop.f32.mrf.mxu0
        %v4014 = vadd.f32 0.0, %v4013
        %v4015 = vpop.f32.mrf.mxu0
        %v4016 = vadd.f32 0.0, %v4015
        %4017 = vmatprep.mubr.bf16.mxu0 0
        %4018 = vmatmul.mubr.bf16.gmra.mxu0 %v3854
        %v4019 = vpop.f32.mrf.mxu0
        %v4020 = vadd.f32 0.0, %v4019
        %v4021 = vpop.f32.mrf.mxu0
        %v4022 = vadd.f32 0.0, %v4021
        %v4023 = vpop.f32.mrf.mxu0
        %v4024 = vadd.f32 0.0, %v4023
        %v4025 = vpop.f32.mrf.mxu0
        %v4026 = vadd.f32 0.0, %v4025
        %4027 = vmatprep.mubr.bf16.mxu0 0
        %4028 = vmatmul.mubr.bf16.gmra.mxu0 %v3855
        %v4029 = vpop.f32.mrf.mxu0
        %v4030 = vadd.f32 0.0, %v4029
        %v4031 = vpop.f32.mrf.mxu0
        %v4032 = vadd.f32 0.0, %v4031
        %v4033 = vpop.f32.mrf.mxu0
        %v4034 = vadd.f32 0.0, %v4033
        %v4035 = vpop.f32.mrf.mxu0
        %v4036 = vadd.f32 0.0, %v4035
        %4037 = vmatprep.mubr.bf16.mxu0 0
        %4038 = vmatmul.mubr.bf16.gmra.mxu0 %v3856
        %v4039 = vpop.f32.mrf.mxu0
        %v4040 = vadd.f32 0.0, %v4039
        %v4041 = vpop.f32.mrf.mxu0
        %v4042 = vadd.f32 0.0, %v4041
        %v4043 = vpop.f32.mrf.mxu0
        %v4044 = vadd.f32 0.0, %v4043
        %v4045 = vpop.f32.mrf.mxu0
        %v4046 = vadd.f32 0.0, %v4045
        %4047 = vmatprep.mubr.bf16.mxu0 0
        %4048 = vmatmul.mubr.bf16.gmra.mxu0 %v3857
        %v4049 = vpop.f32.mrf.mxu0
        %v4050 = vadd.f32 0.0, %v4049
        %v4051 = vpop.f32.mrf.mxu0
        %v4052 = vadd.f32 0.0, %v4051
        %v4053 = vpop.f32.mrf.mxu0
        %v4054 = vadd.f32 0.0, %v4053
        %v4055 = vpop.f32.mrf.mxu0
        %v4056 = vadd.f32 0.0, %v4055
        %4057 = vdwg.mxu0
        %v4058 = vadd.f32 %v3809, %v3990
        %v4059 = vadd.f32 %v3810, %v3992
        %v4060 = vadd.f32 %v3811, %v3994
        %v4061 = vadd.f32 %v3812, %v3996
        %v4062 = vadd.f32 %v3813, %v4000
        %v4063 = vadd.f32 %v3814, %v4002
        %v4064 = vadd.f32 %v3815, %v4004
        %v4065 = vadd.f32 %v3816, %v4006
        %v4066 = vadd.f32 %v3817, %v4010
        %v4067 = vadd.f32 %v3818, %v4012
        %v4068 = vadd.f32 %v3819, %v4014
        %v4069 = vadd.f32 %v3820, %v4016
        %v4070 = vadd.f32 %v3821, %v4020
        %v4071 = vadd.f32 %v3822, %v4022
        %v4072 = vadd.f32 %v3823, %v4024
        %v4073 = vadd.f32 %v3824, %v4026
        %v4074 = vadd.f32 %v3825, %v4030
        %v4075 = vadd.f32 %v3826, %v4032
        %v4076 = vadd.f32 %v3827, %v4034
        %v4077 = vadd.f32 %v3828, %v4036
        %v4078 = vadd.f32 %v3829, %v4040
        %v4079 = vadd.f32 %v3830, %v4042
        %v4080 = vadd.f32 %v3831, %v4044
        %v4081 = vadd.f32 %v3832, %v4046
        %v4082 = vadd.f32 %v3833, %v4050
        %v4083 = vadd.f32 %v3834, %v4052
        %v4084 = vadd.f32 %v3835, %v4054
        %v4085 = vadd.f32 %v3836, %v4056
        %v4086 = vld [vmem:[#allocation2 + $0x4] sm:$0xff]
        %v4087 = vld [vmem:[#allocation2 + $0xc] sm:$0xff]
        %v4088 = vld [vmem:[#allocation2 + $0x14] sm:$0xff]
        %v4089 = vld [vmem:[#allocation2 + $0x1c] sm:$0xff]
        %v4090 = vld [vmem:[#allocation2 + $0x24] sm:$0xff]
        %v4091 = vld [vmem:[#allocation2 + $0x2c] sm:$0xff]
        %v4092 = vld [vmem:[#allocation2 + $0x34] sm:$0xff]
        %v4093 = vld [vmem:[#allocation2 + $0x3c] sm:$0xff]
        %v4094 = vld [vmem:[#allocation2 + $0x44] sm:$0xff]
        %v4095 = vld [vmem:[#allocation2 + $0x4c] sm:$0xff]
        %v4096 = vld [vmem:[#allocation2 + $0x54] sm:$0xff]
        %v4097 = vld [vmem:[#allocation2 + $0x5c] sm:$0xff]
        %v4098 = vld [vmem:[#allocation2 + $0x64] sm:$0xff]
        %v4099 = vld [vmem:[#allocation2 + $0x6c] sm:$0xf]
        %v4100 = vpack.c.bf16 %v4087, %v4086
        %v4101 = vpack.c.bf16 %v4089, %v4088
        %v4102 = vpack.c.bf16 %v4091, %v4090
        %v4103 = vpack.c.bf16 %v4093, %v4092
        %v4104 = vpack.c.bf16 %v4095, %v4094
        %v4105 = vpack.c.bf16 %v4097, %v4096
        %v4106 = vpack.c.bf16 %v4099, %v4098
        %s4107 = scalar_lea.vmem %s3, 512
        %v4108 = vld [vmem:[%s4107] sm:$0xff]
        %v4109 = vld [vmem:[%s4107 + $0x8] sm:$0xff]
        %v4110 = vld [vmem:[%s4107 + $0x10] sm:$0xff]
        %v4111 = vld [vmem:[%s4107 + $0x18] sm:$0xff]
        %v4112 = vld [vmem:[%s4107 + $0x20] sm:$0xff]
        %v4113 = vld [vmem:[%s4107 + $0x28] sm:$0xff]
        %v4114 = vld [vmem:[%s4107 + $0x30] sm:$0xff]
        %v4115 = vld [vmem:[%s4107 + $0x38] sm:$0xff]
        %v4116 = vld [vmem:[%s4107 + $0x40] sm:$0xff]
        %v4117 = vld [vmem:[%s4107 + $0x48] sm:$0xff]
        %v4118 = vld [vmem:[%s4107 + $0x50] sm:$0xff]
        %v4119 = vld [vmem:[%s4107 + $0x58] sm:$0xff]
        %v4120 = vld [vmem:[%s4107 + $0x60] sm:$0xff]
        %v4121 = vld [vmem:[%s4107 + $0x68] sm:$0xff]
        %v4122 = vld [vmem:[%s4107 + $0x70] sm:$0xff]
        %v4123 = vld [vmem:[%s4107 + $0x78] sm:$0xff]
        %v4140 = vunpack.c.l.b16 %v4108
        %v4141 = vunpack.c.h.b16 %v4108
        %v4142 = vunpack.c.l.b16 %v4109
        %v4143 = vunpack.c.h.b16 %v4109
        %v4144 = vunpack.c.l.b16 %v4110
        %v4145 = vunpack.c.h.b16 %v4110
        %v4146 = vunpack.c.l.b16 %v4111
        %v4147 = vunpack.c.h.b16 %v4111
        %v4148 = vunpack.c.l.b16 %v4112
        %v4149 = vunpack.c.h.b16 %v4112
        %v4150 = vunpack.c.l.b16 %v4113
        %v4151 = vunpack.c.h.b16 %v4113
        %v4152 = vunpack.c.l.b16 %v4114
        %v4153 = vunpack.c.h.b16 %v4114
        %v4154 = vunpack.c.l.b16 %v4115
        %v4155 = vunpack.c.h.b16 %v4115
        %v4156 = vunpack.c.l.b16 %v4116
        %v4157 = vunpack.c.h.b16 %v4116
        %v4158 = vunpack.c.l.b16 %v4117
        %v4159 = vunpack.c.h.b16 %v4117
        %v4160 = vunpack.c.l.b16 %v4118
        %v4161 = vunpack.c.h.b16 %v4118
        %v4162 = vunpack.c.l.b16 %v4119
        %v4163 = vunpack.c.h.b16 %v4119
        %v4164 = vunpack.c.l.b16 %v4120
        %v4165 = vunpack.c.h.b16 %v4120
        %v4166 = vunpack.c.l.b16 %v4121
        %v4167 = vunpack.c.h.b16 %v4121
        %v4168 = vunpack.c.l.b16 %v4122
        %v4169 = vunpack.c.h.b16 %v4122
        %v4170 = vunpack.c.l.b16 %v4123
        %v4171 = vunpack.c.h.b16 %v4123
        %v4172 = vpack.c.b16 %v4142, %v4140
        %v4173 = vpack.c.b16 %v4143, %v4141
        %v4174 = vpack.c.b16 %v4146, %v4144
        %v4175 = vpack.c.b16 %v4147, %v4145
        %v4176 = vpack.c.b16 %v4150, %v4148
        %v4177 = vpack.c.b16 %v4151, %v4149
        %v4178 = vpack.c.b16 %v4154, %v4152
        %v4179 = vpack.c.b16 %v4155, %v4153
        %v4180 = vpack.c.b16 %v4158, %v4156
        %v4181 = vpack.c.b16 %v4159, %v4157
        %v4182 = vpack.c.b16 %v4162, %v4160
        %v4183 = vpack.c.b16 %v4163, %v4161
        %v4184 = vpack.c.b16 %v4166, %v4164
        %v4185 = vpack.c.b16 %v4167, %v4165
        %v4186 = vpack.c.b16 %v4170, %v4168
        %v4187 = vpack.c.b16 %v4171, %v4169
        %4204 = vmatprep.subr.bf16.mxu0 %v4187
        %4205 = vmatpush1.bf16.msra.mxu0 %v4186
        %4206 = vmatprep.subr.bf16.mxu0 %v4185
        %4207 = vmatpush1.bf16.msra.mxu0 %v4184
        %4208 = vmatprep.subr.bf16.mxu0 %v4183
        %4209 = vmatpush1.bf16.msra.mxu0 %v4182
        %4210 = vmatprep.subr.bf16.mxu0 %v4181
        %4211 = vmatpush1.bf16.msra.mxu0 %v4180
        %4212 = vmatprep.subr.bf16.mxu0 %v4179
        %4213 = vmatpush1.bf16.msra.mxu0 %v4178
        %4214 = vmatprep.subr.bf16.mxu0 %v4177
        %4215 = vmatpush1.bf16.msra.mxu0 %v4176
        %4216 = vmatprep.subr.bf16.mxu0 %v4175
        %4217 = vmatpush1.bf16.msra.mxu0 %v4174
        %4218 = vmatprep.subr.bf16.mxu0 %v4173
        %4219 = vmatpush1.bf16.msra.mxu0 %v4172
        %4220 = vmatprep.subr.bf16.mxu0 0
        %4221 = vmatpush2.bf16.msra.mxu0 0
        %4222 = vmatprep.subr.bf16.mxu0 0
        %4223 = vmatpush2.bf16.msra.mxu0 0
        %4224 = vmatprep.subr.bf16.mxu0 0
        %4225 = vmatpush2.bf16.msra.mxu0 0
        %4226 = vmatprep.subr.bf16.mxu0 0
        %4227 = vmatpush2.bf16.msra.mxu0 0
        %4228 = vmatprep.subr.bf16.mxu0 0
        %4229 = vmatpush2.bf16.msra.mxu0 0
        %4230 = vmatprep.subr.bf16.mxu0 0
        %4231 = vmatpush2.bf16.msra.mxu0 0
        %4232 = vmatprep.subr.bf16.mxu0 0
        %4233 = vmatpush2.bf16.msra.mxu0 0
        %4234 = vmatprep.subr.bf16.mxu0 0
        %4235 = vmatpush2.bf16.msra.mxu0 0
        %4236 = vmatprep.mubr.bf16.mxu0 0
        %4237 = vmatmul.mubr.bf16.gmra.mxu0 %v4100
        %v4238 = vpop.f32.mrf.mxu0
        %v4239 = vadd.f32 0.0, %v4238
        %v4240 = vpop.f32.mrf.mxu0
        %v4241 = vadd.f32 0.0, %v4240
        %v4242 = vpop.f32.mrf.mxu0
        %v4243 = vadd.f32 0.0, %v4242
        %v4244 = vpop.f32.mrf.mxu0
        %v4245 = vadd.f32 0.0, %v4244
        %4246 = vmatprep.mubr.bf16.mxu0 0
        %4247 = vmatmul.mubr.bf16.gmra.mxu0 %v4101
        %v4248 = vpop.f32.mrf.mxu0
        %v4249 = vadd.f32 0.0, %v4248
        %v4250 = vpop.f32.mrf.mxu0
        %v4251 = vadd.f32 0.0, %v4250
        %v4252 = vpop.f32.mrf.mxu0
        %v4253 = vadd.f32 0.0, %v4252
        %v4254 = vpop.f32.mrf.mxu0
        %v4255 = vadd.f32 0.0, %v4254
        %4256 = vmatprep.mubr.bf16.mxu0 0
        %4257 = vmatmul.mubr.bf16.gmra.mxu0 %v4102
        %v4258 = vpop.f32.mrf.mxu0
        %v4259 = vadd.f32 0.0, %v4258
        %v4260 = vpop.f32.mrf.mxu0
        %v4261 = vadd.f32 0.0, %v4260
        %v4262 = vpop.f32.mrf.mxu0
        %v4263 = vadd.f32 0.0, %v4262
        %v4264 = vpop.f32.mrf.mxu0
        %v4265 = vadd.f32 0.0, %v4264
        %4266 = vmatprep.mubr.bf16.mxu0 0
        %4267 = vmatmul.mubr.bf16.gmra.mxu0 %v4103
        %v4268 = vpop.f32.mrf.mxu0
        %v4269 = vadd.f32 0.0, %v4268
        %v4270 = vpop.f32.mrf.mxu0
        %v4271 = vadd.f32 0.0, %v4270
        %v4272 = vpop.f32.mrf.mxu0
        %v4273 = vadd.f32 0.0, %v4272
        %v4274 = vpop.f32.mrf.mxu0
        %v4275 = vadd.f32 0.0, %v4274
        %4276 = vmatprep.mubr.bf16.mxu0 0
        %4277 = vmatmul.mubr.bf16.gmra.mxu0 %v4104
        %v4278 = vpop.f32.mrf.mxu0
        %v4279 = vadd.f32 0.0, %v4278
        %v4280 = vpop.f32.mrf.mxu0
        %v4281 = vadd.f32 0.0, %v4280
        %v4282 = vpop.f32.mrf.mxu0
        %v4283 = vadd.f32 0.0, %v4282
        %v4284 = vpop.f32.mrf.mxu0
        %v4285 = vadd.f32 0.0, %v4284
        %4286 = vmatprep.mubr.bf16.mxu0 0
        %4287 = vmatmul.mubr.bf16.gmra.mxu0 %v4105
        %v4288 = vpop.f32.mrf.mxu0
        %v4289 = vadd.f32 0.0, %v4288
        %v4290 = vpop.f32.mrf.mxu0
        %v4291 = vadd.f32 0.0, %v4290
        %v4292 = vpop.f32.mrf.mxu0
        %v4293 = vadd.f32 0.0, %v4292
        %v4294 = vpop.f32.mrf.mxu0
        %v4295 = vadd.f32 0.0, %v4294
        %4296 = vmatprep.mubr.bf16.mxu0 0
        %4297 = vmatmul.mubr.bf16.gmra.mxu0 %v4106
        %v4298 = vpop.f32.mrf.mxu0
        %v4299 = vadd.f32 0.0, %v4298
        %v4300 = vpop.f32.mrf.mxu0
        %v4301 = vadd.f32 0.0, %v4300
        %v4302 = vpop.f32.mrf.mxu0
        %v4303 = vadd.f32 0.0, %v4302
        %v4304 = vpop.f32.mrf.mxu0
        %v4305 = vadd.f32 0.0, %v4304
        %4306 = vdwg.mxu0
        %v4307 = vadd.f32 %v4058, %v4239
        %v4308 = vadd.f32 %v4059, %v4241
        %v4309 = vadd.f32 %v4060, %v4243
        %v4310 = vadd.f32 %v4061, %v4245
        %v4311 = vadd.f32 %v4062, %v4249
        %v4312 = vadd.f32 %v4063, %v4251
        %v4313 = vadd.f32 %v4064, %v4253
        %v4314 = vadd.f32 %v4065, %v4255
        %v4315 = vadd.f32 %v4066, %v4259
        %v4316 = vadd.f32 %v4067, %v4261
        %v4317 = vadd.f32 %v4068, %v4263
        %v4318 = vadd.f32 %v4069, %v4265
        %v4319 = vadd.f32 %v4070, %v4269
        %v4320 = vadd.f32 %v4071, %v4271
        %v4321 = vadd.f32 %v4072, %v4273
        %v4322 = vadd.f32 %v4073, %v4275
        %v4323 = vadd.f32 %v4074, %v4279
        %v4324 = vadd.f32 %v4075, %v4281
        %v4325 = vadd.f32 %v4076, %v4283
        %v4326 = vadd.f32 %v4077, %v4285
        %v4327 = vadd.f32 %v4078, %v4289
        %v4328 = vadd.f32 %v4079, %v4291
        %v4329 = vadd.f32 %v4080, %v4293
        %v4330 = vadd.f32 %v4081, %v4295
        %v4331 = vadd.f32 %v4082, %v4299
        %v4332 = vadd.f32 %v4083, %v4301
        %v4333 = vadd.f32 %v4084, %v4303
        %v4334 = vadd.f32 %v4085, %v4305
        %v4335 = vmax.f32 %v4307, 0.0
        %v4336 = vmax.f32 %v4308, 0.0
        %v4337 = vmax.f32 %v4309, 0.0
        %v4338 = vmax.f32 %v4310, 0.0
        %v4339 = vmax.f32 %v4311, 0.0
        %v4340 = vmax.f32 %v4312, 0.0
        %v4341 = vmax.f32 %v4313, 0.0
        %v4342 = vmax.f32 %v4314, 0.0
        %v4343 = vmax.f32 %v4315, 0.0
        %v4344 = vmax.f32 %v4316, 0.0
        %v4345 = vmax.f32 %v4317, 0.0
        %v4346 = vmax.f32 %v4318, 0.0
        %v4347 = vmax.f32 %v4319, 0.0
        %v4348 = vmax.f32 %v4320, 0.0
        %v4349 = vmax.f32 %v4321, 0.0
        %v4350 = vmax.f32 %v4322, 0.0
        %v4351 = vmax.f32 %v4323, 0.0
        %v4352 = vmax.f32 %v4324, 0.0
        %v4353 = vmax.f32 %v4325, 0.0
        %v4354 = vmax.f32 %v4326, 0.0
        %v4355 = vmax.f32 %v4327, 0.0
        %v4356 = vmax.f32 %v4328, 0.0
        %v4357 = vmax.f32 %v4329, 0.0
        %v4358 = vmax.f32 %v4330, 0.0
        %v4359 = vmax.f32 %v4331, 0.0
        %v4360 = vmax.f32 %v4332, 0.0
        %v4361 = vmax.f32 %v4333, 0.0
        %v4362 = vmax.f32 %v4334, 0.0
        %v4363 = vpack.c.bf16 %v4337, %v4335
        %v4364 = vpack.c.bf16 %v4338, %v4336
        %v4365 = vpack.c.bf16 %v4341, %v4339
        %v4366 = vpack.c.bf16 %v4342, %v4340
        %v4367 = vpack.c.bf16 %v4345, %v4343
        %v4368 = vpack.c.bf16 %v4346, %v4344
        %v4369 = vpack.c.bf16 %v4349, %v4347
        %v4370 = vpack.c.bf16 %v4350, %v4348
        %v4371 = vpack.c.bf16 %v4353, %v4351
        %v4372 = vpack.c.bf16 %v4354, %v4352
        %v4373 = vpack.c.bf16 %v4357, %v4355
        %v4374 = vpack.c.bf16 %v4358, %v4356
        %v4375 = vpack.c.bf16 %v4361, %v4359
        %v4376 = vpack.c.bf16 %v4362, %v4360
        %v4377 = vld [vmem:[%s7] sm:$0xf]
        %v4378 = vld [vmem:[%s7 + $0x4] sm:$0xf]
        %v4379 = vld [vmem:[%s7 + $0x8] sm:$0xf]
        %v4380 = vld [vmem:[%s7 + $0xc] sm:$0xf]
        %v4381 = vld [vmem:[%s7 + $0x10] sm:$0xf]
        %v4387 = vunpack.c.l.b16 %v4377
        %v4388 = vunpack.c.l.b16 %v4378
        %v4389 = vunpack.c.l.b16 %v4379
        %v4390 = vunpack.c.l.b16 %v4380
        %v4391 = vunpack.c.l.b16 %v4381
        %v4392 = vpack.c.b16 %v4388, %v4387
        %v4393 = vpack.c.b16 %v4390, %v4389
        %v4394 = vpack.c.b16 %v4391, %v4391
        %vm4395 = vcmask 883712
        %v4397 = vsel %vm4395, %v4392, 0
        %v4400 = vsel %vm4395, %v4393, 0
        %v4403 = vsel %vm4395, %v4394, 0
        %v4406 = vsel %vm2712, %v4375, 0
        %v4409 = vsel %vm2712, %v4376, 0
        %4411 = vmatprep.subr.bf16.mxu0 0
        %4412 = vmatpush1.bf16.msra.mxu0 0
        %4413 = vmatprep.subr.bf16.mxu0 %v4409
        %4414 = vmatpush1.bf16.msra.mxu0 %v4406
        %4415 = vmatprep.subr.bf16.mxu0 %v4374
        %4416 = vmatpush1.bf16.msra.mxu0 %v4373
        %4417 = vmatprep.subr.bf16.mxu0 %v4372
        %4418 = vmatpush1.bf16.msra.mxu0 %v4371
        %4419 = vmatprep.subr.bf16.mxu0 %v4370
        %4420 = vmatpush1.bf16.msra.mxu0 %v4369
        %4421 = vmatprep.subr.bf16.mxu0 %v4368
        %4422 = vmatpush1.bf16.msra.mxu0 %v4367
        %4423 = vmatprep.subr.bf16.mxu0 %v4366
        %4424 = vmatpush1.bf16.msra.mxu0 %v4365
        %4425 = vmatprep.subr.bf16.mxu0 %v4364
        %4426 = vmatpush1.bf16.msra.mxu0 %v4363
        %4427 = vmatprep.subr.bf16.mxu0 0
        %4428 = vmatpush2.bf16.msra.mxu0 0
        %4429 = vmatprep.subr.bf16.mxu0 0
        %4430 = vmatpush2.bf16.msra.mxu0 0
        %4431 = vmatprep.subr.bf16.mxu0 0
        %4432 = vmatpush2.bf16.msra.mxu0 0
        %4433 = vmatprep.subr.bf16.mxu0 0
        %4434 = vmatpush2.bf16.msra.mxu0 0
        %4435 = vmatprep.subr.bf16.mxu0 0
        %4436 = vmatpush2.bf16.msra.mxu0 0
        %4437 = vmatprep.subr.bf16.mxu0 0
        %4438 = vmatpush2.bf16.msra.mxu0 0
        %4439 = vmatprep.subr.bf16.mxu0 0
        %4440 = vmatpush2.bf16.msra.mxu0 0
        %4441 = vmatprep.subr.bf16.mxu0 0
        %4442 = vmatpush2.bf16.msra.mxu0 0
        %4443 = vmatprep.mubr.bf16.mxu0 0
        %4444 = vmatmul.mubr.bf16.gmra.mxu0 %v4397
        %v4445 = vpop.f32.mrf.mxu0
        %v4446 = vadd.f32 0.0, %v4445
        %v4447 = vpop.f32.mrf.mxu0
        %v4448 = vadd.f32 0.0, %v4447
        %v4449 = vpop.f32.mrf.mxu0
        %v4450 = vadd.f32 0.0, %v4449
        %v4451 = vpop.f32.mrf.mxu0
        %v4452 = vadd.f32 0.0, %v4451
        %4453 = vmatprep.mubr.bf16.mxu0 0
        %4454 = vmatmul.mubr.bf16.gmra.mxu0 %v4400
        %v4455 = vpop.f32.mrf.mxu0
        %v4456 = vadd.f32 0.0, %v4455
        %v4457 = vpop.f32.mrf.mxu0
        %v4458 = vadd.f32 0.0, %v4457
        %v4459 = vpop.f32.mrf.mxu0
        %v4460 = vadd.f32 0.0, %v4459
        %v4461 = vpop.f32.mrf.mxu0
        %v4462 = vadd.f32 0.0, %v4461
        %4463 = vmatprep.mubr.bf16.mxu0 0
        %4464 = vmatmul.mubr.bf16.gmra.mxu0 %v4403
        %v4465 = vpop.f32.mrf.mxu0
        %v4466 = vadd.f32 0.0, %v4465
        %v4467 = vpop.f32.mrf.mxu0
        %v4468 = vadd.f32 0.0, %v4467
        %v4469 = vpop.f32.mrf.mxu0
        %v4470 = vpop.f32.mrf.mxu0
        %4471 = vdwg.mxu0
        %v4472 = vld [vmem:[%s8] sm:$0xf]
        %v4473 = vld [vmem:[%s8 + $0x4] sm:$0xf]
        %v4474 = vld [vmem:[%s8 + $0x8] sm:$0xf]
        %v4475 = vld [vmem:[%s8 + $0xc] sm:$0xf]
        %v4476 = vld [vmem:[%s8 + $0x10] sm:$0xf]
        %v4482 = vunpack.c.l.b16 %v4472
        %v4483 = vunpack.c.l.b16 %v4473
        %v4484 = vunpack.c.l.b16 %v4474
        %v4485 = vunpack.c.l.b16 %v4475
        %v4486 = vunpack.c.l.b16 %v4476
        %v4487 = vpack.c.b16 %v4483, %v4482
        %v4488 = vpack.c.b16 %v4485, %v4484
        %v4489 = vpack.c.b16 %v4486, %v4486
        %v4491 = vsel %vm4395, %v4487, 0
        %v4494 = vsel %vm4395, %v4488, 0
        %v4497 = vsel %vm4395, %v4489, 0
        %4499 = vmatprep.subr.bf16.mxu0 0
        %4500 = vmatpush1.bf16.msra.mxu0 0
        %4501 = vmatprep.subr.bf16.mxu0 %v4409
        %4502 = vmatpush1.bf16.msra.mxu0 %v4406
        %4503 = vmatprep.subr.bf16.mxu0 %v4374
        %4504 = vmatpush1.bf16.msra.mxu0 %v4373
        %4505 = vmatprep.subr.bf16.mxu0 %v4372
        %4506 = vmatpush1.bf16.msra.mxu0 %v4371
        %4507 = vmatprep.subr.bf16.mxu0 %v4370
        %4508 = vmatpush1.bf16.msra.mxu0 %v4369
        %4509 = vmatprep.subr.bf16.mxu0 %v4368
        %4510 = vmatpush1.bf16.msra.mxu0 %v4367
        %4511 = vmatprep.subr.bf16.mxu0 %v4366
        %4512 = vmatpush1.bf16.msra.mxu0 %v4365
        %4513 = vmatprep.subr.bf16.mxu0 %v4364
        %4514 = vmatpush1.bf16.msra.mxu0 %v4363
        %4515 = vmatprep.subr.bf16.mxu0 0
        %4516 = vmatpush2.bf16.msra.mxu0 0
        %4517 = vmatprep.subr.bf16.mxu0 0
        %4518 = vmatpush2.bf16.msra.mxu0 0
        %4519 = vmatprep.subr.bf16.mxu0 0
        %4520 = vmatpush2.bf16.msra.mxu0 0
        %4521 = vmatprep.subr.bf16.mxu0 0
        %4522 = vmatpush2.bf16.msra.mxu0 0
        %4523 = vmatprep.subr.bf16.mxu0 0
        %4524 = vmatpush2.bf16.msra.mxu0 0
        %4525 = vmatprep.subr.bf16.mxu0 0
        %4526 = vmatpush2.bf16.msra.mxu0 0
        %4527 = vmatprep.subr.bf16.mxu0 0
        %4528 = vmatpush2.bf16.msra.mxu0 0
        %4529 = vmatprep.subr.bf16.mxu0 0
        %4530 = vmatpush2.bf16.msra.mxu0 0
        %4531 = vmatprep.mubr.bf16.mxu0 0
        %4532 = vmatmul.mubr.bf16.gmra.mxu0 %v4491
        %v4533 = vpop.f32.mrf.mxu0
        %v4534 = vadd.f32 0.0, %v4533
        %v4535 = vpop.f32.mrf.mxu0
        %v4536 = vadd.f32 0.0, %v4535
        %v4537 = vpop.f32.mrf.mxu0
        %v4538 = vadd.f32 0.0, %v4537
        %v4539 = vpop.f32.mrf.mxu0
        %v4540 = vadd.f32 0.0, %v4539
        %4541 = vmatprep.mubr.bf16.mxu0 0
        %4542 = vmatmul.mubr.bf16.gmra.mxu0 %v4494
        %v4543 = vpop.f32.mrf.mxu0
        %v4544 = vadd.f32 0.0, %v4543
        %v4545 = vpop.f32.mrf.mxu0
        %v4546 = vadd.f32 0.0, %v4545
        %v4547 = vpop.f32.mrf.mxu0
        %v4548 = vadd.f32 0.0, %v4547
        %v4549 = vpop.f32.mrf.mxu0
        %v4550 = vadd.f32 0.0, %v4549
        %4551 = vmatprep.mubr.bf16.mxu0 0
        %4552 = vmatmul.mubr.bf16.gmra.mxu0 %v4497
        %v4553 = vpop.f32.mrf.mxu0
        %v4554 = vadd.f32 0.0, %v4553
        %v4555 = vpop.f32.mrf.mxu0
        %v4556 = vadd.f32 0.0, %v4555
        %v4557 = vpop.f32.mrf.mxu0
        %v4558 = vpop.f32.mrf.mxu0
        %4559 = vdwg.mxu0
        %v4560 = vmax.f32 %v4446, %v4534
        %v4561 = vmax.f32 %v4448, %v4536
        %v4562 = vmax.f32 %v4450, %v4538
        %v4563 = vmax.f32 %v4452, %v4540
        %v4564 = vmax.f32 %v4456, %v4544
        %v4565 = vmax.f32 %v4458, %v4546
        %v4566 = vmax.f32 %v4460, %v4548
        %v4567 = vmax.f32 %v4462, %v4550
        %v4568 = vmax.f32 %v4466, %v4554
        %v4569 = vmax.f32 %v4468, %v4556
        %v4570 = vmax.f32 %v4560, %v4561
        %v4571 = vmax.f32 %v4562, %v4563
        %v4572 = vmax.f32 %v4564, %v4565
        %v4573 = vmax.f32 %v4566, %v4567
        %v4574 = vmax.f32 %v4568, %v4569
        %v4575 = vld [vmem:[%s10] sm:$0x1]
        %v4577 = vlaneseq
        %v4578 = vshrl.u32 %v4577, 7
        %v4579 = vsub.s32 0, %v4578
        %v4580 = vrot.slane %v4575, %v4579
        %v4582 = vpack.c.bf16 %v4570, %v4570
        %v4583 = vld [vmem:[%s9] sm:$0xf]
        %v4584 = vld [vmem:[%s9 + $0x4] sm:$0xf]
        %v4585 = vld [vmem:[%s9 + $0x8] sm:$0xf]
        %v4586 = vld [vmem:[%s9 + $0xc] sm:$0xf]
        %v4587 = vld [vmem:[%s9 + $0x10] sm:$0xf]
        %v4588 = vld [vmem:[%s9 + $0x14] sm:$0xf]
        %v4589 = vld [vmem:[%s9 + $0x18] sm:$0xf]
        %v4590 = vld [vmem:[%s9 + $0x1c] sm:$0xf]
        %v4591 = vld [vmem:[%s9 + $0x20] sm:$0xf]
        %v4592 = vld [vmem:[%s9 + $0x24] sm:$0xf]
        %v4593 = vld [vmem:[%s9 + $0x28] sm:$0xf]
        %v4594 = vld [vmem:[%s9 + $0x2c] sm:$0xf]
        %v4595 = vld [vmem:[%s9 + $0x30] sm:$0xf]
        %v4596 = vld [vmem:[%s9 + $0x34] sm:$0xf]
        %v4597 = vld [vmem:[%s9 + $0x38] sm:$0xf]
        %v4598 = vld [vmem:[%s9 + $0x3c] sm:$0xf]
        %v4615 = vunpack.c.l.b16 %v4583
        %v4616 = vunpack.c.l.b16 %v4584
        %v4617 = vunpack.c.l.b16 %v4585
        %v4618 = vunpack.c.l.b16 %v4586
        %v4619 = vunpack.c.l.b16 %v4587
        %v4620 = vunpack.c.l.b16 %v4588
        %v4621 = vunpack.c.l.b16 %v4589
        %v4622 = vunpack.c.l.b16 %v4590
        %v4623 = vunpack.c.l.b16 %v4591
        %v4624 = vunpack.c.l.b16 %v4592
        %v4625 = vunpack.c.l.b16 %v4593
        %v4626 = vunpack.c.l.b16 %v4594
        %v4627 = vunpack.c.l.b16 %v4595
        %v4628 = vunpack.c.l.b16 %v4596
        %v4629 = vunpack.c.l.b16 %v4597
        %v4630 = vunpack.c.l.b16 %v4598
        %v4631 = vpack.c.b16 %v4616, %v4615
        %v4632 = vpack.c.b16 %v4618, %v4617
        %v4633 = vpack.c.b16 %v4620, %v4619
        %v4634 = vpack.c.b16 %v4622, %v4621
        %v4635 = vpack.c.b16 %v4624, %v4623
        %v4636 = vpack.c.b16 %v4626, %v4625
        %v4637 = vpack.c.b16 %v4628, %v4627
        %v4638 = vpack.c.b16 %v4630, %v4629
        %4647 = vmatprep.subr.bf16.mxu0 0
        %4648 = vmatpush1.bf16.msra.mxu0 %v4638
        %4649 = vmatprep.subr.bf16.mxu0 0
        %4650 = vmatpush1.bf16.msra.mxu0 %v4637
        %4651 = vmatprep.subr.bf16.mxu0 0
        %4652 = vmatpush1.bf16.msra.mxu0 %v4636
        %4653 = vmatprep.subr.bf16.mxu0 0
        %4654 = vmatpush1.bf16.msra.mxu0 %v4635
        %4655 = vmatprep.subr.bf16.mxu0 0
        %4656 = vmatpush1.bf16.msra.mxu0 %v4634
        %4657 = vmatprep.subr.bf16.mxu0 0
        %4658 = vmatpush1.bf16.msra.mxu0 %v4633
        %4659 = vmatprep.subr.bf16.mxu0 0
        %4660 = vmatpush1.bf16.msra.mxu0 %v4632
        %4661 = vmatprep.subr.bf16.mxu0 0
        %4662 = vmatpush1.bf16.msra.mxu0 %v4631
        %4663 = vmatprep.subr.bf16.mxu0 0
        %4664 = vmatpush2.bf16.msra.mxu0 0
        %4665 = vmatprep.subr.bf16.mxu0 0
        %4666 = vmatpush2.bf16.msra.mxu0 0
        %4667 = vmatprep.subr.bf16.mxu0 0
        %4668 = vmatpush2.bf16.msra.mxu0 0
        %4669 = vmatprep.subr.bf16.mxu0 0
        %4670 = vmatpush2.bf16.msra.mxu0 0
        %4671 = vmatprep.subr.bf16.mxu0 0
        %4672 = vmatpush2.bf16.msra.mxu0 0
        %4673 = vmatprep.subr.bf16.mxu0 0
        %4674 = vmatpush2.bf16.msra.mxu0 0
        %4675 = vmatprep.subr.bf16.mxu0 0
        %4676 = vmatpush2.bf16.msra.mxu0 0
        %4677 = vmatprep.subr.bf16.mxu0 0
        %4678 = vmatpush2.bf16.msra.mxu0 0
        %4679 = vmatprep.mubr.bf16.mxu0 0
        %4680 = vmatmul.mubr.bf16.gmra.mxu0 %v4582
        %v4681 = vpop.f32.mrf.mxu0
        %v4682 = vadd.f32 0.0, %v4681
        %v4683 = vpop.f32.mrf.mxu0
        %v4684 = vpop.f32.mrf.mxu0
        %v4685 = vpop.f32.mrf.mxu0
        %4686 = vdwg.mxu0
        %v4687 = vadd.f32 %v4580, %v4682
        %v4688 = vpack.c.bf16 %v4571, %v4571
        %s4689 = scalar_lea.vmem %s9, 64
        %v4690 = vld [vmem:[%s4689] sm:$0xf]
        %v4691 = vld [vmem:[%s4689 + $0x4] sm:$0xf]
        %v4692 = vld [vmem:[%s4689 + $0x8] sm:$0xf]
        %v4693 = vld [vmem:[%s4689 + $0xc] sm:$0xf]
        %v4694 = vld [vmem:[%s4689 + $0x10] sm:$0xf]
        %v4695 = vld [vmem:[%s4689 + $0x14] sm:$0xf]
        %v4696 = vld [vmem:[%s4689 + $0x18] sm:$0xf]
        %v4697 = vld [vmem:[%s4689 + $0x1c] sm:$0xf]
        %v4698 = vld [vmem:[%s4689 + $0x20] sm:$0xf]
        %v4699 = vld [vmem:[%s4689 + $0x24] sm:$0xf]
        %v4700 = vld [vmem:[%s4689 + $0x28] sm:$0xf]
        %v4701 = vld [vmem:[%s4689 + $0x2c] sm:$0xf]
        %v4702 = vld [vmem:[%s4689 + $0x30] sm:$0xf]
        %v4703 = vld [vmem:[%s4689 + $0x34] sm:$0xf]
        %v4704 = vld [vmem:[%s4689 + $0x38] sm:$0xf]
        %v4705 = vld [vmem:[%s4689 + $0x3c] sm:$0xf]
        %v4722 = vunpack.c.l.b16 %v4690
        %v4723 = vunpack.c.l.b16 %v4691
        %v4724 = vunpack.c.l.b16 %v4692
        %v4725 = vunpack.c.l.b16 %v4693
        %v4726 = vunpack.c.l.b16 %v4694
        %v4727 = vunpack.c.l.b16 %v4695
        %v4728 = vunpack.c.l.b16 %v4696
        %v4729 = vunpack.c.l.b16 %v4697
        %v4730 = vunpack.c.l.b16 %v4698
        %v4731 = vunpack.c.l.b16 %v4699
        %v4732 = vunpack.c.l.b16 %v4700
        %v4733 = vunpack.c.l.b16 %v4701
        %v4734 = vunpack.c.l.b16 %v4702
        %v4735 = vunpack.c.l.b16 %v4703
        %v4736 = vunpack.c.l.b16 %v4704
        %v4737 = vunpack.c.l.b16 %v4705
        %v4738 = vpack.c.b16 %v4723, %v4722
        %v4739 = vpack.c.b16 %v4725, %v4724
        %v4740 = vpack.c.b16 %v4727, %v4726
        %v4741 = vpack.c.b16 %v4729, %v4728
        %v4742 = vpack.c.b16 %v4731, %v4730
        %v4743 = vpack.c.b16 %v4733, %v4732
        %v4744 = vpack.c.b16 %v4735, %v4734
        %v4745 = vpack.c.b16 %v4737, %v4736
        %4754 = vmatprep.subr.bf16.mxu0 0
        %4755 = vmatpush1.bf16.msra.mxu0 %v4745
        %4756 = vmatprep.subr.bf16.mxu0 0
        %4757 = vmatpush1.bf16.msra.mxu0 %v4744
        %4758 = vmatprep.subr.bf16.mxu0 0
        %4759 = vmatpush1.bf16.msra.mxu0 %v4743
        %4760 = vmatprep.subr.bf16.mxu0 0
        %4761 = vmatpush1.bf16.msra.mxu0 %v4742
        %4762 = vmatprep.subr.bf16.mxu0 0
        %4763 = vmatpush1.bf16.msra.mxu0 %v4741
        %4764 = vmatprep.subr.bf16.mxu0 0
        %4765 = vmatpush1.bf16.msra.mxu0 %v4740
        %4766 = vmatprep.subr.bf16.mxu0 0
        %4767 = vmatpush1.bf16.msra.mxu0 %v4739
        %4768 = vmatprep.subr.bf16.mxu0 0
        %4769 = vmatpush1.bf16.msra.mxu0 %v4738
        %4770 = vmatprep.subr.bf16.mxu0 0
        %4771 = vmatpush2.bf16.msra.mxu0 0
        %4772 = vmatprep.subr.bf16.mxu0 0
        %4773 = vmatpush2.bf16.msra.mxu0 0
        %4774 = vmatprep.subr.bf16.mxu0 0
        %4775 = vmatpush2.bf16.msra.mxu0 0
        %4776 = vmatprep.subr.bf16.mxu0 0
        %4777 = vmatpush2.bf16.msra.mxu0 0
        %4778 = vmatprep.subr.bf16.mxu0 0
        %4779 = vmatpush2.bf16.msra.mxu0 0
        %4780 = vmatprep.subr.bf16.mxu0 0
        %4781 = vmatpush2.bf16.msra.mxu0 0
        %4782 = vmatprep.subr.bf16.mxu0 0
        %4783 = vmatpush2.bf16.msra.mxu0 0
        %4784 = vmatprep.subr.bf16.mxu0 0
        %4785 = vmatpush2.bf16.msra.mxu0 0
        %4786 = vmatprep.mubr.bf16.mxu0 0
        %4787 = vmatmul.mubr.bf16.gmra.mxu0 %v4688
        %v4788 = vpop.f32.mrf.mxu0
        %v4789 = vadd.f32 0.0, %v4788
        %v4790 = vpop.f32.mrf.mxu0
        %v4791 = vpop.f32.mrf.mxu0
        %v4792 = vpop.f32.mrf.mxu0
        %4793 = vdwg.mxu0
        %v4794 = vadd.f32 %v4687, %v4789
        %v4795 = vpack.c.bf16 %v4572, %v4572
        %s4796 = scalar_lea.vmem %s9, 128
        %v4797 = vld [vmem:[%s4796] sm:$0xf]
        %v4798 = vld [vmem:[%s4796 + $0x4] sm:$0xf]
        %v4799 = vld [vmem:[%s4796 + $0x8] sm:$0xf]
        %v4800 = vld [vmem:[%s4796 + $0xc] sm:$0xf]
        %v4801 = vld [vmem:[%s4796 + $0x10] sm:$0xf]
        %v4802 = vld [vmem:[%s4796 + $0x14] sm:$0xf]
        %v4803 = vld [vmem:[%s4796 + $0x18] sm:$0xf]
        %v4804 = vld [vmem:[%s4796 + $0x1c] sm:$0xf]
        %v4805 = vld [vmem:[%s4796 + $0x20] sm:$0xf]
        %v4806 = vld [vmem:[%s4796 + $0x24] sm:$0xf]
        %v4807 = vld [vmem:[%s4796 + $0x28] sm:$0xf]
        %v4808 = vld [vmem:[%s4796 + $0x2c] sm:$0xf]
        %v4809 = vld [vmem:[%s4796 + $0x30] sm:$0xf]
        %v4810 = vld [vmem:[%s4796 + $0x34] sm:$0xf]
        %v4811 = vld [vmem:[%s4796 + $0x38] sm:$0xf]
        %v4812 = vld [vmem:[%s4796 + $0x3c] sm:$0xf]
        %v4829 = vunpack.c.l.b16 %v4797
        %v4830 = vunpack.c.l.b16 %v4798
        %v4831 = vunpack.c.l.b16 %v4799
        %v4832 = vunpack.c.l.b16 %v4800
        %v4833 = vunpack.c.l.b16 %v4801
        %v4834 = vunpack.c.l.b16 %v4802
        %v4835 = vunpack.c.l.b16 %v4803
        %v4836 = vunpack.c.l.b16 %v4804
        %v4837 = vunpack.c.l.b16 %v4805
        %v4838 = vunpack.c.l.b16 %v4806
        %v4839 = vunpack.c.l.b16 %v4807
        %v4840 = vunpack.c.l.b16 %v4808
        %v4841 = vunpack.c.l.b16 %v4809
        %v4842 = vunpack.c.l.b16 %v4810
        %v4843 = vunpack.c.l.b16 %v4811
        %v4844 = vunpack.c.l.b16 %v4812
        %v4845 = vpack.c.b16 %v4830, %v4829
        %v4846 = vpack.c.b16 %v4832, %v4831
        %v4847 = vpack.c.b16 %v4834, %v4833
        %v4848 = vpack.c.b16 %v4836, %v4835
        %v4849 = vpack.c.b16 %v4838, %v4837
        %v4850 = vpack.c.b16 %v4840, %v4839
        %v4851 = vpack.c.b16 %v4842, %v4841
        %v4852 = vpack.c.b16 %v4844, %v4843
        %4861 = vmatprep.subr.bf16.mxu0 0
        %4862 = vmatpush1.bf16.msra.mxu0 %v4852
        %4863 = vmatprep.subr.bf16.mxu0 0
        %4864 = vmatpush1.bf16.msra.mxu0 %v4851
        %4865 = vmatprep.subr.bf16.mxu0 0
        %4866 = vmatpush1.bf16.msra.mxu0 %v4850
        %4867 = vmatprep.subr.bf16.mxu0 0
        %4868 = vmatpush1.bf16.msra.mxu0 %v4849
        %4869 = vmatprep.subr.bf16.mxu0 0
        %4870 = vmatpush1.bf16.msra.mxu0 %v4848
        %4871 = vmatprep.subr.bf16.mxu0 0
        %4872 = vmatpush1.bf16.msra.mxu0 %v4847
        %4873 = vmatprep.subr.bf16.mxu0 0
        %4874 = vmatpush1.bf16.msra.mxu0 %v4846
        %4875 = vmatprep.subr.bf16.mxu0 0
        %4876 = vmatpush1.bf16.msra.mxu0 %v4845
        %4877 = vmatprep.subr.bf16.mxu0 0
        %4878 = vmatpush2.bf16.msra.mxu0 0
        %4879 = vmatprep.subr.bf16.mxu0 0
        %4880 = vmatpush2.bf16.msra.mxu0 0
        %4881 = vmatprep.subr.bf16.mxu0 0
        %4882 = vmatpush2.bf16.msra.mxu0 0
        %4883 = vmatprep.subr.bf16.mxu0 0
        %4884 = vmatpush2.bf16.msra.mxu0 0
        %4885 = vmatprep.subr.bf16.mxu0 0
        %4886 = vmatpush2.bf16.msra.mxu0 0
        %4887 = vmatprep.subr.bf16.mxu0 0
        %4888 = vmatpush2.bf16.msra.mxu0 0
        %4889 = vmatprep.subr.bf16.mxu0 0
        %4890 = vmatpush2.bf16.msra.mxu0 0
        %4891 = vmatprep.subr.bf16.mxu0 0
        %4892 = vmatpush2.bf16.msra.mxu0 0
        %4893 = vmatprep.mubr.bf16.mxu0 0
        %4894 = vmatmul.mubr.bf16.gmra.mxu0 %v4795
        %v4895 = vpop.f32.mrf.mxu0
        %v4896 = vadd.f32 0.0, %v4895
        %v4897 = vpop.f32.mrf.mxu0
        %v4898 = vpop.f32.mrf.mxu0
        %v4899 = vpop.f32.mrf.mxu0
        %4900 = vdwg.mxu0
        %v4901 = vadd.f32 %v4794, %v4896
        %v4902 = vpack.c.bf16 %v4573, %v4573
        %s4903 = scalar_lea.vmem %s9, 192
        %v4904 = vld [vmem:[%s4903] sm:$0xf]
        %v4905 = vld [vmem:[%s4903 + $0x4] sm:$0xf]
        %v4906 = vld [vmem:[%s4903 + $0x8] sm:$0xf]
        %v4907 = vld [vmem:[%s4903 + $0xc] sm:$0xf]
        %v4908 = vld [vmem:[%s4903 + $0x10] sm:$0xf]
        %v4909 = vld [vmem:[%s4903 + $0x14] sm:$0xf]
        %v4910 = vld [vmem:[%s4903 + $0x18] sm:$0xf]
        %v4911 = vld [vmem:[%s4903 + $0x1c] sm:$0xf]
        %v4912 = vld [vmem:[%s4903 + $0x20] sm:$0xf]
        %v4913 = vld [vmem:[%s4903 + $0x24] sm:$0xf]
        %v4914 = vld [vmem:[%s4903 + $0x28] sm:$0xf]
        %v4915 = vld [vmem:[%s4903 + $0x2c] sm:$0xf]
        %v4916 = vld [vmem:[%s4903 + $0x30] sm:$0xf]
        %v4917 = vld [vmem:[%s4903 + $0x34] sm:$0xf]
        %v4918 = vld [vmem:[%s4903 + $0x38] sm:$0xf]
        %v4919 = vld [vmem:[%s4903 + $0x3c] sm:$0xf]
        %v4936 = vunpack.c.l.b16 %v4904
        %v4937 = vunpack.c.l.b16 %v4905
        %v4938 = vunpack.c.l.b16 %v4906
        %v4939 = vunpack.c.l.b16 %v4907
        %v4940 = vunpack.c.l.b16 %v4908
        %v4941 = vunpack.c.l.b16 %v4909
        %v4942 = vunpack.c.l.b16 %v4910
        %v4943 = vunpack.c.l.b16 %v4911
        %v4944 = vunpack.c.l.b16 %v4912
        %v4945 = vunpack.c.l.b16 %v4913
        %v4946 = vunpack.c.l.b16 %v4914
        %v4947 = vunpack.c.l.b16 %v4915
        %v4948 = vunpack.c.l.b16 %v4916
        %v4949 = vunpack.c.l.b16 %v4917
        %v4950 = vunpack.c.l.b16 %v4918
        %v4951 = vunpack.c.l.b16 %v4919
        %v4952 = vpack.c.b16 %v4937, %v4936
        %v4953 = vpack.c.b16 %v4939, %v4938
        %v4954 = vpack.c.b16 %v4941, %v4940
        %v4955 = vpack.c.b16 %v4943, %v4942
        %v4956 = vpack.c.b16 %v4945, %v4944
        %v4957 = vpack.c.b16 %v4947, %v4946
        %v4958 = vpack.c.b16 %v4949, %v4948
        %v4959 = vpack.c.b16 %v4951, %v4950
        %4968 = vmatprep.subr.bf16.mxu0 0
        %4969 = vmatpush1.bf16.msra.mxu0 %v4959
        %4970 = vmatprep.subr.bf16.mxu0 0
        %4971 = vmatpush1.bf16.msra.mxu0 %v4958
        %4972 = vmatprep.subr.bf16.mxu0 0
        %4973 = vmatpush1.bf16.msra.mxu0 %v4957
        %4974 = vmatprep.subr.bf16.mxu0 0
        %4975 = vmatpush1.bf16.msra.mxu0 %v4956
        %4976 = vmatprep.subr.bf16.mxu0 0
        %4977 = vmatpush1.bf16.msra.mxu0 %v4955
        %4978 = vmatprep.subr.bf16.mxu0 0
        %4979 = vmatpush1.bf16.msra.mxu0 %v4954
        %4980 = vmatprep.subr.bf16.mxu0 0
        %4981 = vmatpush1.bf16.msra.mxu0 %v4953
        %4982 = vmatprep.subr.bf16.mxu0 0
        %4983 = vmatpush1.bf16.msra.mxu0 %v4952
        %4984 = vmatprep.subr.bf16.mxu0 0
        %4985 = vmatpush2.bf16.msra.mxu0 0
        %4986 = vmatprep.subr.bf16.mxu0 0
        %4987 = vmatpush2.bf16.msra.mxu0 0
        %4988 = vmatprep.subr.bf16.mxu0 0
        %4989 = vmatpush2.bf16.msra.mxu0 0
        %4990 = vmatprep.subr.bf16.mxu0 0
        %4991 = vmatpush2.bf16.msra.mxu0 0
        %4992 = vmatprep.subr.bf16.mxu0 0
        %4993 = vmatpush2.bf16.msra.mxu0 0
        %4994 = vmatprep.subr.bf16.mxu0 0
        %4995 = vmatpush2.bf16.msra.mxu0 0
        %4996 = vmatprep.subr.bf16.mxu0 0
        %4997 = vmatpush2.bf16.msra.mxu0 0
        %4998 = vmatprep.subr.bf16.mxu0 0
        %4999 = vmatpush2.bf16.msra.mxu0 0
        %5000 = vmatprep.mubr.bf16.mxu0 0
        %5001 = vmatmul.mubr.bf16.gmra.mxu0 %v4902
        %v5002 = vpop.f32.mrf.mxu0
        %v5003 = vadd.f32 0.0, %v5002
        %v5004 = vpop.f32.mrf.mxu0
        %v5005 = vpop.f32.mrf.mxu0
        %v5006 = vpop.f32.mrf.mxu0
        %5007 = vdwg.mxu0
        %v5008 = vadd.f32 %v4901, %v5003
        %v5009 = vpack.c.bf16 %v4574, %v4574
        %s5010 = scalar_lea.vmem %s9, 256
        %v5011 = vld [vmem:[%s5010] sm:$0xf]
        %v5012 = vld [vmem:[%s5010 + $0x4] sm:$0xf]
        %v5013 = vld [vmem:[%s5010 + $0x8] sm:$0xf]
        %v5014 = vld [vmem:[%s5010 + $0xc] sm:$0xf]
        %v5015 = vld [vmem:[%s5010 + $0x10] sm:$0xf]
        %v5016 = vld [vmem:[%s5010 + $0x14] sm:$0xf]
        %v5017 = vld [vmem:[%s5010 + $0x18] sm:$0xf]
        %v5018 = vld [vmem:[%s5010 + $0x1c] sm:$0xf]
        %v5019 = vld [vmem:[%s5010 + $0x20] sm:$0xf]
        %v5020 = vld [vmem:[%s5010 + $0x24] sm:$0xf]
        %v5021 = vld [vmem:[%s5010 + $0x28] sm:$0xf]
        %v5022 = vld [vmem:[%s5010 + $0x2c] sm:$0xf]
        %v5023 = vld [vmem:[%s5010 + $0x30] sm:$0xf]
        %v5024 = vld [vmem:[%s5010 + $0x34] sm:$0xf]
        %v5025 = vld [vmem:[%s5010 + $0x38] sm:$0xf]
        %v5026 = vld [vmem:[%s5010 + $0x3c] sm:$0xf]
        %v5043 = vunpack.c.l.b16 %v5011
        %v5044 = vunpack.c.l.b16 %v5012
        %v5045 = vunpack.c.l.b16 %v5013
        %v5046 = vunpack.c.l.b16 %v5014
        %v5047 = vunpack.c.l.b16 %v5015
        %v5048 = vunpack.c.l.b16 %v5016
        %v5049 = vunpack.c.l.b16 %v5017
        %v5050 = vunpack.c.l.b16 %v5018
        %v5051 = vunpack.c.l.b16 %v5019
        %v5052 = vunpack.c.l.b16 %v5020
        %v5053 = vunpack.c.l.b16 %v5021
        %v5054 = vunpack.c.l.b16 %v5022
        %v5055 = vunpack.c.l.b16 %v5023
        %v5056 = vunpack.c.l.b16 %v5024
        %v5057 = vunpack.c.l.b16 %v5025
        %v5058 = vunpack.c.l.b16 %v5026
        %v5059 = vpack.c.b16 %v5044, %v5043
        %v5060 = vpack.c.b16 %v5046, %v5045
        %v5061 = vpack.c.b16 %v5048, %v5047
        %v5062 = vpack.c.b16 %v5050, %v5049
        %v5063 = vpack.c.b16 %v5052, %v5051
        %v5064 = vpack.c.b16 %v5054, %v5053
        %v5065 = vpack.c.b16 %v5056, %v5055
        %v5066 = vpack.c.b16 %v5058, %v5057
        %5075 = vmatprep.subr.bf16.mxu0 0
        %5076 = vmatpush1.bf16.msra.mxu0 %v5066
        %5077 = vmatprep.subr.bf16.mxu0 0
        %5078 = vmatpush1.bf16.msra.mxu0 %v5065
        %5079 = vmatprep.subr.bf16.mxu0 0
        %5080 = vmatpush1.bf16.msra.mxu0 %v5064
        %5081 = vmatprep.subr.bf16.mxu0 0
        %5082 = vmatpush1.bf16.msra.mxu0 %v5063
        %5083 = vmatprep.subr.bf16.mxu0 0
        %5084 = vmatpush1.bf16.msra.mxu0 %v5062
        %5085 = vmatprep.subr.bf16.mxu0 0
        %5086 = vmatpush1.bf16.msra.mxu0 %v5061
        %5087 = vmatprep.subr.bf16.mxu0 0
        %5088 = vmatpush1.bf16.msra.mxu0 %v5060
        %5089 = vmatprep.subr.bf16.mxu0 0
        %5090 = vmatpush1.bf16.msra.mxu0 %v5059
        %5091 = vmatprep.subr.bf16.mxu0 0
        %5092 = vmatpush2.bf16.msra.mxu0 0
        %5093 = vmatprep.subr.bf16.mxu0 0
        %5094 = vmatpush2.bf16.msra.mxu0 0
        %5095 = vmatprep.subr.bf16.mxu0 0
        %5096 = vmatpush2.bf16.msra.mxu0 0
        %5097 = vmatprep.subr.bf16.mxu0 0
        %5098 = vmatpush2.bf16.msra.mxu0 0
        %5099 = vmatprep.subr.bf16.mxu0 0
        %5100 = vmatpush2.bf16.msra.mxu0 0
        %5101 = vmatprep.subr.bf16.mxu0 0
        %5102 = vmatpush2.bf16.msra.mxu0 0
        %5103 = vmatprep.subr.bf16.mxu0 0
        %5104 = vmatpush2.bf16.msra.mxu0 0
        %5105 = vmatprep.subr.bf16.mxu0 0
        %5106 = vmatpush2.bf16.msra.mxu0 0
        %5107 = vmatprep.mubr.bf16.mxu0 0
        %5108 = vmatmul.mubr.bf16.gmra.mxu0 %v5009
        %v5109 = vpop.f32.mrf.mxu0
        %v5110 = vadd.f32 0.0, %v5109
        %v5111 = vpop.f32.mrf.mxu0
        %v5112 = vpop.f32.mrf.mxu0
        %v5113 = vpop.f32.mrf.mxu0
        %5114 = vdwg.mxu0
        %v5115 = vadd.f32 %v5008, %v5110
        %v5116 = vmax.f32 %v5115, 0.0
        %v5117 = vpack.c.bf16 %v5116, %v5116
        %v5118 = vld [vmem:[%s11] sm:$0xf]
        %v5119 = vld [vmem:[%s11 + $0x4] sm:$0xf]
        %v5120 = vld [vmem:[%s11 + $0x8] sm:$0xf]
        %v5121 = vld [vmem:[%s11 + $0xc] sm:$0xf]
        %v5122 = vld [vmem:[%s11 + $0x10] sm:$0xf]
        %v5123 = vld [vmem:[%s11 + $0x14] sm:$0xf]
        %v5124 = vld [vmem:[%s11 + $0x18] sm:$0xf]
        %v5125 = vld [vmem:[%s11 + $0x1c] sm:$0xf]
        %v5126 = vld [vmem:[%s11 + $0x20] sm:$0xf]
        %v5127 = vld [vmem:[%s11 + $0x24] sm:$0xf]
        %v5128 = vld [vmem:[%s11 + $0x28] sm:$0xf]
        %v5129 = vld [vmem:[%s11 + $0x2c] sm:$0xf]
        %v5130 = vld [vmem:[%s11 + $0x30] sm:$0xf]
        %v5131 = vld [vmem:[%s11 + $0x34] sm:$0xf]
        %v5132 = vld [vmem:[%s11 + $0x38] sm:$0xf]
        %v5133 = vld [vmem:[%s11 + $0x3c] sm:$0xf]
        %v5134 = vld [vmem:[%s12] sm:$0x1]
        %v5136 = vlaneseq
        %v5137 = vshrl.u32 %v5136, 7
        %v5138 = vsub.s32 0, %v5137
        %v5139 = vrot.slane %v5134, %v5138
        %v5157 = vunpack.c.l.b16 %v5118
        %v5158 = vunpack.c.l.b16 %v5119
        %v5159 = vunpack.c.l.b16 %v5120
        %v5160 = vunpack.c.l.b16 %v5121
        %v5161 = vunpack.c.l.b16 %v5122
        %v5162 = vunpack.c.l.b16 %v5123
        %v5163 = vunpack.c.l.b16 %v5124
        %v5164 = vunpack.c.l.b16 %v5125
        %v5165 = vunpack.c.l.b16 %v5126
        %v5166 = vunpack.c.l.b16 %v5127
        %v5167 = vunpack.c.l.b16 %v5128
        %v5168 = vunpack.c.l.b16 %v5129
        %v5169 = vunpack.c.l.b16 %v5130
        %v5170 = vunpack.c.l.b16 %v5131
        %v5171 = vunpack.c.l.b16 %v5132
        %v5172 = vunpack.c.l.b16 %v5133
        %v5173 = vpack.c.b16 %v5158, %v5157
        %v5174 = vpack.c.b16 %v5160, %v5159
        %v5175 = vpack.c.b16 %v5162, %v5161
        %v5176 = vpack.c.b16 %v5164, %v5163
        %v5177 = vpack.c.b16 %v5166, %v5165
        %v5178 = vpack.c.b16 %v5168, %v5167
        %v5179 = vpack.c.b16 %v5170, %v5169
        %v5180 = vpack.c.b16 %v5172, %v5171
        %5189 = vmatprep.subr.bf16.mxu0 0
        %5190 = vmatpush1.bf16.msra.mxu0 %v5180
        %5191 = vmatprep.subr.bf16.mxu0 0
        %5192 = vmatpush1.bf16.msra.mxu0 %v5179
        %5193 = vmatprep.subr.bf16.mxu0 0
        %5194 = vmatpush1.bf16.msra.mxu0 %v5178
        %5195 = vmatprep.subr.bf16.mxu0 0
        %5196 = vmatpush1.bf16.msra.mxu0 %v5177
        %5197 = vmatprep.subr.bf16.mxu0 0
        %5198 = vmatpush1.bf16.msra.mxu0 %v5176
        %5199 = vmatprep.subr.bf16.mxu0 0
        %5200 = vmatpush1.bf16.msra.mxu0 %v5175
        %5201 = vmatprep.subr.bf16.mxu0 0
        %5202 = vmatpush1.bf16.msra.mxu0 %v5174
        %5203 = vmatprep.subr.bf16.mxu0 0
        %5204 = vmatpush1.bf16.msra.mxu0 %v5173
        %5205 = vmatprep.subr.bf16.mxu0 0
        %5206 = vmatpush2.bf16.msra.mxu0 0
        %5207 = vmatprep.subr.bf16.mxu0 0
        %5208 = vmatpush2.bf16.msra.mxu0 0
        %5209 = vmatprep.subr.bf16.mxu0 0
        %5210 = vmatpush2.bf16.msra.mxu0 0
        %5211 = vmatprep.subr.bf16.mxu0 0
        %5212 = vmatpush2.bf16.msra.mxu0 0
        %5213 = vmatprep.subr.bf16.mxu0 0
        %5214 = vmatpush2.bf16.msra.mxu0 0
        %5215 = vmatprep.subr.bf16.mxu0 0
        %5216 = vmatpush2.bf16.msra.mxu0 0
        %5217 = vmatprep.subr.bf16.mxu0 0
        %5218 = vmatpush2.bf16.msra.mxu0 0
        %5219 = vmatprep.subr.bf16.mxu0 0
        %5220 = vmatpush2.bf16.msra.mxu0 0
        %5221 = vmatprep.mubr.bf16.mxu0 0
        %5222 = vmatmul.mubr.bf16.gmra.mxu0 %v5117
        %v5223 = vpop.f32.mrf.mxu0
        %v5224 = vadd.f32 %v5139, %v5223
        %v5225 = vpop.f32.mrf.mxu0
        %v5226 = vpop.f32.mrf.mxu0
        %v5227 = vpop.f32.mrf.mxu0
        %5228 = vdwg.mxu0
        %v5229 = vmax.f32 %v5224, 0.0
        %v5230 = vpack.c.bf16 %v5229, %v5229
        %v5231 = vld [vmem:[%s13] sm:$0xf]
        %v5232 = vld [vmem:[%s13 + $0x4] sm:$0xf]
        %v5233 = vld [vmem:[%s13 + $0x8] sm:$0xf]
        %v5234 = vld [vmem:[%s13 + $0xc] sm:$0xf]
        %v5235 = vld [vmem:[%s13 + $0x10] sm:$0xf]
        %v5236 = vld [vmem:[%s13 + $0x14] sm:$0xf]
        %v5237 = vld [vmem:[%s13 + $0x18] sm:$0xf]
        %v5238 = vld [vmem:[%s13 + $0x1c] sm:$0xf]
        %v5239 = vld [vmem:[%s13 + $0x20] sm:$0xf]
        %v5240 = vld [vmem:[%s13 + $0x24] sm:$0xf]
        %v5241 = vld [vmem:[%s13 + $0x28] sm:$0xf]
        %v5242 = vld [vmem:[%s13 + $0x2c] sm:$0xf]
        %v5243 = vld [vmem:[%s13 + $0x30] sm:$0xf]
        %v5244 = vld [vmem:[%s13 + $0x34] sm:$0xf]
        %v5245 = vld [vmem:[%s13 + $0x38] sm:$0xf]
        %v5246 = vld [vmem:[%s13 + $0x3c] sm:$0xf]
        %v5247 = vld [vmem:[%s14] sm:$0x1]
        %v5249 = vlaneseq
        %v5250 = vshrl.u32 %v5249, 7
        %v5251 = vsub.s32 0, %v5250
        %v5252 = vrot.slane %v5247, %v5251
        %v5270 = vunpack.c.l.b16 %v5231
        %v5271 = vunpack.c.l.b16 %v5232
        %v5272 = vunpack.c.l.b16 %v5233
        %v5273 = vunpack.c.l.b16 %v5234
        %v5274 = vunpack.c.l.b16 %v5235
        %v5275 = vunpack.c.l.b16 %v5236
        %v5276 = vunpack.c.l.b16 %v5237
        %v5277 = vunpack.c.l.b16 %v5238
        %v5278 = vunpack.c.l.b16 %v5239
        %v5279 = vunpack.c.l.b16 %v5240
        %v5280 = vunpack.c.l.b16 %v5241
        %v5281 = vunpack.c.l.b16 %v5242
        %v5282 = vunpack.c.l.b16 %v5243
        %v5283 = vunpack.c.l.b16 %v5244
        %v5284 = vunpack.c.l.b16 %v5245
        %v5285 = vunpack.c.l.b16 %v5246
        %v5286 = vpack.c.b16 %v5271, %v5270
        %v5287 = vpack.c.b16 %v5273, %v5272
        %v5288 = vpack.c.b16 %v5275, %v5274
        %v5289 = vpack.c.b16 %v5277, %v5276
        %v5290 = vpack.c.b16 %v5279, %v5278
        %v5291 = vpack.c.b16 %v5281, %v5280
        %v5292 = vpack.c.b16 %v5283, %v5282
        %v5293 = vpack.c.b16 %v5285, %v5284
        %5302 = vmatprep.subr.bf16.mxu0 0
        %5303 = vmatpush1.bf16.msra.mxu0 %v5293
        %5304 = vmatprep.subr.bf16.mxu0 0
        %5305 = vmatpush1.bf16.msra.mxu0 %v5292
        %5306 = vmatprep.subr.bf16.mxu0 0
        %5307 = vmatpush1.bf16.msra.mxu0 %v5291
        %5308 = vmatprep.subr.bf16.mxu0 0
        %5309 = vmatpush1.bf16.msra.mxu0 %v5290
        %5310 = vmatprep.subr.bf16.mxu0 0
        %5311 = vmatpush1.bf16.msra.mxu0 %v5289
        %5312 = vmatprep.subr.bf16.mxu0 0
        %5313 = vmatpush1.bf16.msra.mxu0 %v5288
        %5314 = vmatprep.subr.bf16.mxu0 0
        %5315 = vmatpush1.bf16.msra.mxu0 %v5287
        %5316 = vmatprep.subr.bf16.mxu0 0
        %5317 = vmatpush1.bf16.msra.mxu0 %v5286
        %5318 = vmatprep.subr.bf16.mxu0 0
        %5319 = vmatpush2.bf16.msra.mxu0 0
        %5320 = vmatprep.subr.bf16.mxu0 0
        %5321 = vmatpush2.bf16.msra.mxu0 0
        %5322 = vmatprep.subr.bf16.mxu0 0
        %5323 = vmatpush2.bf16.msra.mxu0 0
        %5324 = vmatprep.subr.bf16.mxu0 0
        %5325 = vmatpush2.bf16.msra.mxu0 0
        %5326 = vmatprep.subr.bf16.mxu0 0
        %5327 = vmatpush2.bf16.msra.mxu0 0
        %5328 = vmatprep.subr.bf16.mxu0 0
        %5329 = vmatpush2.bf16.msra.mxu0 0
        %5330 = vmatprep.subr.bf16.mxu0 0
        %5331 = vmatpush2.bf16.msra.mxu0 0
        %5332 = vmatprep.subr.bf16.mxu0 0
        %5333 = vmatpush2.bf16.msra.mxu0 0
        %5334 = vmatprep.mubr.bf16.mxu0 0
        %5335 = vmatmul.mubr.bf16.gmra.mxu0 %v5230
        %v5336 = vpop.f32.mrf.mxu0
        %v5337 = vadd.f32 %v5252, %v5336
        %v5338 = vpop.f32.mrf.mxu0
        %v5339 = vpop.f32.mrf.mxu0
        %v5340 = vpop.f32.mrf.mxu0
        %5341 = vdwg.mxu0
        %5342 = vst [vmem:[%s488] sm:$0xff] %v5337
        %s5343 = sand.u32 %s357, 1
        %s5344 = scalar_lea.sflag [#allocation4], %s5343
        %s5345 = sand.u32 %s357, 1
        %s5346 = smul.addr %s5345, 8
        %s5347 = scalar_lea.vmem [#allocation3], %s5346
        // Predicated region
        $region81: #{network_forward.1} parent=79 // pred_check
          %p5348 = pneg %p367
        $region82: #{network_forward.1} parent=79 // pred_check_branch
          %5350 = sbr.rel (%p5348) target = $region84
        $region83: #{network_forward.1} parent=79 // pred_region
          %s5352 = ssub.s32 128, 128
          %5353 = vsyncadd %s5344, %s5352
          %s5354 = smul.addr %s29, 128
          %s5355 = scalar_lea.hbm %s15, %s5354
          %s5357 = sshll.u32 %s5347, 4
          %s5358 = int_to_ptr.vmem [resolvable:$true] %s5357
          %5360 = dma.vmem_to_hbm [thread:$0]  %s5358, 128, %s5355, %s5344
        $region84: #{network_forward.1} parent=79 // pred_fallthru
          _
      $region80: #{network_forward.1} parent=5 // pred_fallthru
        _
      %p5361 = scmp.le.s32.totalorder 2, %s24
      // Predicated region
      $region85: #{network_forward.1} parent=5 // pred_check
        %p5362 = pneg %p5361
      $region86: #{network_forward.1} parent=5 // pred_check_branch
        %5364 = sbr.rel (%p5362) target = $region88
      $region87: #{network_forward.1} parent=5 // pred_region
        %s5365 = ssub.s32 %s24, 2
        // Predicated region
        $region89: #{network_forward.1} parent=87 // pred_check
          %p5366 = pneg %p373
        $region90: #{network_forward.1} parent=87 // pred_check_branch
          %5368 = sbr.rel (%p5366) target = $region92
        $region91: #{network_forward.1} parent=87 // pred_region
          %s5369 = sand.u32 %s358, 1
          %s5370 = scalar_lea.sflag [#allocation4], %s5369
          %s5371 = sand.u32 %s358, 1
          %s5372 = smul.addr %s5371, 8
          %s5373 = scalar_lea.vmem [#allocation3], %s5372
          %5374 = dma.done %s5370, 128
        $region92: #{network_forward.1} parent=87 // pred_fallthru
          _
      $region88: #{network_forward.1} parent=5 // pred_fallthru
        _
    $region6: #{network_forward.1} parent=1 // loop_footer
      %s28 = sadd.s32 1, %s24
    $region7: #{network_forward.1} parent=1 // loop_footer_branch
      %23 = sbr.rel target = $region3
    $region8: #{network_forward.1} parent=1 // loop_exit
      _
    %5375 = vsyncpa [#allocation4], 1
    %s5376 = scalar_lea.sflag [#allocation4], 1
    %5377 = vsyncpa %s5376, 1

</llo_original>
